<compile_context>
chip_gen: v7x
topology: tpu7x:2x2x1
jax: 0.10.0
libtpu: 0.0.40
codegen_flags: <defaults>
</compile_context>

<pallas_src>
import functools

import jax
import jax.numpy as jnp
import numpy as np
from jax import lax
from jax.experimental import pallas as pl
from jax.experimental.pallas import tpu as pltpu


def _round_up(a, b):
    return (a + b - 1) // b * b


def _gelu(y):
    # tanh-approximation GELU; tanh lands on the otherwise-idle EUP slot.
    c0 = jnp.float32(0.7978845608028654)   # sqrt(2/pi)
    c1 = jnp.float32(0.044715)
    return jnp.float32(0.5) * y * (jnp.float32(1.0) + jnp.tanh(c0 * (y + c1 * y * y * y)))


# --------------------------- fused ConvEmbed kernel --------------------------- #

def _conv_embed_kernel(x0_ref, w0_ref, s0_ref, w1_ref, s1_ref, w2_ref, s2_ref,
                       wp_ref, bp_ref, o_ref, a_ref, *, H1, W1, WP):
    """One batch element of the whole stem + proj, all intermediates in VMEM.

    Layout: activations are held as a flat padded image `a_ref` of shape
    (RB, mid) f32, row pitch WP (>= W1+2, multiple of 16), with a zero halo.
    Interior pixel (h, w) of the 8x8 feature map sits at flat row
    (h+1)*WP + (w+1).  Extended conv outputs are computed over rows
    r = ho*WP + wo for wo in [0, WP); columns wo >= W1 are garbage and are
    masked to zero before being written back (so the halo stays exactly zero).
    """
    Mext = H1 * WP

    # Zero the whole buffer once: the halo must stay exactly zero.
    a_ref[...] = jnp.zeros_like(a_ref)

    wo = lax.broadcasted_iota(jnp.int32, (Mext, 1), 0) % WP
    valid = wo < W1

    def write_padded(y_f32):
        # extended row r -> padded flat row r + WP + 1; garbage columns zeroed.
        a_ref[pl.ds(WP + 1, Mext), :] = jnp.where(valid, y_f32, 0.0)

    # ---- stem0: stride-2 3x3 conv (im2col'd in the wrapper) + BN shift + GELU ----
    y = jnp.dot(x0_ref[...], w0_ref[...], preferred_element_type=jnp.float32)
    y = _gelu(y + s0_ref[...])
    write_padded(y)

    # ---- stem1 / stem2: 3x3 stride-1 convs, all 9 taps folded into K (=144) ----
    for w_ref, s_ref in ((w1_ref, s1_ref), (w2_ref, s2_ref)):
        cols = [a_ref[pl.ds(ky * WP + kx, Mext), :]
                for ky in range(3) for kx in range(3)]
        xcat = jnp.concatenate(cols, axis=-1).astype(jnp.bfloat16)   # (Mext, 9*mid)
        y = jnp.dot(xcat, w_ref[...], preferred_element_type=jnp.float32)
        y = _gelu(y + s_ref[...])
        write_padded(y)

    # ---- proj: kernel == stride == 2, non-overlapping patches -> one matmul ----
    Hp2, Wp2 = H1 // 2, W1 // 2
    rows = []
    for po in range(Hp2):
        pieces = []
        for dy in range(2):
            for dx in range(2):
                start = (2 * po + dy + 1) * WP + (dx + 1)
                pieces.append(a_ref[pl.ds(start, Wp2, stride=2), :])   # (Wp2, mid)
        rows.append(jnp.concatenate(pieces, axis=-1))                  # (Wp2, 4*mid)
    xproj = jnp.concatenate(rows, axis=0).astype(jnp.bfloat16)         # (Hp2*Wp2, 4*mid)
    out = jnp.dot(xproj, wp_ref[...], preferred_element_type=jnp.float32) + bp_ref[...]
    o_ref[...] = out.astype(o_ref.dtype)


def _conv_embed_fused(x0col, w0, s0, w1, s1, w2, s2, wp, bp, *, H1, W1, WP, RB,
                      embed_dim):
    B, Mext, K0 = x0col.shape
    mid = w1.shape[1]
    Hp2, Wp2 = H1 // 2, W1 // 2
    kernel = functools.partial(_conv_embed_kernel, H1=H1, W1=W1, WP=WP)
    return pl.pallas_call(
        kernel,
        out_shape=jax.ShapeDtypeStruct((B, Hp2 * Wp2, embed_dim), jnp.float32),
        grid=(B,),
        in_specs=[
            pl.BlockSpec((None, Mext, K0), lambda b: (b, 0, 0)),
            pl.BlockSpec((K0, mid), lambda b: (0, 0)),
            pl.BlockSpec((1, mid), lambda b: (0, 0)),
            pl.BlockSpec((9 * mid, mid), lambda b: (0, 0)),
            pl.BlockSpec((1, mid), lambda b: (0, 0)),
            pl.BlockSpec((9 * mid, mid), lambda b: (0, 0)),
            pl.BlockSpec((1, mid), lambda b: (0, 0)),
            pl.BlockSpec((4 * mid, embed_dim), lambda b: (0, 0)),
            pl.BlockSpec((1, embed_dim), lambda b: (0, 0)),
        ],
        out_specs=pl.BlockSpec((None, Hp2 * Wp2, embed_dim), lambda b: (b, 0, 0)),
        scratch_shapes=[pltpu.VMEM((RB, mid), jnp.float32)],
        compiler_params=pltpu.CompilerParams(dimension_semantics=("parallel",)),
    )(x0col, w0, s0, w1, s1, w2, s2, wp, bp)


# ------------------------------ ConvEmbed model ------------------------------ #

def init_conv_embed_params(key, in_chans=4, embed_dim=32, patch_size=4):
    mid = embed_dim // 2
    ks = jax.random.split(key, 16)
    p = {}

    def bn(k, c):
        k1, k2, k3, k4 = jax.random.split(k, 4)
        gamma = 1.0 + 0.05 * jax.random.normal(k1, (c,), jnp.float32)
        beta = 0.05 * jax.random.normal(k2, (c,), jnp.float32)
        mean = 0.05 * jax.random.normal(k3, (c,), jnp.float32)
        var = 1.0 + 0.05 * jax.random.uniform(k4, (c,), jnp.float32)
        return gamma, beta, mean, var

    chans_in = [in_chans, mid, mid]
    for i in range(3):
        w = 0.1 * jax.random.normal(ks[2 * i], (mid, chans_in[i], 3, 3), jnp.float32)
        b = 0.05 * jax.random.normal(ks[2 * i + 1], (mid,), jnp.float32)
        p[f"stem{i}"] = (w, b) + bn(ks[6 + i], mid)
    kproj = patch_size // 2
    wp = 0.1 * jax.random.normal(ks[10], (embed_dim, mid, kproj, kproj), jnp.float32)
    bp = 0.05 * jax.random.normal(ks[11], (embed_dim,), jnp.float32)
    p["proj"] = (wp, bp)
    return p


def conv_embed_forward(x_nchw, params, patch_size=4, embed_dim=32):
    assert patch_size == 4, "TODO(synk): other patch sizes"
    B, C, H, W = x_nchw.shape
    # F.pad semantics from the torch module (pad right / bottom).
    if W % patch_size != 0:
        x_nchw = jnp.pad(x_nchw, ((0, 0), (0, 0), (0, 0),
                                  (0, patch_size - W % patch_size)))
    if H % patch_size != 0:
        x_nchw = jnp.pad(x_nchw, ((0, 0), (0, 0),
                                  (0, patch_size - H % patch_size), (0, 0)))
    _, _, H, W = x_nchw.shape
    x = jnp.transpose(x_nchw, (0, 2, 3, 1))  # NCHW -> NHWC

    # Fold inference-mode BN into the conv weights (scale) + a per-channel shift.
    eps = 1e-5
    folded = []
    for i in range(3):
        w, b, gamma, beta, mean, var = params[f"stem{i}"]
        s = gamma / jnp.sqrt(var + eps)
        folded.append((w * s[:, None, None, None], (b - mean) * s + beta))

    mid = folded[0][0].shape[0]
    cin = folded[0][0].shape[1]
    stride0 = patch_size // 2                       # 2
    H1, W1 = H // stride0, W // stride0             # post-stem0 spatial (8, 8)
    WP = _round_up(W1 + 2, 16)                      # padded row pitch (16)
    Mext = H1 * WP                                  # extended conv rows (128)
    RB = _round_up(Mext + 2 * WP + 2, 16)           # VMEM buffer rows (176)

    # --- stem0 im2col (extended layout: wo in [0, WP); garbage cols masked in-kernel)
    # Input touched once here; everything downstream stays in VMEM.
    xpad = jnp.pad(x, ((0, 0), (1, 1), (1, 2 * WP - W), (0, 0)))
    taps = []
    for ky in range(3):
        for kx in range(3):
            taps.append(xpad[:, ky:ky + 2 * (H1 - 1) + 1:2,
                             kx:kx + 2 * (WP - 1) + 1:2, :])
    x0col = jnp.stack(taps, axis=3).reshape(B, Mext, 9 * cin).astype(jnp.bfloat16)

    # --- weight matrices in (ky, kx, cin) -> cout order, bf16 MXU operands ---
    w0m = jnp.transpose(folded[0][0], (2, 3, 1, 0)).reshape(9 * cin, mid).astype(jnp.bfloat16)
    w1m = jnp.transpose(folded[1][0], (2, 3, 1, 0)).reshape(9 * mid, mid).astype(jnp.bfloat16)
    w2m = jnp.transpose(folded[2][0], (2, 3, 1, 0)).reshape(9 * mid, mid).astype(jnp.bfloat16)
    s0v = folded[0][1].reshape(1, mid).astype(jnp.float32)
    s1v = folded[1][1].reshape(1, mid).astype(jnp.float32)
    s2v = folded[2][1].reshape(1, mid).astype(jnp.float32)

    wp_w, bp_b = params["proj"]
    wpm = jnp.transpose(wp_w, (2, 3, 1, 0)).reshape(4 * mid, embed_dim).astype(jnp.bfloat16)
    bpv = bp_b.reshape(1, embed_dim).astype(jnp.float32)

    out = _conv_embed_fused(x0col, w0m, s0v, w1m, s1v, w2m, s2v, wpm, bpv,
                            H1=H1, W1=W1, WP=WP, RB=RB, embed_dim=embed_dim)

    # norm is None: flatten(2).permute(0,2,1) -> permute(0,2,1) -> reshape is the
    # identity, so just return NCHW.
    Hp2, Wp2 = H1 // 2, W1 // 2
    return jnp.transpose(out, (0, 2, 1)).reshape(B, embed_dim, Hp2, Wp2)


# ------------------------------- pure-JAX ref -------------------------------- #

def _ref_conv(x_nhwc, weight, bias, stride, padding):
    w_hwio = jnp.transpose(weight, (2, 3, 1, 0))
    y = jax.lax.conv_general_dilated(
        x_nhwc, w_hwio, (stride, stride),
        [(padding, padding), (padding, padding)],
        dimension_numbers=("NHWC", "HWIO", "NHWC"))
    return y + bias


def conv_embed_reference(x_nchw, params, patch_size=4, embed_dim=32):
    x = jnp.transpose(x_nchw, (0, 2, 3, 1))
    eps = 1e-5
    for i in range(3):
        w, b, gamma, beta, mean, var = params[f"stem{i}"]
        stride = patch_size // 2 if i == 0 else 1
        y = _ref_conv(x, w, b, stride, 1)
        y = (y - mean) / jnp.sqrt(var + eps) * gamma + beta
        x = 0.5 * y * (1.0 + jax.lax.erf(y / jnp.sqrt(2.0)))   # exact GELU reference
    wp, bp = params["proj"]
    x = _ref_conv(x, wp, bp, patch_size // 2, 0)
    return jnp.transpose(x, (0, 3, 1, 2))


# ----------------------------------- main ------------------------------------ #

if __name__ == "__main__":
    patch_size = 4
    in_chans = 4
    embed_dim = 32

    key = jax.random.PRNGKey(0)
    k_x, k_p = jax.random.split(key)
    x = jax.random.normal(k_x, (2, in_chans, 16, 16), jnp.float32)  # NCHW
    params = init_conv_embed_params(k_p, in_chans, embed_dim, patch_size)

    fwd = jax.jit(functools.partial(conv_embed_forward,
                                    patch_size=patch_size, embed_dim=embed_dim))
    out = fwd(x, params)
    out = jax.block_until_ready(out)

    assert out.shape == (2, embed_dim, 16 // patch_size, 16 // patch_size), out.shape

    ref = jax.block_until_ready(
        conv_embed_reference(x, params, patch_size, embed_dim))
    # Tolerance accounts for bf16 MXU operands through 4 conv layers (+ tanh GELU).
    np.testing.assert_allclose(np.asarray(out), np.asarray(ref),
                               rtol=2e-2, atol=2e-2)

    print("KERNEL_OK")
</pallas_src>

<mosaic_0001>
module attributes {stable_mosaic.version = 11 : i64} {
  func.func @_conv_embed_kernel(%arg0: i32, %arg1: memref<1x128x36xbf16, #tpu.memory_space<vmem>>, %arg2: memref<36x16xbf16, #tpu.memory_space<vmem>>, %arg3: memref<1x16xf32, #tpu.memory_space<vmem>>, %arg4: memref<144x16xbf16, #tpu.memory_space<vmem>>, %arg5: memref<1x16xf32, #tpu.memory_space<vmem>>, %arg6: memref<144x16xbf16, #tpu.memory_space<vmem>>, %arg7: memref<1x16xf32, #tpu.memory_space<vmem>>, %arg8: memref<64x32xbf16, #tpu.memory_space<vmem>>, %arg9: memref<1x32xf32, #tpu.memory_space<vmem>>, %arg10: memref<1x16x32xf32, #tpu.memory_space<vmem>>, %arg11: memref<176x16xf32, #tpu.memory_space<vmem>>) attributes {dimension_semantics = [#tpu.dimension_semantics<parallel>], iteration_bounds = array<i64: 2>, scalar_prefetch = 0 : i64, scratch_operands = 1 : i64, tpu.core_type = #tpu.core_type<tc>, window_params = [{transform_indices = @transform_0, window_bounds = array<i64: 1, 128, 36>}, {pipeline_mode = #tpu.pipeline_mode<synchronous>, transform_indices = @transform_1, window_bounds = array<i64: 36, 16>}, {pipeline_mode = #tpu.pipeline_mode<synchronous>, transform_indices = @transform_2, window_bounds = array<i64: 1, 16>}, {pipeline_mode = #tpu.pipeline_mode<synchronous>, transform_indices = @transform_3, window_bounds = array<i64: 144, 16>}, {pipeline_mode = #tpu.pipeline_mode<synchronous>, transform_indices = @transform_4, window_bounds = array<i64: 1, 16>}, {pipeline_mode = #tpu.pipeline_mode<synchronous>, transform_indices = @transform_5, window_bounds = array<i64: 144, 16>}, {pipeline_mode = #tpu.pipeline_mode<synchronous>, transform_indices = @transform_6, window_bounds = array<i64: 1, 16>}, {pipeline_mode = #tpu.pipeline_mode<synchronous>, transform_indices = @transform_7, window_bounds = array<i64: 64, 32>}, {pipeline_mode = #tpu.pipeline_mode<synchronous>, transform_indices = @transform_8, window_bounds = array<i64: 1, 32>}, {transform_indices = @transform_9, window_bounds = array<i64: 1, 16, 32>}]} {
    %cst = arith.constant 0.000000e+00 : f32
    %0 = vector.broadcast %cst : f32 to vector<176x16xf32>
    %c0 = arith.constant 0 : index
    %c0_0 = arith.constant 0 : index
    %1 = vector.load %arg11[%c0, %c0_0] : memref<176x16xf32, #tpu.memory_space<vmem>>, vector<176x16xf32>
    tpu.vector_store %arg11[%c0, %c0_0], %0 {strides = array<i32>} : memref<176x16xf32, #tpu.memory_space<vmem>>, vector<176x16xf32>,
    %2 = tpu.iota {dimensions = array<i32: 0>} : vector<128x1xi32>
    %c16_i32 = arith.constant 16 : i32
    %c0_i32 = arith.constant 0 : i32
    %3 = arith.cmpi eq, %c16_i32, %c0_i32 : i32
    %c1_i32 = arith.constant 1 : i32
    %4 = arith.select %3, %c1_i32, %c16_i32 : i32
    %5 = vector.broadcast %4 : i32 to vector<128x1xi32>
    %6 = arith.remsi %2, %5 : vector<128x1xi32>
    %c0_i32_1 = arith.constant 0 : i32
    %7 = vector.broadcast %c0_i32_1 : i32 to vector<128x1xi32>
    %8 = arith.cmpi ne, %6, %7 : vector<128x1xi32>
    %c0_i32_2 = arith.constant 0 : i32
    %9 = vector.broadcast %c0_i32_2 : i32 to vector<128x1xi32>
    %10 = arith.cmpi slt, %6, %9 : vector<128x1xi32>
    %c0_i32_3 = arith.constant 0 : i32
    %11 = arith.cmpi slt, %4, %c0_i32_3 : i32
    %12 = vector.broadcast %11 : i1 to vector<128x1xi1>
    %13 = vector.broadcast %12 : vector<128x1xi1> to vector<128x1xi1>
    %14 = arith.xori %10, %13 : vector<128x1xi1>
    %15 = arith.andi %14, %8 : vector<128x1xi1>
    %16 = vector.broadcast %4 : i32 to vector<128x1xi32>
    %17 = arith.addi %6, %16 : vector<128x1xi32>
    %18 = arith.select %15, %17, %6 : vector<128x1xi1>, vector<128x1xi32>
    %c8_i32 = arith.constant 8 : i32
    %19 = vector.broadcast %c8_i32 : i32 to vector<128x1xi32>
    %20 = arith.cmpi slt, %18, %19 : vector<128x1xi32>
    %c0_4 = arith.constant 0 : index
    %c0_5 = arith.constant 0 : index
    %c0_6 = arith.constant 0 : index
    %21 = vector.load %arg1[%c0_4, %c0_5, %c0_6] : memref<1x128x36xbf16, #tpu.memory_space<vmem>>, vector<1x128x36xbf16>
    %22 = vector.shape_cast %21 : vector<1x128x36xbf16> to vector<128x36xbf16>
    %c0_7 = arith.constant 0 : index
    %c0_8 = arith.constant 0 : index
    %23 = vector.load %arg2[%c0_7, %c0_8] : memref<36x16xbf16, #tpu.memory_space<vmem>>, vector<36x16xbf16>
    %cst_9 = arith.constant dense<0.000000e+00> : vector<128x16xf32>
    %24 = tpu.matmul %22, %23, %cst_9 {dimension_numbers = #tpu.dot_dimension_numbers<[1], [0], [0], [1], [0, 0, 1, 1], [], []>} : vector<128x36xbf16>, vector<36x16xbf16>, vector<128x16xf32> -> vector<128x16xf32>
    %c0_10 = arith.constant 0 : index
    %c0_11 = arith.constant 0 : index
    %25 = vector.load %arg3[%c0_10, %c0_11] : memref<1x16xf32, #tpu.memory_space<vmem>>, vector<1x16xf32>
    %26 = vector.broadcast %25 : vector<1x16xf32> to vector<128x16xf32>
    %27 = arith.addf %24, %26 : vector<128x16xf32>
    %cst_12 = arith.constant 5.000000e-01 : f32
    %28 = vector.broadcast %cst_12 : f32 to vector<128x16xf32>
    %29 = arith.mulf %28, %27 : vector<128x16xf32>
    %cst_13 = arith.constant 4.471500e-02 : f32
    %30 = vector.broadcast %cst_13 : f32 to vector<128x16xf32>
    %31 = arith.mulf %30, %27 : vector<128x16xf32>
    %32 = arith.mulf %31, %27 : vector<128x16xf32>
    %33 = arith.mulf %32, %27 : vector<128x16xf32>
    %34 = arith.addf %27, %33 : vector<128x16xf32>
    %cst_14 = arith.constant 0.797884583 : f32
    %35 = vector.broadcast %cst_14 : f32 to vector<128x16xf32>
    %36 = arith.mulf %35, %34 : vector<128x16xf32>
    %37 = math.tanh %36 : vector<128x16xf32>
    %cst_15 = arith.constant 1.000000e+00 : f32
    %38 = vector.broadcast %cst_15 : f32 to vector<128x16xf32>
    %39 = arith.addf %38, %37 : vector<128x16xf32>
    %40 = arith.mulf %29, %39 : vector<128x16xf32>
    %cst_16 = arith.constant 0.000000e+00 : f32
    %41 = vector.shape_cast %20 : vector<128x1xi1> to vector<128x1xi1>
    %42 = vector.broadcast %41 : vector<128x1xi1> to vector<128x16xi1>
    %43 = vector.broadcast %cst_16 : f32 to vector<128x16xf32>
    %44 = arith.select %42, %40, %43 : vector<128x16xi1>, vector<128x16xf32>
    %c17 = arith.constant 17 : index
    %c0_17 = arith.constant 0 : index
    %45 = vector.load %arg11[%c17, %c0_17] : memref<176x16xf32, #tpu.memory_space<vmem>>, vector<128x16xf32>
    tpu.vector_store %arg11[%c17, %c0_17], %44 {strides = array<i32>} : memref<176x16xf32, #tpu.memory_space<vmem>>, vector<128x16xf32>,
    %c0_18 = arith.constant 0 : index
    %c0_19 = arith.constant 0 : index
    %46 = vector.load %arg11[%c0_18, %c0_19] : memref<176x16xf32, #tpu.memory_space<vmem>>, vector<128x16xf32>
    %c1 = arith.constant 1 : index
    %c0_20 = arith.constant 0 : index
    %47 = vector.load %arg11[%c1, %c0_20] : memref<176x16xf32, #tpu.memory_space<vmem>>, vector<128x16xf32>
    %c2 = arith.constant 2 : index
    %c0_21 = arith.constant 0 : index
    %48 = vector.load %arg11[%c2, %c0_21] : memref<176x16xf32, #tpu.memory_space<vmem>>, vector<128x16xf32>
    %c16 = arith.constant 16 : index
    %c0_22 = arith.constant 0 : index
    %49 = vector.load %arg11[%c16, %c0_22] : memref<176x16xf32, #tpu.memory_space<vmem>>, vector<128x16xf32>
    %c17_23 = arith.constant 17 : index
    %c0_24 = arith.constant 0 : index
    %50 = vector.load %arg11[%c17_23, %c0_24] : memref<176x16xf32, #tpu.memory_space<vmem>>, vector<128x16xf32>
    %c18 = arith.constant 18 : index
    %c0_25 = arith.constant 0 : index
    %51 = vector.load %arg11[%c18, %c0_25] : memref<176x16xf32, #tpu.memory_space<vmem>>, vector<128x16xf32>
    %c32 = arith.constant 32 : index
    %c0_26 = arith.constant 0 : index
    %52 = vector.load %arg11[%c32, %c0_26] : memref<176x16xf32, #tpu.memory_space<vmem>>, vector<128x16xf32>
    %c33 = arith.constant 33 : index
    %c0_27 = arith.constant 0 : index
    %53 = vector.load %arg11[%c33, %c0_27] : memref<176x16xf32, #tpu.memory_space<vmem>>, vector<128x16xf32>
    %c34 = arith.constant 34 : index
    %c0_28 = arith.constant 0 : index
    %54 = vector.load %arg11[%c34, %c0_28] : memref<176x16xf32, #tpu.memory_space<vmem>>, vector<128x16xf32>
    %55 = tpu.concatenate %46, %47, %48, %49, %50, %51, %52, %53, %54 in 1 : vector<128x16xf32>, vector<128x16xf32>, vector<128x16xf32>, vector<128x16xf32>, vector<128x16xf32>, vector<128x16xf32>, vector<128x16xf32>, vector<128x16xf32>, vector<128x16xf32> -> vector<128x144xf32>
    %56 = arith.truncf %55 : vector<128x144xf32> to vector<128x144xbf16>
    %c0_29 = arith.constant 0 : index
    %c0_30 = arith.constant 0 : index
    %57 = vector.load %arg4[%c0_29, %c0_30] : memref<144x16xbf16, #tpu.memory_space<vmem>>, vector<144x16xbf16>
    %cst_31 = arith.constant dense<0.000000e+00> : vector<128x16xf32>
    %58 = tpu.matmul %56, %57, %cst_31 {dimension_numbers = #tpu.dot_dimension_numbers<[1], [0], [0], [1], [0, 0, 1, 1], [], []>} : vector<128x144xbf16>, vector<144x16xbf16>, vector<128x16xf32> -> vector<128x16xf32>
    %c0_32 = arith.constant 0 : index
    %c0_33 = arith.constant 0 : index
    %59 = vector.load %arg5[%c0_32, %c0_33] : memref<1x16xf32, #tpu.memory_space<vmem>>, vector<1x16xf32>
    %60 = vector.broadcast %59 : vector<1x16xf32> to vector<128x16xf32>
    %61 = arith.addf %58, %60 : vector<128x16xf32>
    %cst_34 = arith.constant 5.000000e-01 : f32
    %62 = vector.broadcast %cst_34 : f32 to vector<128x16xf32>
    %63 = arith.mulf %62, %61 : vector<128x16xf32>
    %cst_35 = arith.constant 4.471500e-02 : f32
    %64 = vector.broadcast %cst_35 : f32 to vector<128x16xf32>
    %65 = arith.mulf %64, %61 : vector<128x16xf32>
    %66 = arith.mulf %65, %61 : vector<128x16xf32>
    %67 = arith.mulf %66, %61 : vector<128x16xf32>
    %68 = arith.addf %61, %67 : vector<128x16xf32>
    %cst_36 = arith.constant 0.797884583 : f32
    %69 = vector.broadcast %cst_36 : f32 to vector<128x16xf32>
    %70 = arith.mulf %69, %68 : vector<128x16xf32>
    %71 = math.tanh %70 : vector<128x16xf32>
    %cst_37 = arith.constant 1.000000e+00 : f32
    %72 = vector.broadcast %cst_37 : f32 to vector<128x16xf32>
    %73 = arith.addf %72, %71 : vector<128x16xf32>
    %74 = arith.mulf %63, %73 : vector<128x16xf32>
    %cst_38 = arith.constant 0.000000e+00 : f32
    %75 = vector.shape_cast %20 : vector<128x1xi1> to vector<128x1xi1>
    %76 = vector.broadcast %75 : vector<128x1xi1> to vector<128x16xi1>
    %77 = vector.broadcast %cst_38 : f32 to vector<128x16xf32>
    %78 = arith.select %76, %74, %77 : vector<128x16xi1>, vector<128x16xf32>
    %c17_39 = arith.constant 17 : index
    %c0_40 = arith.constant 0 : index
    %79 = vector.load %arg11[%c17_39, %c0_40] : memref<176x16xf32, #tpu.memory_space<vmem>>, vector<128x16xf32>
    tpu.vector_store %arg11[%c17_39, %c0_40], %78 {strides = array<i32>} : memref<176x16xf32, #tpu.memory_space<vmem>>, vector<128x16xf32>,
    %c0_41 = arith.constant 0 : index
    %c0_42 = arith.constant 0 : index
    %80 = vector.load %arg11[%c0_41, %c0_42] : memref<176x16xf32, #tpu.memory_space<vmem>>, vector<128x16xf32>
    %c1_43 = arith.constant 1 : index
    %c0_44 = arith.constant 0 : index
    %81 = vector.load %arg11[%c1_43, %c0_44] : memref<176x16xf32, #tpu.memory_space<vmem>>, vector<128x16xf32>
    %c2_45 = arith.constant 2 : index
    %c0_46 = arith.constant 0 : index
    %82 = vector.load %arg11[%c2_45, %c0_46] : memref<176x16xf32, #tpu.memory_space<vmem>>, vector<128x16xf32>
    %c16_47 = arith.constant 16 : index
    %c0_48 = arith.constant 0 : index
    %83 = vector.load %arg11[%c16_47, %c0_48] : memref<176x16xf32, #tpu.memory_space<vmem>>, vector<128x16xf32>
    %c17_49 = arith.constant 17 : index
    %c0_50 = arith.constant 0 : index
    %84 = vector.load %arg11[%c17_49, %c0_50] : memref<176x16xf32, #tpu.memory_space<vmem>>, vector<128x16xf32>
    %c18_51 = arith.constant 18 : index
    %c0_52 = arith.constant 0 : index
    %85 = vector.load %arg11[%c18_51, %c0_52] : memref<176x16xf32, #tpu.memory_space<vmem>>, vector<128x16xf32>
    %c32_53 = arith.constant 32 : index
    %c0_54 = arith.constant 0 : index
    %86 = vector.load %arg11[%c32_53, %c0_54] : memref<176x16xf32, #tpu.memory_space<vmem>>, vector<128x16xf32>
    %c33_55 = arith.constant 33 : index
    %c0_56 = arith.constant 0 : index
    %87 = vector.load %arg11[%c33_55, %c0_56] : memref<176x16xf32, #tpu.memory_space<vmem>>, vector<128x16xf32>
    %c34_57 = arith.constant 34 : index
    %c0_58 = arith.constant 0 : index
    %88 = vector.load %arg11[%c34_57, %c0_58] : memref<176x16xf32, #tpu.memory_space<vmem>>, vector<128x16xf32>
    %89 = tpu.concatenate %80, %81, %82, %83, %84, %85, %86, %87, %88 in 1 : vector<128x16xf32>, vector<128x16xf32>, vector<128x16xf32>, vector<128x16xf32>, vector<128x16xf32>, vector<128x16xf32>, vector<128x16xf32>, vector<128x16xf32>, vector<128x16xf32> -> vector<128x144xf32>
    %90 = arith.truncf %89 : vector<128x144xf32> to vector<128x144xbf16>
    %c0_59 = arith.constant 0 : index
    %c0_60 = arith.constant 0 : index
    %91 = vector.load %arg6[%c0_59, %c0_60] : memref<144x16xbf16, #tpu.memory_space<vmem>>, vector<144x16xbf16>
    %cst_61 = arith.constant dense<0.000000e+00> : vector<128x16xf32>
    %92 = tpu.matmul %90, %91, %cst_61 {dimension_numbers = #tpu.dot_dimension_numbers<[1], [0], [0], [1], [0, 0, 1, 1], [], []>} : vector<128x144xbf16>, vector<144x16xbf16>, vector<128x16xf32> -> vector<128x16xf32>
    %c0_62 = arith.constant 0 : index
    %c0_63 = arith.constant 0 : index
    %93 = vector.load %arg7[%c0_62, %c0_63] : memref<1x16xf32, #tpu.memory_space<vmem>>, vector<1x16xf32>
    %94 = vector.broadcast %93 : vector<1x16xf32> to vector<128x16xf32>
    %95 = arith.addf %92, %94 : vector<128x16xf32>
    %cst_64 = arith.constant 5.000000e-01 : f32
    %96 = vector.broadcast %cst_64 : f32 to vector<128x16xf32>
    %97 = arith.mulf %96, %95 : vector<128x16xf32>
    %cst_65 = arith.constant 4.471500e-02 : f32
    %98 = vector.broadcast %cst_65 : f32 to vector<128x16xf32>
    %99 = arith.mulf %98, %95 : vector<128x16xf32>
    %100 = arith.mulf %99, %95 : vector<128x16xf32>
    %101 = arith.mulf %100, %95 : vector<128x16xf32>
    %102 = arith.addf %95, %101 : vector<128x16xf32>
    %cst_66 = arith.constant 0.797884583 : f32
    %103 = vector.broadcast %cst_66 : f32 to vector<128x16xf32>
    %104 = arith.mulf %103, %102 : vector<128x16xf32>
    %105 = math.tanh %104 : vector<128x16xf32>
    %cst_67 = arith.constant 1.000000e+00 : f32
    %106 = vector.broadcast %cst_67 : f32 to vector<128x16xf32>
    %107 = arith.addf %106, %105 : vector<128x16xf32>
    %108 = arith.mulf %97, %107 : vector<128x16xf32>
    %cst_68 = arith.constant 0.000000e+00 : f32
    %109 = vector.shape_cast %20 : vector<128x1xi1> to vector<128x1xi1>
    %110 = vector.broadcast %109 : vector<128x1xi1> to vector<128x16xi1>
    %111 = vector.broadcast %cst_68 : f32 to vector<128x16xf32>
    %112 = arith.select %110, %108, %111 : vector<128x16xi1>, vector<128x16xf32>
    %c17_69 = arith.constant 17 : index
    %c0_70 = arith.constant 0 : index
    %113 = vector.load %arg11[%c17_69, %c0_70] : memref<176x16xf32, #tpu.memory_space<vmem>>, vector<128x16xf32>
    tpu.vector_store %arg11[%c17_69, %c0_70], %112 {strides = array<i32>} : memref<176x16xf32, #tpu.memory_space<vmem>>, vector<128x16xf32>,
    %c17_71 = arith.constant 17 : index
    %c0_72 = arith.constant 0 : index
    %114 = tpu.strided_load %arg11[%c17_71, %c0_72] {strides = array<i32: 2, 1>} : memref<176x16xf32, #tpu.memory_space<vmem>>, vector<4x16xf32>
    %c18_73 = arith.constant 18 : index
    %c0_74 = arith.constant 0 : index
    %115 = tpu.strided_load %arg11[%c18_73, %c0_74] {strides = array<i32: 2, 1>} : memref<176x16xf32, #tpu.memory_space<vmem>>, vector<4x16xf32>
    %c33_75 = arith.constant 33 : index
    %c0_76 = arith.constant 0 : index
    %116 = tpu.strided_load %arg11[%c33_75, %c0_76] {strides = array<i32: 2, 1>} : memref<176x16xf32, #tpu.memory_space<vmem>>, vector<4x16xf32>
    %c34_77 = arith.constant 34 : index
    %c0_78 = arith.constant 0 : index
    %117 = tpu.strided_load %arg11[%c34_77, %c0_78] {strides = array<i32: 2, 1>} : memref<176x16xf32, #tpu.memory_space<vmem>>, vector<4x16xf32>
    %118 = tpu.concatenate %114, %115, %116, %117 in 1 : vector<4x16xf32>, vector<4x16xf32>, vector<4x16xf32>, vector<4x16xf32> -> vector<4x64xf32>
    %c49 = arith.constant 49 : index
    %c0_79 = arith.constant 0 : index
    %119 = tpu.strided_load %arg11[%c49, %c0_79] {strides = array<i32: 2, 1>} : memref<176x16xf32, #tpu.memory_space<vmem>>, vector<4x16xf32>
    %c50 = arith.constant 50 : index
    %c0_80 = arith.constant 0 : index
    %120 = tpu.strided_load %arg11[%c50, %c0_80] {strides = array<i32: 2, 1>} : memref<176x16xf32, #tpu.memory_space<vmem>>, vector<4x16xf32>
    %c65 = arith.constant 65 : index
    %c0_81 = arith.constant 0 : index
    %121 = tpu.strided_load %arg11[%c65, %c0_81] {strides = array<i32: 2, 1>} : memref<176x16xf32, #tpu.memory_space<vmem>>, vector<4x16xf32>
    %c66 = arith.constant 66 : index
    %c0_82 = arith.constant 0 : index
    %122 = tpu.strided_load %arg11[%c66, %c0_82] {strides = array<i32: 2, 1>} : memref<176x16xf32, #tpu.memory_space<vmem>>, vector<4x16xf32>
    %123 = tpu.concatenate %119, %120, %121, %122 in 1 : vector<4x16xf32>, vector<4x16xf32>, vector<4x16xf32>, vector<4x16xf32> -> vector<4x64xf32>
    %c81 = arith.constant 81 : index
    %c0_83 = arith.constant 0 : index
    %124 = tpu.strided_load %arg11[%c81, %c0_83] {strides = array<i32: 2, 1>} : memref<176x16xf32, #tpu.memory_space<vmem>>, vector<4x16xf32>
    %c82 = arith.constant 82 : index
    %c0_84 = arith.constant 0 : index
    %125 = tpu.strided_load %arg11[%c82, %c0_84] {strides = array<i32: 2, 1>} : memref<176x16xf32, #tpu.memory_space<vmem>>, vector<4x16xf32>
    %c97 = arith.constant 97 : index
    %c0_85 = arith.constant 0 : index
    %126 = tpu.strided_load %arg11[%c97, %c0_85] {strides = array<i32: 2, 1>} : memref<176x16xf32, #tpu.memory_space<vmem>>, vector<4x16xf32>
    %c98 = arith.constant 98 : index
    %c0_86 = arith.constant 0 : index
    %127 = tpu.strided_load %arg11[%c98, %c0_86] {strides = array<i32: 2, 1>} : memref<176x16xf32, #tpu.memory_space<vmem>>, vector<4x16xf32>
    %128 = tpu.concatenate %124, %125, %126, %127 in 1 : vector<4x16xf32>, vector<4x16xf32>, vector<4x16xf32>, vector<4x16xf32> -> vector<4x64xf32>
    %c113 = arith.constant 113 : index
    %c0_87 = arith.constant 0 : index
    %129 = tpu.strided_load %arg11[%c113, %c0_87] {strides = array<i32: 2, 1>} : memref<176x16xf32, #tpu.memory_space<vmem>>, vector<4x16xf32>
    %c114 = arith.constant 114 : index
    %c0_88 = arith.constant 0 : index
    %130 = tpu.strided_load %arg11[%c114, %c0_88] {strides = array<i32: 2, 1>} : memref<176x16xf32, #tpu.memory_space<vmem>>, vector<4x16xf32>
    %c129 = arith.constant 129 : index
    %c0_89 = arith.constant 0 : index
    %131 = tpu.strided_load %arg11[%c129, %c0_89] {strides = array<i32: 2, 1>} : memref<176x16xf32, #tpu.memory_space<vmem>>, vector<4x16xf32>
    %c130 = arith.constant 130 : index
    %c0_90 = arith.constant 0 : index
    %132 = tpu.strided_load %arg11[%c130, %c0_90] {strides = array<i32: 2, 1>} : memref<176x16xf32, #tpu.memory_space<vmem>>, vector<4x16xf32>
    %133 = tpu.concatenate %129, %130, %131, %132 in 1 : vector<4x16xf32>, vector<4x16xf32>, vector<4x16xf32>, vector<4x16xf32> -> vector<4x64xf32>
    %134 = tpu.concatenate %118, %123, %128, %133 in 0 : vector<4x64xf32>, vector<4x64xf32>, vector<4x64xf32>, vector<4x64xf32> -> vector<16x64xf32>
    %135 = arith.truncf %134 : vector<16x64xf32> to vector<16x64xbf16>
    %c0_91 = arith.constant 0 : index
    %c0_92 = arith.constant 0 : index
    %136 = vector.load %arg8[%c0_91, %c0_92] : memref<64x32xbf16, #tpu.memory_space<vmem>>, vector<64x32xbf16>
    %cst_93 = arith.constant dense<0.000000e+00> : vector<16x32xf32>
    %137 = tpu.matmul %135, %136, %cst_93 {dimension_numbers = #tpu.dot_dimension_numbers<[1], [0], [0], [1], [0, 0, 1, 1], [], []>} : vector<16x64xbf16>, vector<64x32xbf16>, vector<16x32xf32> -> vector<16x32xf32>
    %c0_94 = arith.constant 0 : index
    %c0_95 = arith.constant 0 : index
    %138 = vector.load %arg9[%c0_94, %c0_95] : memref<1x32xf32, #tpu.memory_space<vmem>>, vector<1x32xf32>
    %139 = vector.broadcast %138 : vector<1x32xf32> to vector<16x32xf32>
    %140 = arith.addf %137, %139 : vector<16x32xf32>
    %c0_96 = arith.constant 0 : index
    %c0_97 = arith.constant 0 : index
    %c0_98 = arith.constant 0 : index
    %141 = vector.load %arg10[%c0_96, %c0_97, %c0_98] : memref<1x16x32xf32, #tpu.memory_space<vmem>>, vector<1x16x32xf32>
    %142 = vector.shape_cast %141 : vector<1x16x32xf32> to vector<16x32xf32>
    %143 = vector.shape_cast %140 : vector<16x32xf32> to vector<1x16x32xf32>
    tpu.vector_store %arg10[%c0_96, %c0_97, %c0_98], %143 {strides = array<i32>} : memref<1x16x32xf32, #tpu.memory_space<vmem>>, vector<1x16x32xf32>,
    return
  }
  func.func @transform_0(%arg0: i32) -> (i32, i32, i32) {
    %c0_i32 = arith.constant 0 : i32
    %c0_i32_0 = arith.constant 0 : i32
    %c0_i32_1 = arith.constant 0 : i32
    return %arg0, %c0_i32, %c0_i32_0 : i32, i32, i32
  }
  func.func @transform_1(%arg0: i32) -> (i32, i32) {
    %c0_i32 = arith.constant 0 : i32
    %c0_i32_0 = arith.constant 0 : i32
    %c0_i32_1 = arith.constant 0 : i32
    return %c0_i32, %c0_i32_0 : i32, i32
  }
  func.func @transform_2(%arg0: i32) -> (i32, i32) {
    %c0_i32 = arith.constant 0 : i32
    %c0_i32_0 = arith.constant 0 : i32
    %c0_i32_1 = arith.constant 0 : i32
    return %c0_i32, %c0_i32_0 : i32, i32
  }
  func.func @transform_3(%arg0: i32) -> (i32, i32) {
    %c0_i32 = arith.constant 0 : i32
    %c0_i32_0 = arith.constant 0 : i32
    %c0_i32_1 = arith.constant 0 : i32
    return %c0_i32, %c0_i32_0 : i32, i32
  }
  func.func @transform_4(%arg0: i32) -> (i32, i32) {
    %c0_i32 = arith.constant 0 : i32
    %c0_i32_0 = arith.constant 0 : i32
    %c0_i32_1 = arith.constant 0 : i32
    return %c0_i32, %c0_i32_0 : i32, i32
  }
  func.func @transform_5(%arg0: i32) -> (i32, i32) {
    %c0_i32 = arith.constant 0 : i32
    %c0_i32_0 = arith.constant 0 : i32
    %c0_i32_1 = arith.constant 0 : i32
    return %c0_i32, %c0_i32_0 : i32, i32
  }
  func.func @transform_6(%arg0: i32) -> (i32, i32) {
    %c0_i32 = arith.constant 0 : i32
    %c0_i32_0 = arith.constant 0 : i32
    %c0_i32_1 = arith.constant 0 : i32
    return %c0_i32, %c0_i32_0 : i32, i32
  }
  func.func @transform_7(%arg0: i32) -> (i32, i32) {
    %c0_i32 = arith.constant 0 : i32
    %c0_i32_0 = arith.constant 0 : i32
    %c0_i32_1 = arith.constant 0 : i32
    return %c0_i32, %c0_i32_0 : i32, i32
  }
  func.func @transform_8(%arg0: i32) -> (i32, i32) {
    %c0_i32 = arith.constant 0 : i32
    %c0_i32_0 = arith.constant 0 : i32
    %c0_i32_1 = arith.constant 0 : i32
    return %c0_i32, %c0_i32_0 : i32, i32
  }
  func.func @transform_9(%arg0: i32) -> (i32, i32, i32) {
    %c0_i32 = arith.constant 0 : i32
    %c0_i32_0 = arith.constant 0 : i32
    %c0_i32_1 = arith.constant 0 : i32
    return %arg0, %c0_i32, %c0_i32_0 : i32, i32, i32
  }
}

</mosaic_0001>

<llo_original>
// kernel: conv_embed_forward.1
$region0: #{conv_embed_forward.1}
  #allocation0 [shape = 'u32[]', space=smem, size = 0x4, offset = 0x4, fixed_abs, tag = 'smem constant byte address 0x4 - core index']
  #allocation1 [shape = 'u32[144,128]{1,0:T(1,128)}', space=vmem, size = 0x12000, scoped, tag = 'internal scratch']
  #allocation2 [shape = 'f32[176,16]{1,0:T(8,128)}', space=vmem, size = 0x16000, scoped, tag = 'scratch operand']
  %s0 = inlined_call_operand.vmem [shape: bf16[2,128,36], index: 0, kind: input, shape index: {}]
  %s1 = inlined_call_operand.vmem [shape: bf16[36,16], index: 1, kind: input, shape index: {}]
  %s2 = inlined_call_operand.vmem [shape: f32[1,16], index: 2, kind: input, shape index: {}]
  %s3 = inlined_call_operand.vmem [shape: bf16[144,16], index: 3, kind: input, shape index: {}]
  %s4 = inlined_call_operand.vmem [shape: f32[1,16], index: 4, kind: input, shape index: {}]
  %s5 = inlined_call_operand.vmem [shape: bf16[144,16], index: 5, kind: input, shape index: {}]
  %s6 = inlined_call_operand.vmem [shape: f32[1,16], index: 6, kind: input, shape index: {}]
  %s7 = inlined_call_operand.vmem [shape: bf16[64,32], index: 7, kind: input, shape index: {}]
  %s8 = inlined_call_operand.vmem [shape: f32[1,32], index: 8, kind: input, shape index: {}]
  %s9 = inlined_call_operand.hbm [shape: f32[2,16,32], index: 9, kind: output, shape index: {}]
  %s10 = sld [smem:[#allocation0]]
  $region69: #{conv_embed_forward.1} parent=0
    _
  %s12 = ssub.s32 1, %s10
  %s13 = scalar_select 0, %s12, %s10
  $region1: #{conv_embed_forward.1} parent=0
    #allocation3 [shape = 'u8[16384]{0}', space=vmem, size = 0x4000, scoped, tag = 'output window, operand 0']
    #allocation4 [shape = 's32[2]{0}', space=sflag, size = 0x8, scoped, tag = 'scoped memory for conv_embed_forward.1']
    %14 = vsyncpa [#allocation4], 0
    %s15 = scalar_lea.sflag [#allocation4], 1
    %16 = vsyncpa %s15, 0
    loop: start=0, step=1, limit=4
    $region2: #{conv_embed_forward.1} parent=1 // loop_pre_header
      _
    $region3: #{conv_embed_forward.1} parent=1 // loop_header
      %s18 = sphi 0, %s22
      %p19 = scmp.ge.s32.totalorder %s18, 4
      %s28 = sphi 0, %s30
      %s31 = sphi 0, %s28
      %s32 = sphi 0, %s31
      %s48 = sphi 0, %s32
      %s52 = sphi 0, %s52
      %s54 = sphi 0, %s52
      %s55 = sphi 0, %s54
      %s69 = sphi 0, %s55
      %s73 = sphi 0, %s73
      %s75 = sphi 0, %s73
      %s76 = sphi 0, %s75
      %s90 = sphi 0, %s76
      %s94 = sphi 0, %s94
      %s96 = sphi 0, %s94
      %s97 = sphi 0, %s96
      %s111 = sphi 0, %s97
      %s115 = sphi 0, %s115
      %s117 = sphi 0, %s115
      %s118 = sphi 0, %s117
      %s132 = sphi 0, %s118
      %s136 = sphi 0, %s136
      %s138 = sphi 0, %s136
      %s139 = sphi 0, %s138
      %s153 = sphi 0, %s139
      %s157 = sphi 0, %s157
      %s159 = sphi 0, %s157
      %s160 = sphi 0, %s159
      %s174 = sphi 0, %s160
      %s178 = sphi 0, %s178
      %s180 = sphi 0, %s178
      %s181 = sphi 0, %s180
      %s195 = sphi 0, %s181
      %s199 = sphi 0, %s199
      %s201 = sphi 0, %s199
      %s202 = sphi 0, %s201
      %s216 = sphi 0, %s202
      %s222 = sphi 0, %s224
      %s225 = sphi 0, %s222
      %s226 = sphi 0, %s225
      %s242 = sphi 0, %s226
    $region4: #{conv_embed_forward.1} parent=1 // loop_header_branch
      %21 = sbr.rel (%p19) target = $region8
    $region5: #{conv_embed_forward.1} parent=1 // loop_body
      %s23 = ssub.s32 %s18, 1
      %s24 = ssub.s32 %s18, 2
      %s25 = sadd.s32 %s18, 1
      %s26 = ssub.s32 %s18, %s25
      %p27 = scmp.eq.s32.totalorder %s26, 0
      %s29 = sadd.s32 %s28, 1
      %s30 = scalar_select %p27, %s28, %s29
      %p33 = pneg %p27
      %p34 = scmp.eq.s32.totalorder %s18, 1
      %p35 = por %p33, %p34
      %p36 = scmp.ne.s32.totalorder %s28, %s31
      %p37 = scmp.eq.s32.totalorder %s18, 0
      %p38 = por %p36, %p37
      %p39 = scmp.ne.s32.totalorder %s28, %s31
      %p40 = scmp.eq.s32.totalorder %s23, 1
      %p41 = por %p39, %p40
      %p42 = scmp.ne.s32.totalorder %s31, %s32
      %p43 = scmp.eq.s32.totalorder %s23, 0
      %p44 = por %p42, %p43
      %p45 = scmp.ne.s32.totalorder %s31, %s32
      %p46 = scmp.eq.s32.totalorder %s24, 1
      %p47 = por %p45, %p46
      %p49 = scmp.ne.s32.totalorder %s32, %s48
      %p50 = scmp.eq.s32.totalorder %s24, 0
      %p51 = por %p49, %p50
      %s53 = sadd.s32 %s52, 1
      %p56 = scmp.eq.s32.totalorder %s18, 1
      %p57 = scmp.ne.s32.totalorder %s52, %s54
      %p58 = scmp.eq.s32.totalorder %s18, 0
      %p59 = por %p57, %p58
      %p60 = scmp.ne.s32.totalorder %s52, %s54
      %p61 = scmp.eq.s32.totalorder %s23, 1
      %p62 = por %p60, %p61
      %p63 = scmp.ne.s32.totalorder %s54, %s55
      %p64 = scmp.eq.s32.totalorder %s23, 0
      %p65 = por %p63, %p64
      %p66 = scmp.ne.s32.totalorder %s54, %s55
      %p67 = scmp.eq.s32.totalorder %s24, 1
      %p68 = por %p66, %p67
      %p70 = scmp.ne.s32.totalorder %s55, %s69
      %p71 = scmp.eq.s32.totalorder %s24, 0
      %p72 = por %p70, %p71
      %s74 = sadd.s32 %s73, 1
      %p77 = scmp.eq.s32.totalorder %s18, 1
      %p78 = scmp.ne.s32.totalorder %s73, %s75
      %p79 = scmp.eq.s32.totalorder %s18, 0
      %p80 = por %p78, %p79
      %p81 = scmp.ne.s32.totalorder %s73, %s75
      %p82 = scmp.eq.s32.totalorder %s23, 1
      %p83 = por %p81, %p82
      %p84 = scmp.ne.s32.totalorder %s75, %s76
      %p85 = scmp.eq.s32.totalorder %s23, 0
      %p86 = por %p84, %p85
      %p87 = scmp.ne.s32.totalorder %s75, %s76
      %p88 = scmp.eq.s32.totalorder %s24, 1
      %p89 = por %p87, %p88
      %p91 = scmp.ne.s32.totalorder %s76, %s90
      %p92 = scmp.eq.s32.totalorder %s24, 0
      %p93 = por %p91, %p92
      %s95 = sadd.s32 %s94, 1
      %p98 = scmp.eq.s32.totalorder %s18, 1
      %p99 = scmp.ne.s32.totalorder %s94, %s96
      %p100 = scmp.eq.s32.totalorder %s18, 0
      %p101 = por %p99, %p100
      %p102 = scmp.ne.s32.totalorder %s94, %s96
      %p103 = scmp.eq.s32.totalorder %s23, 1
      %p104 = por %p102, %p103
      %p105 = scmp.ne.s32.totalorder %s96, %s97
      %p106 = scmp.eq.s32.totalorder %s23, 0
      %p107 = por %p105, %p106
      %p108 = scmp.ne.s32.totalorder %s96, %s97
      %p109 = scmp.eq.s32.totalorder %s24, 1
      %p110 = por %p108, %p109
      %p112 = scmp.ne.s32.totalorder %s97, %s111
      %p113 = scmp.eq.s32.totalorder %s24, 0
      %p114 = por %p112, %p113
      %s116 = sadd.s32 %s115, 1
      %p119 = scmp.eq.s32.totalorder %s18, 1
      %p120 = scmp.ne.s32.totalorder %s115, %s117
      %p121 = scmp.eq.s32.totalorder %s18, 0
      %p122 = por %p120, %p121
      %p123 = scmp.ne.s32.totalorder %s115, %s117
      %p124 = scmp.eq.s32.totalorder %s23, 1
      %p125 = por %p123, %p124
      %p126 = scmp.ne.s32.totalorder %s117, %s118
      %p127 = scmp.eq.s32.totalorder %s23, 0
      %p128 = por %p126, %p127
      %p129 = scmp.ne.s32.totalorder %s117, %s118
      %p130 = scmp.eq.s32.totalorder %s24, 1
      %p131 = por %p129, %p130
      %p133 = scmp.ne.s32.totalorder %s118, %s132
      %p134 = scmp.eq.s32.totalorder %s24, 0
      %p135 = por %p133, %p134
      %s137 = sadd.s32 %s136, 1
      %p140 = scmp.eq.s32.totalorder %s18, 1
      %p141 = scmp.ne.s32.totalorder %s136, %s138
      %p142 = scmp.eq.s32.totalorder %s18, 0
      %p143 = por %p141, %p142
      %p144 = scmp.ne.s32.totalorder %s136, %s138
      %p145 = scmp.eq.s32.totalorder %s23, 1
      %p146 = por %p144, %p145
      %p147 = scmp.ne.s32.totalorder %s138, %s139
      %p148 = scmp.eq.s32.totalorder %s23, 0
      %p149 = por %p147, %p148
      %p150 = scmp.ne.s32.totalorder %s138, %s139
      %p151 = scmp.eq.s32.totalorder %s24, 1
      %p152 = por %p150, %p151
      %p154 = scmp.ne.s32.totalorder %s139, %s153
      %p155 = scmp.eq.s32.totalorder %s24, 0
      %p156 = por %p154, %p155
      %s158 = sadd.s32 %s157, 1
      %p161 = scmp.eq.s32.totalorder %s18, 1
      %p162 = scmp.ne.s32.totalorder %s157, %s159
      %p163 = scmp.eq.s32.totalorder %s18, 0
      %p164 = por %p162, %p163
      %p165 = scmp.ne.s32.totalorder %s157, %s159
      %p166 = scmp.eq.s32.totalorder %s23, 1
      %p167 = por %p165, %p166
      %p168 = scmp.ne.s32.totalorder %s159, %s160
      %p169 = scmp.eq.s32.totalorder %s23, 0
      %p170 = por %p168, %p169
      %p171 = scmp.ne.s32.totalorder %s159, %s160
      %p172 = scmp.eq.s32.totalorder %s24, 1
      %p173 = por %p171, %p172
      %p175 = scmp.ne.s32.totalorder %s160, %s174
      %p176 = scmp.eq.s32.totalorder %s24, 0
      %p177 = por %p175, %p176
      %s179 = sadd.s32 %s178, 1
      %p182 = scmp.eq.s32.totalorder %s18, 1
      %p183 = scmp.ne.s32.totalorder %s178, %s180
      %p184 = scmp.eq.s32.totalorder %s18, 0
      %p185 = por %p183, %p184
      %p186 = scmp.ne.s32.totalorder %s178, %s180
      %p187 = scmp.eq.s32.totalorder %s23, 1
      %p188 = por %p186, %p187
      %p189 = scmp.ne.s32.totalorder %s180, %s181
      %p190 = scmp.eq.s32.totalorder %s23, 0
      %p191 = por %p189, %p190
      %p192 = scmp.ne.s32.totalorder %s180, %s181
      %p193 = scmp.eq.s32.totalorder %s24, 1
      %p194 = por %p192, %p193
      %p196 = scmp.ne.s32.totalorder %s181, %s195
      %p197 = scmp.eq.s32.totalorder %s24, 0
      %p198 = por %p196, %p197
      %s200 = sadd.s32 %s199, 1
      %p203 = scmp.eq.s32.totalorder %s18, 1
      %p204 = scmp.ne.s32.totalorder %s199, %s201
      %p205 = scmp.eq.s32.totalorder %s18, 0
      %p206 = por %p204, %p205
      %p207 = scmp.ne.s32.totalorder %s199, %s201
      %p208 = scmp.eq.s32.totalorder %s23, 1
      %p209 = por %p207, %p208
      %p210 = scmp.ne.s32.totalorder %s201, %s202
      %p211 = scmp.eq.s32.totalorder %s23, 0
      %p212 = por %p210, %p211
      %p213 = scmp.ne.s32.totalorder %s201, %s202
      %p214 = scmp.eq.s32.totalorder %s24, 1
      %p215 = por %p213, %p214
      %p217 = scmp.ne.s32.totalorder %s202, %s216
      %p218 = scmp.eq.s32.totalorder %s24, 0
      %p219 = por %p217, %p218
      %s220 = ssub.s32 %s18, %s25
      %p221 = scmp.eq.s32.totalorder %s220, 0
      %s223 = sadd.s32 %s222, 1
      %s224 = scalar_select %p221, %s222, %s223
      %p227 = pneg %p221
      %p228 = scmp.eq.s32.totalorder %s18, 1
      %p229 = por %p227, %p228
      %p230 = scmp.ne.s32.totalorder %s222, %s225
      %p231 = scmp.eq.s32.totalorder %s18, 0
      %p232 = por %p230, %p231
      %p233 = scmp.ne.s32.totalorder %s222, %s225
      %p234 = scmp.eq.s32.totalorder %s23, 1
      %p235 = por %p233, %p234
      %p236 = scmp.ne.s32.totalorder %s225, %s226
      %p237 = scmp.eq.s32.totalorder %s23, 0
      %p238 = por %p236, %p237
      %p239 = scmp.ne.s32.totalorder %s225, %s226
      %p240 = scmp.eq.s32.totalorder %s24, 1
      %p241 = por %p239, %p240
      %p243 = scmp.ne.s32.totalorder %s226, %s242
      %p244 = scmp.eq.s32.totalorder %s24, 0
      %p245 = por %p243, %p244
      %p246 = scmp.le.s32.totalorder 1, %s18
      %p247 = scmp.lt.s32.totalorder %s18, 3
      %p248 = pnand %p246, %p247
      %p249 = pneg %p248
      // Predicated region
      $region9: #{conv_embed_forward.1} parent=5 // pred_check
        _
      $region10: #{conv_embed_forward.1} parent=5 // pred_check_branch
        %251 = sbr.rel (%p248) target = $region12
      $region11: #{conv_embed_forward.1} parent=5 // pred_region
        %s252 = ssub.s32 %s18, 1
        // Predicated region
        $region13: #{conv_embed_forward.1} parent=11 // pred_check
          %p253 = pneg %p65
        $region14: #{conv_embed_forward.1} parent=11 // pred_check_branch
          %255 = sbr.rel (%p253) target = $region16
        $region15: #{conv_embed_forward.1} parent=11 // pred_region
          _
        $region16: #{conv_embed_forward.1} parent=11 // pred_fallthru
          _
        // Predicated region
        $region17: #{conv_embed_forward.1} parent=11 // pred_check
          %p256 = pneg %p86
        $region18: #{conv_embed_forward.1} parent=11 // pred_check_branch
          %258 = sbr.rel (%p256) target = $region20
        $region19: #{conv_embed_forward.1} parent=11 // pred_region
          _
        $region20: #{conv_embed_forward.1} parent=11 // pred_fallthru
          _
        // Predicated region
        $region21: #{conv_embed_forward.1} parent=11 // pred_check
          %p259 = pneg %p107
        $region22: #{conv_embed_forward.1} parent=11 // pred_check_branch
          %261 = sbr.rel (%p259) target = $region24
        $region23: #{conv_embed_forward.1} parent=11 // pred_region
          _
        $region24: #{conv_embed_forward.1} parent=11 // pred_fallthru
          _
        // Predicated region
        $region25: #{conv_embed_forward.1} parent=11 // pred_check
          %p262 = pneg %p128
        $region26: #{conv_embed_forward.1} parent=11 // pred_check_branch
          %264 = sbr.rel (%p262) target = $region28
        $region27: #{conv_embed_forward.1} parent=11 // pred_region
          _
        $region28: #{conv_embed_forward.1} parent=11 // pred_fallthru
          _
        // Predicated region
        $region29: #{conv_embed_forward.1} parent=11 // pred_check
          %p265 = pneg %p149
        $region30: #{conv_embed_forward.1} parent=11 // pred_check_branch
          %267 = sbr.rel (%p265) target = $region32
        $region31: #{conv_embed_forward.1} parent=11 // pred_region
          _
        $region32: #{conv_embed_forward.1} parent=11 // pred_fallthru
          _
        // Predicated region
        $region33: #{conv_embed_forward.1} parent=11 // pred_check
          %p268 = pneg %p170
        $region34: #{conv_embed_forward.1} parent=11 // pred_check_branch
          %270 = sbr.rel (%p268) target = $region36
        $region35: #{conv_embed_forward.1} parent=11 // pred_region
          _
        $region36: #{conv_embed_forward.1} parent=11 // pred_fallthru
          _
        // Predicated region
        $region37: #{conv_embed_forward.1} parent=11 // pred_check
          %p271 = pneg %p191
        $region38: #{conv_embed_forward.1} parent=11 // pred_check_branch
          %273 = sbr.rel (%p271) target = $region40
        $region39: #{conv_embed_forward.1} parent=11 // pred_region
          _
        $region40: #{conv_embed_forward.1} parent=11 // pred_fallthru
          _
        // Predicated region
        $region41: #{conv_embed_forward.1} parent=11 // pred_check
          %p274 = pneg %p212
        $region42: #{conv_embed_forward.1} parent=11 // pred_check_branch
          %276 = sbr.rel (%p274) target = $region44
        $region43: #{conv_embed_forward.1} parent=11 // pred_region
          _
        $region44: #{conv_embed_forward.1} parent=11 // pred_fallthru
          _
      $region12: #{conv_embed_forward.1} parent=5 // pred_fallthru
        _
      %p277 = scmp.lt.s32.totalorder %s18, 2
      // Predicated region
      $region45: #{conv_embed_forward.1} parent=5 // pred_check
        %p278 = pneg %p277
      $region46: #{conv_embed_forward.1} parent=5 // pred_check_branch
        %280 = sbr.rel (%p278) target = $region48
      $region47: #{conv_embed_forward.1} parent=5 // pred_region
        // Predicated region
        $region49: #{conv_embed_forward.1} parent=47 // pred_check
          %p281 = pneg %p38
        $region50: #{conv_embed_forward.1} parent=47 // pred_check_branch
          %283 = sbr.rel (%p281) target = $region52
        $region51: #{conv_embed_forward.1} parent=47 // pred_region
          %p284 = scmp.lt.s32.totalorder %s18, 1
          %s285 = scalar_select %p284, %s18, 1
          %s286 = smul.addr %s285, 16
          %s287 = smul.addr %s286, 4
          %s288 = scalar_lea.vmem %s0, %s287
        $region52: #{conv_embed_forward.1} parent=47 // pred_fallthru
          _
      $region48: #{conv_embed_forward.1} parent=5 // pred_fallthru
        _
      %p289 = scmp.le.s32.totalorder 1, %s18
      %p290 = scmp.lt.s32.totalorder %s18, 3
      %p291 = pnand %p289, %p290
      %p292 = pneg %p291
      // Predicated region
      $region53: #{conv_embed_forward.1} parent=5 // pred_check
        _
      $region54: #{conv_embed_forward.1} parent=5 // pred_check_branch
        %294 = sbr.rel (%p291) target = $region56
      $region55: #{conv_embed_forward.1} parent=5 // pred_region
        %s295 = ssub.s32 %s18, 1
        %p296 = scmp.lt.s32.totalorder %s23, 1
        %s297 = scalar_select %p296, %s23, 1
        %s298 = smul.addr %s297, 16
        %s299 = smul.addr %s298, 4
        %s300 = scalar_lea.vmem %s0, %s299
        %p301 = pneg %p44
        %p302 = pneg %p41
        %p303 = pneg %p65
        %p304 = pneg %p62
        %p305 = pneg %p86
        %p306 = pneg %p83
        %p307 = pneg %p107
        %p308 = pneg %p104
        %p309 = pneg %p128
        %p310 = pneg %p125
        %p311 = pneg %p149
        %p312 = pneg %p146
        %p313 = pneg %p170
        %p314 = pneg %p167
        %p315 = pneg %p191
        %p316 = pneg %p188
        %p317 = pneg %p212
        %p318 = pneg %p209
        %p319 = pneg %p238
        %p320 = pneg %p235
        %s321 = sand.u32 %s225, 1
        %s322 = scalar_lea.sflag [#allocation4], %s321
        %s323 = sand.u32 %s225, 1
        %s324 = smul.addr %s323, 16
        %s325 = scalar_lea.vmem [#allocation3], %s324
        %p326 = scmp.lt.s32.totalorder %s23, 1
        %s327 = scalar_select %p326, %s23, 1
        %s328 = smul.addr %s327, 16
        %s329 = smul.addr %s328, 4
        %s330 = scalar_lea.vmem %s0, %s329
        %vm332 = vcmask 130048
        %333 = vst.msk [vmem:[#allocation2] sm:$0xff] %vm332, 0.0
        %334 = vst.msk [vmem:[#allocation2 + $0x8] sm:$0xff] %vm332, 0.0
        %335 = vst.msk [vmem:[#allocation2 + $0x10] sm:$0xff] %vm332, 0.0
        %336 = vst.msk [vmem:[#allocation2 + $0x18] sm:$0xff] %vm332, 0.0
        %337 = vst.msk [vmem:[#allocation2 + $0x20] sm:$0xff] %vm332, 0.0
        %338 = vst.msk [vmem:[#allocation2 + $0x28] sm:$0xff] %vm332, 0.0
        %339 = vst.msk [vmem:[#allocation2 + $0x30] sm:$0xff] %vm332, 0.0
        %340 = vst.msk [vmem:[#allocation2 + $0x38] sm:$0xff] %vm332, 0.0
        %341 = vst.msk [vmem:[#allocation2 + $0x40] sm:$0xff] %vm332, 0.0
        %342 = vst.msk [vmem:[#allocation2 + $0x48] sm:$0xff] %vm332, 0.0
        %343 = vst.msk [vmem:[#allocation2 + $0x50] sm:$0xff] %vm332, 0.0
        %344 = vst.msk [vmem:[#allocation2 + $0x58] sm:$0xff] %vm332, 0.0
        %345 = vst.msk [vmem:[#allocation2 + $0x60] sm:$0xff] %vm332, 0.0
        %346 = vst.msk [vmem:[#allocation2 + $0x68] sm:$0xff] %vm332, 0.0
        %347 = vst.msk [vmem:[#allocation2 + $0x70] sm:$0xff] %vm332, 0.0
        %348 = vst.msk [vmem:[#allocation2 + $0x78] sm:$0xff] %vm332, 0.0
        %349 = vst.msk [vmem:[#allocation2 + $0x80] sm:$0xff] %vm332, 0.0
        %350 = vst.msk [vmem:[#allocation2 + $0x88] sm:$0xff] %vm332, 0.0
        %351 = vst.msk [vmem:[#allocation2 + $0x90] sm:$0xff] %vm332, 0.0
        %352 = vst.msk [vmem:[#allocation2 + $0x98] sm:$0xff] %vm332, 0.0
        %353 = vst.msk [vmem:[#allocation2 + $0xa0] sm:$0xff] %vm332, 0.0
        %354 = vst.msk [vmem:[#allocation2 + $0xa8] sm:$0xff] %vm332, 0.0
        %v355 = vlaneseq
        %v356 = vshrl.u32 %v355, 7
        %v357 = vadd.s32 %v356, 8
        %v358 = vadd.s32 %v356, 16
        %v359 = vadd.s32 %v356, 24
        %v360 = vadd.s32 %v356, 32
        %v361 = vadd.s32 %v356, 40
        %v362 = vadd.s32 %v356, 48
        %v363 = vadd.s32 %v356, 56
        %v364 = vadd.s32 %v356, 64
        %v365 = vadd.s32 %v356, 72
        %v366 = vadd.s32 %v356, 80
        %v367 = vadd.s32 %v356, 88
        %v368 = vadd.s32 %v356, 96
        %v369 = vadd.s32 %v356, 104
        %v370 = vadd.s32 %v356, 112
        %v371 = vadd.s32 %v356, 120
        %vm372 = vcmp.lt.s32.totalorder %v356, 0
        %v373 = vsub.s32 0, %v356
        %v374 = vsel %vm372, %v373, %v356
        %v375 = vshrl.u32 %v374, 4
        %v376 = vand.u32 %v374, 15
        %v377 = vsub.s32 0, %v376
        %v378 = vsel %vm372, %v377, %v376
        %vm379 = vcmp.lt.s32.totalorder %v357, 0
        %v380 = vsub.s32 0, %v357
        %v381 = vsel %vm379, %v380, %v357
        %v382 = vshrl.u32 %v381, 4
        %v383 = vand.u32 %v381, 15
        %v384 = vsub.s32 0, %v383
        %v385 = vsel %vm379, %v384, %v383
        %vm386 = vcmp.lt.s32.totalorder %v358, 0
        %v387 = vsub.s32 0, %v358
        %v388 = vsel %vm386, %v387, %v358
        %v389 = vshrl.u32 %v388, 4
        %v390 = vand.u32 %v388, 15
        %v391 = vsub.s32 0, %v390
        %v392 = vsel %vm386, %v391, %v390
        %vm393 = vcmp.lt.s32.totalorder %v359, 0
        %v394 = vsub.s32 0, %v359
        %v395 = vsel %vm393, %v394, %v359
        %v396 = vshrl.u32 %v395, 4
        %v397 = vand.u32 %v395, 15
        %v398 = vsub.s32 0, %v397
        %v399 = vsel %vm393, %v398, %v397
        %vm400 = vcmp.lt.s32.totalorder %v360, 0
        %v401 = vsub.s32 0, %v360
        %v402 = vsel %vm400, %v401, %v360
        %v403 = vshrl.u32 %v402, 4
        %v404 = vand.u32 %v402, 15
        %v405 = vsub.s32 0, %v404
        %v406 = vsel %vm400, %v405, %v404
        %vm407 = vcmp.lt.s32.totalorder %v361, 0
        %v408 = vsub.s32 0, %v361
        %v409 = vsel %vm407, %v408, %v361
        %v410 = vshrl.u32 %v409, 4
        %v411 = vand.u32 %v409, 15
        %v412 = vsub.s32 0, %v411
        %v413 = vsel %vm407, %v412, %v411
        %vm414 = vcmp.lt.s32.totalorder %v362, 0
        %v415 = vsub.s32 0, %v362
        %v416 = vsel %vm414, %v415, %v362
        %v417 = vshrl.u32 %v416, 4
        %v418 = vand.u32 %v416, 15
        %v419 = vsub.s32 0, %v418
        %v420 = vsel %vm414, %v419, %v418
        %vm421 = vcmp.lt.s32.totalorder %v363, 0
        %v422 = vsub.s32 0, %v363
        %v423 = vsel %vm421, %v422, %v363
        %v424 = vshrl.u32 %v423, 4
        %v425 = vand.u32 %v423, 15
        %v426 = vsub.s32 0, %v425
        %v427 = vsel %vm421, %v426, %v425
        %vm428 = vcmp.lt.s32.totalorder %v364, 0
        %v429 = vsub.s32 0, %v364
        %v430 = vsel %vm428, %v429, %v364
        %v431 = vshrl.u32 %v430, 4
        %v432 = vand.u32 %v430, 15
        %v433 = vsub.s32 0, %v432
        %v434 = vsel %vm428, %v433, %v432
        %vm435 = vcmp.lt.s32.totalorder %v365, 0
        %v436 = vsub.s32 0, %v365
        %v437 = vsel %vm435, %v436, %v365
        %v438 = vshrl.u32 %v437, 4
        %v439 = vand.u32 %v437, 15
        %v440 = vsub.s32 0, %v439
        %v441 = vsel %vm435, %v440, %v439
        %vm442 = vcmp.lt.s32.totalorder %v366, 0
        %v443 = vsub.s32 0, %v366
        %v444 = vsel %vm442, %v443, %v366
        %v445 = vshrl.u32 %v444, 4
        %v446 = vand.u32 %v444, 15
        %v447 = vsub.s32 0, %v446
        %v448 = vsel %vm442, %v447, %v446
        %vm449 = vcmp.lt.s32.totalorder %v367, 0
        %v450 = vsub.s32 0, %v367
        %v451 = vsel %vm449, %v450, %v367
        %v452 = vshrl.u32 %v451, 4
        %v453 = vand.u32 %v451, 15
        %v454 = vsub.s32 0, %v453
        %v455 = vsel %vm449, %v454, %v453
        %vm456 = vcmp.lt.s32.totalorder %v368, 0
        %v457 = vsub.s32 0, %v368
        %v458 = vsel %vm456, %v457, %v368
        %v459 = vshrl.u32 %v458, 4
        %v460 = vand.u32 %v458, 15
        %v461 = vsub.s32 0, %v460
        %v462 = vsel %vm456, %v461, %v460
        %vm463 = vcmp.lt.s32.totalorder %v369, 0
        %v464 = vsub.s32 0, %v369
        %v465 = vsel %vm463, %v464, %v369
        %v466 = vshrl.u32 %v465, 4
        %v467 = vand.u32 %v465, 15
        %v468 = vsub.s32 0, %v467
        %v469 = vsel %vm463, %v468, %v467
        %vm470 = vcmp.lt.s32.totalorder %v370, 0
        %v471 = vsub.s32 0, %v370
        %v472 = vsel %vm470, %v471, %v370
        %v473 = vshrl.u32 %v472, 4
        %v474 = vand.u32 %v472, 15
        %v475 = vsub.s32 0, %v474
        %v476 = vsel %vm470, %v475, %v474
        %vm477 = vcmp.lt.s32.totalorder %v371, 0
        %v478 = vsub.s32 0, %v371
        %v479 = vsel %vm477, %v478, %v371
        %v480 = vshrl.u32 %v479, 4
        %v481 = vand.u32 %v479, 15
        %v482 = vsub.s32 0, %v481
        %v483 = vsel %vm477, %v482, %v481
        %vm484 = vcmp.ne.s32.totalorder %v378, 0
        %vm485 = vcmp.ne.s32.totalorder %v385, 0
        %vm486 = vcmp.ne.s32.totalorder %v392, 0
        %vm487 = vcmp.ne.s32.totalorder %v399, 0
        %vm488 = vcmp.ne.s32.totalorder %v406, 0
        %vm489 = vcmp.ne.s32.totalorder %v413, 0
        %vm490 = vcmp.ne.s32.totalorder %v420, 0
        %vm491 = vcmp.ne.s32.totalorder %v427, 0
        %vm492 = vcmp.ne.s32.totalorder %v434, 0
        %vm493 = vcmp.ne.s32.totalorder %v441, 0
        %vm494 = vcmp.ne.s32.totalorder %v448, 0
        %vm495 = vcmp.ne.s32.totalorder %v455, 0
        %vm496 = vcmp.ne.s32.totalorder %v462, 0
        %vm497 = vcmp.ne.s32.totalorder %v469, 0
        %vm498 = vcmp.ne.s32.totalorder %v476, 0
        %vm499 = vcmp.ne.s32.totalorder %v483, 0
        %vm500 = vcmp.lt.s32.totalorder %v378, 0
        %vm501 = vcmp.lt.s32.totalorder %v385, 0
        %vm502 = vcmp.lt.s32.totalorder %v392, 0
        %vm503 = vcmp.lt.s32.totalorder %v399, 0
        %vm504 = vcmp.lt.s32.totalorder %v406, 0
        %vm505 = vcmp.lt.s32.totalorder %v413, 0
        %vm506 = vcmp.lt.s32.totalorder %v420, 0
        %vm507 = vcmp.lt.s32.totalorder %v427, 0
        %vm508 = vcmp.lt.s32.totalorder %v434, 0
        %vm509 = vcmp.lt.s32.totalorder %v441, 0
        %vm510 = vcmp.lt.s32.totalorder %v448, 0
        %vm511 = vcmp.lt.s32.totalorder %v455, 0
        %vm512 = vcmp.lt.s32.totalorder %v462, 0
        %vm513 = vcmp.lt.s32.totalorder %v469, 0
        %vm514 = vcmp.lt.s32.totalorder %v476, 0
        %vm515 = vcmp.lt.s32.totalorder %v483, 0
        %vm516 = vmand %vm500, %vm484
        %vm517 = vmand %vm501, %vm485
        %vm518 = vmand %vm502, %vm486
        %vm519 = vmand %vm503, %vm487
        %vm520 = vmand %vm504, %vm488
        %vm521 = vmand %vm505, %vm489
        %vm522 = vmand %vm506, %vm490
        %vm523 = vmand %vm507, %vm491
        %vm524 = vmand %vm508, %vm492
        %vm525 = vmand %vm509, %vm493
        %vm526 = vmand %vm510, %vm494
        %vm527 = vmand %vm511, %vm495
        %vm528 = vmand %vm512, %vm496
        %vm529 = vmand %vm513, %vm497
        %vm530 = vmand %vm514, %vm498
        %vm531 = vmand %vm515, %vm499
        %v532 = vadd.s32 %v378, 16
        %v533 = vadd.s32 %v385, 16
        %v534 = vadd.s32 %v392, 16
        %v535 = vadd.s32 %v399, 16
        %v536 = vadd.s32 %v406, 16
        %v537 = vadd.s32 %v413, 16
        %v538 = vadd.s32 %v420, 16
        %v539 = vadd.s32 %v427, 16
        %v540 = vadd.s32 %v434, 16
        %v541 = vadd.s32 %v441, 16
        %v542 = vadd.s32 %v448, 16
        %v543 = vadd.s32 %v455, 16
        %v544 = vadd.s32 %v462, 16
        %v545 = vadd.s32 %v469, 16
        %v546 = vadd.s32 %v476, 16
        %v547 = vadd.s32 %v483, 16
        %v548 = vsel %vm516, %v532, %v378
        %v549 = vsel %vm517, %v533, %v385
        %v550 = vsel %vm518, %v534, %v392
        %v551 = vsel %vm519, %v535, %v399
        %v552 = vsel %vm520, %v536, %v406
        %v553 = vsel %vm521, %v537, %v413
        %v554 = vsel %vm522, %v538, %v420
        %v555 = vsel %vm523, %v539, %v427
        %v556 = vsel %vm524, %v540, %v434
        %v557 = vsel %vm525, %v541, %v441
        %v558 = vsel %vm526, %v542, %v448
        %v559 = vsel %vm527, %v543, %v455
        %v560 = vsel %vm528, %v544, %v462
        %v561 = vsel %vm529, %v545, %v469
        %v562 = vsel %vm530, %v546, %v476
        %v563 = vsel %vm531, %v547, %v483
        %vm564 = vcmp.lt.s32.totalorder %v548, 8
        %vm565 = vcmp.lt.s32.totalorder %v549, 8
        %vm566 = vcmp.lt.s32.totalorder %v550, 8
        %vm567 = vcmp.lt.s32.totalorder %v551, 8
        %vm568 = vcmp.lt.s32.totalorder %v552, 8
        %vm569 = vcmp.lt.s32.totalorder %v553, 8
        %vm570 = vcmp.lt.s32.totalorder %v554, 8
        %vm571 = vcmp.lt.s32.totalorder %v555, 8
        %vm572 = vcmp.lt.s32.totalorder %v556, 8
        %vm573 = vcmp.lt.s32.totalorder %v557, 8
        %vm574 = vcmp.lt.s32.totalorder %v558, 8
        %vm575 = vcmp.lt.s32.totalorder %v559, 8
        %vm576 = vcmp.lt.s32.totalorder %v560, 8
        %vm577 = vcmp.lt.s32.totalorder %v561, 8
        %vm578 = vcmp.lt.s32.totalorder %v562, 8
        %vm579 = vcmp.lt.s32.totalorder %v563, 8
        %v580 = vld [vmem:[%s330] sm:$0xf]
        %v581 = vld [vmem:[%s330 + $0x4] sm:$0xf]
        %v582 = vld [vmem:[%s330 + $0x8] sm:$0xf]
        %v583 = vld [vmem:[%s330 + $0xc] sm:$0xf]
        %v584 = vld [vmem:[%s330 + $0x10] sm:$0xf]
        %v585 = vld [vmem:[%s330 + $0x14] sm:$0xf]
        %v586 = vld [vmem:[%s330 + $0x18] sm:$0xf]
        %v587 = vld [vmem:[%s330 + $0x1c] sm:$0xf]
        %v588 = vld [vmem:[%s330 + $0x20] sm:$0xf]
        %v589 = vld [vmem:[%s330 + $0x24] sm:$0xf]
        %v590 = vld [vmem:[%s330 + $0x28] sm:$0xf]
        %v591 = vld [vmem:[%s330 + $0x2c] sm:$0xf]
        %v592 = vld [vmem:[%s330 + $0x30] sm:$0xf]
        %v593 = vld [vmem:[%s330 + $0x34] sm:$0xf]
        %v594 = vld [vmem:[%s330 + $0x38] sm:$0xf]
        %v595 = vld [vmem:[%s330 + $0x3c] sm:$0xf]
        %v596 = vld [vmem:[%s1] sm:$0xf]
        %v597 = vld [vmem:[%s1 + $0x4] sm:$0xf]
        %v598 = vld [vmem:[%s1 + $0x8] sm:$0xf]
        %v599 = vld [vmem:[%s1 + $0xc] sm:$0xf]
        %v600 = vld [vmem:[%s1 + $0x10] sm:$0x3]
        %v601 = vld [vmem:[%s2] sm:$0x1]
        %v603 = vlaneseq
        %v604 = vshrl.u32 %v603, 7
        %v605 = vsub.s32 0, %v604
        %v606 = vrot.slane %v601, %v605
        %v624 = vunpack.c.l.b16 %v580
        %v625 = vunpack.c.l.b16 %v581
        %v626 = vunpack.c.l.b16 %v582
        %v627 = vunpack.c.l.b16 %v583
        %v628 = vunpack.c.l.b16 %v584
        %v629 = vunpack.c.l.b16 %v585
        %v630 = vunpack.c.l.b16 %v586
        %v631 = vunpack.c.l.b16 %v587
        %v632 = vunpack.c.l.b16 %v588
        %v633 = vunpack.c.l.b16 %v589
        %v634 = vunpack.c.l.b16 %v590
        %v635 = vunpack.c.l.b16 %v591
        %v636 = vunpack.c.l.b16 %v592
        %v637 = vunpack.c.l.b16 %v593
        %v638 = vunpack.c.l.b16 %v594
        %v639 = vunpack.c.l.b16 %v595
        %v640 = vpack.c.b16 %v625, %v624
        %v641 = vpack.c.b16 %v627, %v626
        %v642 = vpack.c.b16 %v629, %v628
        %v643 = vpack.c.b16 %v631, %v630
        %v644 = vpack.c.b16 %v633, %v632
        %v645 = vpack.c.b16 %v635, %v634
        %v646 = vpack.c.b16 %v637, %v636
        %v647 = vpack.c.b16 %v639, %v638
        %v653 = vunpack.c.l.b16 %v596
        %v654 = vunpack.c.l.b16 %v597
        %v655 = vunpack.c.l.b16 %v598
        %v656 = vunpack.c.l.b16 %v599
        %v657 = vunpack.c.l.b16 %v600
        %v658 = vpack.c.b16 %v654, %v653
        %v659 = vpack.c.b16 %v656, %v655
        %v660 = vpack.c.b16 %v657, %v657
        %vm663 = vcmask 293888
        %v665 = vsel %vm663, %v640, 0
        %v668 = vsel %vm663, %v641, 0
        %v671 = vsel %vm663, %v642, 0
        %v674 = vsel %vm663, %v643, 0
        %v677 = vsel %vm663, %v644, 0
        %v680 = vsel %vm663, %v645, 0
        %v683 = vsel %vm663, %v646, 0
        %v686 = vsel %vm663, %v647, 0
        %vm688 = vcmask 1041408
        %v690 = vsel %vm688, %v660, 0
        %692 = vmatprep.subr.bf16.mxu0 0
        %693 = vmatpush1.bf16.msra.mxu0 %v658
        %694 = vmatprep.subr.bf16.mxu0 0
        %695 = vmatpush1.bf16.msra.mxu0 %v659
        %696 = vmatprep.subr.bf16.mxu0 0
        %697 = vmatpush1.bf16.msra.mxu0 %v690
        %698 = vmatprep.subr.bf16.mxu0 0
        %699 = vmatpush1.bf16.msra.mxu0 0
        %700 = vmatprep.subr.bf16.mxu0 0
        %701 = vmatpush1.bf16.msra.mxu0 0
        %702 = vmatprep.subr.bf16.mxu0 0
        %703 = vmatpush1.bf16.msra.mxu0 0
        %704 = vmatprep.subr.bf16.mxu0 0
        %705 = vmatpush1.bf16.msra.mxu0 0
        %706 = vmatprep.subr.bf16.mxu0 0
        %707 = vmatpush1.bf16.msra.mxu0 0
        %708 = vmatprep.subr.bf16.mxu0 0
        %709 = vmatpush1.bf16.msra.mxu0 0
        %710 = vmatprep.subr.bf16.mxu0 0
        %711 = vmatpush1.bf16.msra.mxu0 0
        %712 = vmatprep.subr.bf16.mxu0 0
        %713 = vmatpush1.bf16.msra.mxu0 0
        %714 = vmatprep.subr.bf16.mxu0 0
        %715 = vmatpush1.bf16.msra.mxu0 0
        %716 = vmatprep.subr.bf16.mxu0 0
        %717 = vmatpush1.bf16.msra.mxu0 0
        %718 = vmatprep.subr.bf16.mxu0 0
        %719 = vmatpush1.bf16.msra.mxu0 0
        %720 = vmatprep.subr.bf16.mxu0 0
        %721 = vmatpush1.bf16.msra.mxu0 0
        %722 = vmatprep.subr.bf16.mxu0 0
        %723 = vmatpush1.bf16.msra.mxu0 0
        %724 = vmatprep.mubr.bf16.mxu0 0
        %725 = vmatmul.mubr.bf16.gmra.mrb[0].mxu0 %v665
        %v726 = vpop.f32.mrb[0].mxu0
        %v727 = vadd.f32 %v606, %v726
        %v728 = vpop.f32.mrb[0].mxu0
        %v729 = vpop.f32.mrb[0].mxu0
        %v730 = vadd.f32 %v606, %v729
        %v731 = vpop.f32.mrb[0].mxu0
        %732 = vmatprep.mubr.bf16.mxu0 0
        %733 = vmatmul.mubr.bf16.gmra.mrb[0].mxu0 %v668
        %v734 = vpop.f32.mrb[0].mxu0
        %v735 = vadd.f32 %v606, %v734
        %v736 = vpop.f32.mrb[0].mxu0
        %v737 = vpop.f32.mrb[0].mxu0
        %v738 = vadd.f32 %v606, %v737
        %v739 = vpop.f32.mrb[0].mxu0
        %740 = vmatprep.mubr.bf16.mxu0 0
        %741 = vmatmul.mubr.bf16.gmra.mrb[0].mxu0 %v671
        %v742 = vpop.f32.mrb[0].mxu0
        %v743 = vadd.f32 %v606, %v742
        %v744 = vpop.f32.mrb[0].mxu0
        %v745 = vpop.f32.mrb[0].mxu0
        %v746 = vadd.f32 %v606, %v745
        %v747 = vpop.f32.mrb[0].mxu0
        %748 = vmatprep.mubr.bf16.mxu0 0
        %749 = vmatmul.mubr.bf16.gmra.mrb[0].mxu0 %v674
        %v750 = vpop.f32.mrb[0].mxu0
        %v751 = vadd.f32 %v606, %v750
        %v752 = vpop.f32.mrb[0].mxu0
        %v753 = vpop.f32.mrb[0].mxu0
        %v754 = vadd.f32 %v606, %v753
        %v755 = vpop.f32.mrb[0].mxu0
        %756 = vmatprep.mubr.bf16.mxu0 0
        %757 = vmatmul.mubr.bf16.gmra.mrb[0].mxu0 %v677
        %v758 = vpop.f32.mrb[0].mxu0
        %v759 = vadd.f32 %v606, %v758
        %v760 = vpop.f32.mrb[0].mxu0
        %v761 = vpop.f32.mrb[0].mxu0
        %v762 = vadd.f32 %v606, %v761
        %v763 = vpop.f32.mrb[0].mxu0
        %764 = vmatprep.mubr.bf16.mxu0 0
        %765 = vmatmul.mubr.bf16.gmra.mrb[0].mxu0 %v680
        %v766 = vpop.f32.mrb[0].mxu0
        %v767 = vadd.f32 %v606, %v766
        %v768 = vpop.f32.mrb[0].mxu0
        %v769 = vpop.f32.mrb[0].mxu0
        %v770 = vadd.f32 %v606, %v769
        %v771 = vpop.f32.mrb[0].mxu0
        %772 = vmatprep.mubr.bf16.mxu0 0
        %773 = vmatmul.mubr.bf16.gmra.mrb[0].mxu0 %v683
        %v774 = vpop.f32.mrb[0].mxu0
        %v775 = vadd.f32 %v606, %v774
        %v776 = vpop.f32.mrb[0].mxu0
        %v777 = vpop.f32.mrb[0].mxu0
        %v778 = vadd.f32 %v606, %v777
        %v779 = vpop.f32.mrb[0].mxu0
        %780 = vmatprep.mubr.bf16.mxu0 0
        %781 = vmatmul.mubr.bf16.gmra.mrb[0].mxu0 %v686
        %v782 = vpop.f32.mrb[0].mxu0
        %v783 = vadd.f32 %v606, %v782
        %v784 = vpop.f32.mrb[0].mxu0
        %v785 = vpop.f32.mrb[0].mxu0
        %v786 = vadd.f32 %v606, %v785
        %v787 = vpop.f32.mrb[0].mxu0
        %788 = vdwg.mxu0
        %v789 = vmul.f32 %v727, 0.5
        %v790 = vmul.f32 %v730, 0.5
        %v791 = vmul.f32 %v735, 0.5
        %v792 = vmul.f32 %v738, 0.5
        %v793 = vmul.f32 %v743, 0.5
        %v794 = vmul.f32 %v746, 0.5
        %v795 = vmul.f32 %v751, 0.5
        %v796 = vmul.f32 %v754, 0.5
        %v797 = vmul.f32 %v759, 0.5
        %v798 = vmul.f32 %v762, 0.5
        %v799 = vmul.f32 %v767, 0.5
        %v800 = vmul.f32 %v770, 0.5
        %v801 = vmul.f32 %v775, 0.5
        %v802 = vmul.f32 %v778, 0.5
        %v803 = vmul.f32 %v783, 0.5
        %v804 = vmul.f32 %v786, 0.5
        %v805 = vmul.f32 %v727, 0.044715
        %v806 = vmul.f32 %v730, 0.044715
        %v807 = vmul.f32 %v735, 0.044715
        %v808 = vmul.f32 %v738, 0.044715
        %v809 = vmul.f32 %v743, 0.044715
        %v810 = vmul.f32 %v746, 0.044715
        %v811 = vmul.f32 %v751, 0.044715
        %v812 = vmul.f32 %v754, 0.044715
        %v813 = vmul.f32 %v759, 0.044715
        %v814 = vmul.f32 %v762, 0.044715
        %v815 = vmul.f32 %v767, 0.044715
        %v816 = vmul.f32 %v770, 0.044715
        %v817 = vmul.f32 %v775, 0.044715
        %v818 = vmul.f32 %v778, 0.044715
        %v819 = vmul.f32 %v783, 0.044715
        %v820 = vmul.f32 %v786, 0.044715
        %v821 = vmul.f32 %v805, %v727
        %v822 = vmul.f32 %v806, %v730
        %v823 = vmul.f32 %v807, %v735
        %v824 = vmul.f32 %v808, %v738
        %v825 = vmul.f32 %v809, %v743
        %v826 = vmul.f32 %v810, %v746
        %v827 = vmul.f32 %v811, %v751
        %v828 = vmul.f32 %v812, %v754
        %v829 = vmul.f32 %v813, %v759
        %v830 = vmul.f32 %v814, %v762
        %v831 = vmul.f32 %v815, %v767
        %v832 = vmul.f32 %v816, %v770
        %v833 = vmul.f32 %v817, %v775
        %v834 = vmul.f32 %v818, %v778
        %v835 = vmul.f32 %v819, %v783
        %v836 = vmul.f32 %v820, %v786
        %v837 = vmul.f32 %v821, %v727
        %v838 = vmul.f32 %v822, %v730
        %v839 = vmul.f32 %v823, %v735
        %v840 = vmul.f32 %v824, %v738
        %v841 = vmul.f32 %v825, %v743
        %v842 = vmul.f32 %v826, %v746
        %v843 = vmul.f32 %v827, %v751
        %v844 = vmul.f32 %v828, %v754
        %v845 = vmul.f32 %v829, %v759
        %v846 = vmul.f32 %v830, %v762
        %v847 = vmul.f32 %v831, %v767
        %v848 = vmul.f32 %v832, %v770
        %v849 = vmul.f32 %v833, %v775
        %v850 = vmul.f32 %v834, %v778
        %v851 = vmul.f32 %v835, %v783
        %v852 = vmul.f32 %v836, %v786
        %v853 = vadd.f32 %v727, %v837
        %v854 = vadd.f32 %v730, %v838
        %v855 = vadd.f32 %v735, %v839
        %v856 = vadd.f32 %v738, %v840
        %v857 = vadd.f32 %v743, %v841
        %v858 = vadd.f32 %v746, %v842
        %v859 = vadd.f32 %v751, %v843
        %v860 = vadd.f32 %v754, %v844
        %v861 = vadd.f32 %v759, %v845
        %v862 = vadd.f32 %v762, %v846
        %v863 = vadd.f32 %v767, %v847
        %v864 = vadd.f32 %v770, %v848
        %v865 = vadd.f32 %v775, %v849
        %v866 = vadd.f32 %v778, %v850
        %v867 = vadd.f32 %v783, %v851
        %v868 = vadd.f32 %v786, %v852
        %v869 = vmul.f32 %v853, 0.7978846
        %v870 = vmul.f32 %v854, 0.7978846
        %v871 = vmul.f32 %v855, 0.7978846
        %v872 = vmul.f32 %v856, 0.7978846
        %v873 = vmul.f32 %v857, 0.7978846
        %v874 = vmul.f32 %v858, 0.7978846
        %v875 = vmul.f32 %v859, 0.7978846
        %v876 = vmul.f32 %v860, 0.7978846
        %v877 = vmul.f32 %v861, 0.7978846
        %v878 = vmul.f32 %v862, 0.7978846
        %v879 = vmul.f32 %v863, 0.7978846
        %v880 = vmul.f32 %v864, 0.7978846
        %v881 = vmul.f32 %v865, 0.7978846
        %v882 = vmul.f32 %v866, 0.7978846
        %v883 = vmul.f32 %v867, 0.7978846
        %v884 = vmul.f32 %v868, 0.7978846
        %v885 = vtanh.pop %v869
        %v886 = vtanh.pop %v870
        %v887 = vtanh.pop %v871
        %v888 = vtanh.pop %v872
        %v889 = vtanh.pop %v873
        %v890 = vtanh.pop %v874
        %v891 = vtanh.pop %v875
        %v892 = vtanh.pop %v876
        %v893 = vtanh.pop %v877
        %v894 = vtanh.pop %v878
        %v895 = vtanh.pop %v879
        %v896 = vtanh.pop %v880
        %v897 = vtanh.pop %v881
        %v898 = vtanh.pop %v882
        %v899 = vtanh.pop %v883
        %v900 = vtanh.pop %v884
        %v901 = vadd.f32 %v885, 1.0
        %v902 = vadd.f32 %v886, 1.0
        %v903 = vadd.f32 %v887, 1.0
        %v904 = vadd.f32 %v888, 1.0
        %v905 = vadd.f32 %v889, 1.0
        %v906 = vadd.f32 %v890, 1.0
        %v907 = vadd.f32 %v891, 1.0
        %v908 = vadd.f32 %v892, 1.0
        %v909 = vadd.f32 %v893, 1.0
        %v910 = vadd.f32 %v894, 1.0
        %v911 = vadd.f32 %v895, 1.0
        %v912 = vadd.f32 %v896, 1.0
        %v913 = vadd.f32 %v897, 1.0
        %v914 = vadd.f32 %v898, 1.0
        %v915 = vadd.f32 %v899, 1.0
        %v916 = vadd.f32 %v900, 1.0
        %v917 = vmul.f32 %v789, %v901
        %v918 = vmul.f32 %v790, %v902
        %v919 = vmul.f32 %v791, %v903
        %v920 = vmul.f32 %v792, %v904
        %v921 = vmul.f32 %v793, %v905
        %v922 = vmul.f32 %v794, %v906
        %v923 = vmul.f32 %v795, %v907
        %v924 = vmul.f32 %v796, %v908
        %v925 = vmul.f32 %v797, %v909
        %v926 = vmul.f32 %v798, %v910
        %v927 = vmul.f32 %v799, %v911
        %v928 = vmul.f32 %v800, %v912
        %v929 = vmul.f32 %v801, %v913
        %v930 = vmul.f32 %v802, %v914
        %v931 = vmul.f32 %v803, %v915
        %v932 = vmul.f32 %v804, %v916
        %v933 = vsel %vm564, 1, 0
        %v934 = vsel %vm565, 1, 0
        %v935 = vsel %vm566, 1, 0
        %v936 = vsel %vm567, 1, 0
        %v937 = vsel %vm568, 1, 0
        %v938 = vsel %vm569, 1, 0
        %v939 = vsel %vm570, 1, 0
        %v940 = vsel %vm571, 1, 0
        %v941 = vsel %vm572, 1, 0
        %v942 = vsel %vm573, 1, 0
        %v943 = vsel %vm574, 1, 0
        %v944 = vsel %vm575, 1, 0
        %v945 = vsel %vm576, 1, 0
        %v946 = vsel %vm577, 1, 0
        %v947 = vsel %vm578, 1, 0
        %v948 = vsel %vm579, 1, 0
        %vm949 = vcmp.eq.s32.totalorder %v933, 1
        %vm950 = vcmp.eq.s32.totalorder %v934, 1
        %vm951 = vcmp.eq.s32.totalorder %v935, 1
        %vm952 = vcmp.eq.s32.totalorder %v936, 1
        %vm953 = vcmp.eq.s32.totalorder %v937, 1
        %vm954 = vcmp.eq.s32.totalorder %v938, 1
        %vm955 = vcmp.eq.s32.totalorder %v939, 1
        %vm956 = vcmp.eq.s32.totalorder %v940, 1
        %vm957 = vcmp.eq.s32.totalorder %v941, 1
        %vm958 = vcmp.eq.s32.totalorder %v942, 1
        %vm959 = vcmp.eq.s32.totalorder %v943, 1
        %vm960 = vcmp.eq.s32.totalorder %v944, 1
        %vm961 = vcmp.eq.s32.totalorder %v945, 1
        %vm962 = vcmp.eq.s32.totalorder %v946, 1
        %vm963 = vcmp.eq.s32.totalorder %v947, 1
        %vm964 = vcmp.eq.s32.totalorder %v948, 1
        %v965 = vsel %vm949, %v917, 0.0
        %v966 = vsel %vm950, %v918, 0.0
        %v967 = vsel %vm951, %v919, 0.0
        %v968 = vsel %vm952, %v920, 0.0
        %v969 = vsel %vm953, %v921, 0.0
        %v970 = vsel %vm954, %v922, 0.0
        %v971 = vsel %vm955, %v923, 0.0
        %v972 = vsel %vm956, %v924, 0.0
        %v973 = vsel %vm957, %v925, 0.0
        %v974 = vsel %vm958, %v926, 0.0
        %v975 = vsel %vm959, %v927, 0.0
        %v976 = vsel %vm960, %v928, 0.0
        %v977 = vsel %vm961, %v929, 0.0
        %v978 = vsel %vm962, %v930, 0.0
        %v979 = vsel %vm963, %v931, 0.0
        %v980 = vsel %vm964, %v932, 0.0
        %981 = vst.msk [vmem:[#allocation2 + $0x11] sm:$0xff] %vm332, %v965
        %982 = vst.msk [vmem:[#allocation2 + $0x19] sm:$0xff] %vm332, %v966
        %983 = vst.msk [vmem:[#allocation2 + $0x21] sm:$0xff] %vm332, %v967
        %984 = vst.msk [vmem:[#allocation2 + $0x29] sm:$0xff] %vm332, %v968
        %985 = vst.msk [vmem:[#allocation2 + $0x31] sm:$0xff] %vm332, %v969
        %986 = vst.msk [vmem:[#allocation2 + $0x39] sm:$0xff] %vm332, %v970
        %987 = vst.msk [vmem:[#allocation2 + $0x41] sm:$0xff] %vm332, %v971
        %988 = vst.msk [vmem:[#allocation2 + $0x49] sm:$0xff] %vm332, %v972
        %989 = vst.msk [vmem:[#allocation2 + $0x51] sm:$0xff] %vm332, %v973
        %990 = vst.msk [vmem:[#allocation2 + $0x59] sm:$0xff] %vm332, %v974
        %991 = vst.msk [vmem:[#allocation2 + $0x61] sm:$0xff] %vm332, %v975
        %992 = vst.msk [vmem:[#allocation2 + $0x69] sm:$0xff] %vm332, %v976
        %993 = vst.msk [vmem:[#allocation2 + $0x71] sm:$0xff] %vm332, %v977
        %994 = vst.msk [vmem:[#allocation2 + $0x79] sm:$0xff] %vm332, %v978
        %995 = vst.msk [vmem:[#allocation2 + $0x81] sm:$0xff] %vm332, %v979
        %996 = vst.msk [vmem:[#allocation2 + $0x89] sm:$0xff] %vm332, %v980
        %v997 = vld [vmem:[#allocation2] sm:$0xff]
        %v998 = vld [vmem:[#allocation2 + $0x8] sm:$0xff]
        %v999 = vld [vmem:[#allocation2 + $0x10] sm:$0xff]
        %v1000 = vld [vmem:[#allocation2 + $0x18] sm:$0xff]
        %v1001 = vld [vmem:[#allocation2 + $0x20] sm:$0xff]
        %v1002 = vld [vmem:[#allocation2 + $0x28] sm:$0xff]
        %v1003 = vld [vmem:[#allocation2 + $0x30] sm:$0xff]
        %v1004 = vld [vmem:[#allocation2 + $0x38] sm:$0xff]
        %v1005 = vld [vmem:[#allocation2 + $0x40] sm:$0xff]
        %v1006 = vld [vmem:[#allocation2 + $0x48] sm:$0xff]
        %v1007 = vld [vmem:[#allocation2 + $0x50] sm:$0xff]
        %v1008 = vld [vmem:[#allocation2 + $0x58] sm:$0xff]
        %v1009 = vld [vmem:[#allocation2 + $0x60] sm:$0xff]
        %v1010 = vld [vmem:[#allocation2 + $0x68] sm:$0xff]
        %v1011 = vld [vmem:[#allocation2 + $0x70] sm:$0xff]
        %v1012 = vld [vmem:[#allocation2 + $0x78] sm:$0xff]
        %v1013 = vld [vmem:[#allocation2 + $0x1] sm:$0xff]
        %v1014 = vld [vmem:[#allocation2 + $0x9] sm:$0xff]
        %v1015 = vld [vmem:[#allocation2 + $0x11] sm:$0xff]
        %v1016 = vld [vmem:[#allocation2 + $0x19] sm:$0xff]
        %v1017 = vld [vmem:[#allocation2 + $0x21] sm:$0xff]
        %v1018 = vld [vmem:[#allocation2 + $0x29] sm:$0xff]
        %v1019 = vld [vmem:[#allocation2 + $0x31] sm:$0xff]
        %v1020 = vld [vmem:[#allocation2 + $0x39] sm:$0xff]
        %v1021 = vld [vmem:[#allocation2 + $0x41] sm:$0xff]
        %v1022 = vld [vmem:[#allocation2 + $0x49] sm:$0xff]
        %v1023 = vld [vmem:[#allocation2 + $0x51] sm:$0xff]
        %v1024 = vld [vmem:[#allocation2 + $0x59] sm:$0xff]
        %v1025 = vld [vmem:[#allocation2 + $0x61] sm:$0xff]
        %v1026 = vld [vmem:[#allocation2 + $0x69] sm:$0xff]
        %v1027 = vld [vmem:[#allocation2 + $0x71] sm:$0xff]
        %v1028 = vld [vmem:[#allocation2 + $0x79] sm:$0xff]
        %v1029 = vld [vmem:[#allocation2 + $0x2] sm:$0xff]
        %v1030 = vld [vmem:[#allocation2 + $0xa] sm:$0xff]
        %v1031 = vld [vmem:[#allocation2 + $0x12] sm:$0xff]
        %v1032 = vld [vmem:[#allocation2 + $0x1a] sm:$0xff]
        %v1033 = vld [vmem:[#allocation2 + $0x22] sm:$0xff]
        %v1034 = vld [vmem:[#allocation2 + $0x2a] sm:$0xff]
        %v1035 = vld [vmem:[#allocation2 + $0x32] sm:$0xff]
        %v1036 = vld [vmem:[#allocation2 + $0x3a] sm:$0xff]
        %v1037 = vld [vmem:[#allocation2 + $0x42] sm:$0xff]
        %v1038 = vld [vmem:[#allocation2 + $0x4a] sm:$0xff]
        %v1039 = vld [vmem:[#allocation2 + $0x52] sm:$0xff]
        %v1040 = vld [vmem:[#allocation2 + $0x5a] sm:$0xff]
        %v1041 = vld [vmem:[#allocation2 + $0x62] sm:$0xff]
        %v1042 = vld [vmem:[#allocation2 + $0x6a] sm:$0xff]
        %v1043 = vld [vmem:[#allocation2 + $0x72] sm:$0xff]
        %v1044 = vld [vmem:[#allocation2 + $0x7a] sm:$0xff]
        %v1045 = vld [vmem:[#allocation2 + $0x80] sm:$0xff]
        %v1046 = vld [vmem:[#allocation2 + $0x88] sm:$0xff]
        %v1047 = vld [vmem:[#allocation2 + $0x81] sm:$0xff]
        %v1048 = vld [vmem:[#allocation2 + $0x89] sm:$0xff]
        %v1049 = vld [vmem:[#allocation2 + $0x82] sm:$0xff]
        %v1050 = vld [vmem:[#allocation2 + $0x8a] sm:$0xff]
        %v1051 = vld [vmem:[#allocation2 + $0x90] sm:$0xff]
        %v1052 = vld [vmem:[#allocation2 + $0x98] sm:$0xff]
        %v1053 = vld [vmem:[#allocation2 + $0x91] sm:$0xff]
        %v1054 = vld [vmem:[#allocation2 + $0x99] sm:$0xff]
        %v1055 = vld [vmem:[#allocation2 + $0x92] sm:$0xff]
        %v1056 = vld [vmem:[#allocation2 + $0x9a] sm:$0xff]
        %1073 = vrot.lane.b32.xlu0 %v1013, 16
        %v1074 = vpop.permute.xlu0 %1073
        %1075 = vrot.lane.b32.xlu0 %v1014, 16
        %v1076 = vpop.permute.xlu0 %1075
        %1077 = vrot.lane.b32.xlu0 %v1015, 16
        %v1078 = vpop.permute.xlu0 %1077
        %1079 = vrot.lane.b32.xlu0 %v1016, 16
        %v1080 = vpop.permute.xlu0 %1079
        %1081 = vrot.lane.b32.xlu0 %v1017, 16
        %v1082 = vpop.permute.xlu0 %1081
        %1083 = vrot.lane.b32.xlu0 %v1018, 16
        %v1084 = vpop.permute.xlu0 %1083
        %1085 = vrot.lane.b32.xlu0 %v1019, 16
        %v1086 = vpop.permute.xlu0 %1085
        %1087 = vrot.lane.b32.xlu0 %v1020, 16
        %v1088 = vpop.permute.xlu0 %1087
        %1089 = vrot.lane.b32.xlu0 %v1021, 16
        %v1090 = vpop.permute.xlu0 %1089
        %1091 = vrot.lane.b32.xlu0 %v1022, 16
        %v1092 = vpop.permute.xlu0 %1091
        %1093 = vrot.lane.b32.xlu0 %v1023, 16
        %v1094 = vpop.permute.xlu0 %1093
        %1095 = vrot.lane.b32.xlu0 %v1024, 16
        %v1096 = vpop.permute.xlu0 %1095
        %1097 = vrot.lane.b32.xlu0 %v1025, 16
        %v1098 = vpop.permute.xlu0 %1097
        %1099 = vrot.lane.b32.xlu0 %v1026, 16
        %v1100 = vpop.permute.xlu0 %1099
        %1101 = vrot.lane.b32.xlu0 %v1027, 16
        %v1102 = vpop.permute.xlu0 %1101
        %1103 = vrot.lane.b32.xlu0 %v1028, 16
        %v1104 = vpop.permute.xlu0 %1103
        %1137 = vrot.lane.b32.xlu0 %v1029, 32
        %v1138 = vpop.permute.xlu0 %1137
        %1139 = vrot.lane.b32.xlu0 %v1030, 32
        %v1140 = vpop.permute.xlu0 %1139
        %1141 = vrot.lane.b32.xlu0 %v1031, 32
        %v1142 = vpop.permute.xlu0 %1141
        %1143 = vrot.lane.b32.xlu0 %v1032, 32
        %v1144 = vpop.permute.xlu0 %1143
        %1145 = vrot.lane.b32.xlu0 %v1033, 32
        %v1146 = vpop.permute.xlu0 %1145
        %1147 = vrot.lane.b32.xlu0 %v1034, 32
        %v1148 = vpop.permute.xlu0 %1147
        %1149 = vrot.lane.b32.xlu0 %v1035, 32
        %v1150 = vpop.permute.xlu0 %1149
        %1151 = vrot.lane.b32.xlu0 %v1036, 32
        %v1152 = vpop.permute.xlu0 %1151
        %1153 = vrot.lane.b32.xlu0 %v1037, 32
        %v1154 = vpop.permute.xlu0 %1153
        %1155 = vrot.lane.b32.xlu0 %v1038, 32
        %v1156 = vpop.permute.xlu0 %1155
        %1157 = vrot.lane.b32.xlu0 %v1039, 32
        %v1158 = vpop.permute.xlu0 %1157
        %1159 = vrot.lane.b32.xlu0 %v1040, 32
        %v1160 = vpop.permute.xlu0 %1159
        %1161 = vrot.lane.b32.xlu0 %v1041, 32
        %v1162 = vpop.permute.xlu0 %1161
        %1163 = vrot.lane.b32.xlu0 %v1042, 32
        %v1164 = vpop.permute.xlu0 %1163
        %1165 = vrot.lane.b32.xlu0 %v1043, 32
        %v1166 = vpop.permute.xlu0 %1165
        %1167 = vrot.lane.b32.xlu0 %v1044, 32
        %v1168 = vpop.permute.xlu0 %1167
        %1201 = vrot.lane.b32.xlu0 %v999, 48
        %v1202 = vpop.permute.xlu0 %1201
        %1203 = vrot.lane.b32.xlu0 %v1000, 48
        %v1204 = vpop.permute.xlu0 %1203
        %1205 = vrot.lane.b32.xlu0 %v1001, 48
        %v1206 = vpop.permute.xlu0 %1205
        %1207 = vrot.lane.b32.xlu0 %v1002, 48
        %v1208 = vpop.permute.xlu0 %1207
        %1209 = vrot.lane.b32.xlu0 %v1003, 48
        %v1210 = vpop.permute.xlu0 %1209
        %1211 = vrot.lane.b32.xlu0 %v1004, 48
        %v1212 = vpop.permute.xlu0 %1211
        %1213 = vrot.lane.b32.xlu0 %v1005, 48
        %v1214 = vpop.permute.xlu0 %1213
        %1215 = vrot.lane.b32.xlu0 %v1006, 48
        %v1216 = vpop.permute.xlu0 %1215
        %1217 = vrot.lane.b32.xlu0 %v1007, 48
        %v1218 = vpop.permute.xlu0 %1217
        %1219 = vrot.lane.b32.xlu0 %v1008, 48
        %v1220 = vpop.permute.xlu0 %1219
        %1221 = vrot.lane.b32.xlu0 %v1009, 48
        %v1222 = vpop.permute.xlu0 %1221
        %1223 = vrot.lane.b32.xlu0 %v1010, 48
        %v1224 = vpop.permute.xlu0 %1223
        %1225 = vrot.lane.b32.xlu0 %v1011, 48
        %v1226 = vpop.permute.xlu0 %1225
        %1227 = vrot.lane.b32.xlu0 %v1012, 48
        %v1228 = vpop.permute.xlu0 %1227
        %1229 = vrot.lane.b32.xlu0 %v1045, 48
        %v1230 = vpop.permute.xlu0 %1229
        %1231 = vrot.lane.b32.xlu0 %v1046, 48
        %v1232 = vpop.permute.xlu0 %1231
        %1251 = vrot.lane.b32.xlu0 %v1015, 64
        %v1252 = vpop.permute.xlu0 %1251
        %1253 = vrot.lane.b32.xlu0 %v1016, 64
        %v1254 = vpop.permute.xlu0 %1253
        %1255 = vrot.lane.b32.xlu0 %v1017, 64
        %v1256 = vpop.permute.xlu0 %1255
        %1257 = vrot.lane.b32.xlu0 %v1018, 64
        %v1258 = vpop.permute.xlu0 %1257
        %1259 = vrot.lane.b32.xlu0 %v1019, 64
        %v1260 = vpop.permute.xlu0 %1259
        %1261 = vrot.lane.b32.xlu0 %v1020, 64
        %v1262 = vpop.permute.xlu0 %1261
        %1263 = vrot.lane.b32.xlu0 %v1021, 64
        %v1264 = vpop.permute.xlu0 %1263
        %1265 = vrot.lane.b32.xlu0 %v1022, 64
        %v1266 = vpop.permute.xlu0 %1265
        %1267 = vrot.lane.b32.xlu0 %v1023, 64
        %v1268 = vpop.permute.xlu0 %1267
        %1269 = vrot.lane.b32.xlu0 %v1024, 64
        %v1270 = vpop.permute.xlu0 %1269
        %1271 = vrot.lane.b32.xlu0 %v1025, 64
        %v1272 = vpop.permute.xlu0 %1271
        %1273 = vrot.lane.b32.xlu0 %v1026, 64
        %v1274 = vpop.permute.xlu0 %1273
        %1275 = vrot.lane.b32.xlu0 %v1027, 64
        %v1276 = vpop.permute.xlu0 %1275
        %1277 = vrot.lane.b32.xlu0 %v1028, 64
        %v1278 = vpop.permute.xlu0 %1277
        %1279 = vrot.lane.b32.xlu0 %v1047, 64
        %v1280 = vpop.permute.xlu0 %1279
        %1281 = vrot.lane.b32.xlu0 %v1048, 64
        %v1282 = vpop.permute.xlu0 %1281
        %1301 = vrot.lane.b32.xlu0 %v1031, 80
        %v1302 = vpop.permute.xlu0 %1301
        %1303 = vrot.lane.b32.xlu0 %v1032, 80
        %v1304 = vpop.permute.xlu0 %1303
        %1305 = vrot.lane.b32.xlu0 %v1033, 80
        %v1306 = vpop.permute.xlu0 %1305
        %1307 = vrot.lane.b32.xlu0 %v1034, 80
        %v1308 = vpop.permute.xlu0 %1307
        %1309 = vrot.lane.b32.xlu0 %v1035, 80
        %v1310 = vpop.permute.xlu0 %1309
        %1311 = vrot.lane.b32.xlu0 %v1036, 80
        %v1312 = vpop.permute.xlu0 %1311
        %1313 = vrot.lane.b32.xlu0 %v1037, 80
        %v1314 = vpop.permute.xlu0 %1313
        %1315 = vrot.lane.b32.xlu0 %v1038, 80
        %v1316 = vpop.permute.xlu0 %1315
        %1317 = vrot.lane.b32.xlu0 %v1039, 80
        %v1318 = vpop.permute.xlu0 %1317
        %1319 = vrot.lane.b32.xlu0 %v1040, 80
        %v1320 = vpop.permute.xlu0 %1319
        %1321 = vrot.lane.b32.xlu0 %v1041, 80
        %v1322 = vpop.permute.xlu0 %1321
        %1323 = vrot.lane.b32.xlu0 %v1042, 80
        %v1324 = vpop.permute.xlu0 %1323
        %1325 = vrot.lane.b32.xlu0 %v1043, 80
        %v1326 = vpop.permute.xlu0 %1325
        %1327 = vrot.lane.b32.xlu0 %v1044, 80
        %v1328 = vpop.permute.xlu0 %1327
        %1329 = vrot.lane.b32.xlu0 %v1049, 80
        %v1330 = vpop.permute.xlu0 %1329
        %1331 = vrot.lane.b32.xlu0 %v1050, 80
        %v1332 = vpop.permute.xlu0 %1331
        %1351 = vrot.lane.b32.xlu0 %v1001, 96
        %v1352 = vpop.permute.xlu0 %1351
        %1353 = vrot.lane.b32.xlu0 %v1002, 96
        %v1354 = vpop.permute.xlu0 %1353
        %1355 = vrot.lane.b32.xlu0 %v1003, 96
        %v1356 = vpop.permute.xlu0 %1355
        %1357 = vrot.lane.b32.xlu0 %v1004, 96
        %v1358 = vpop.permute.xlu0 %1357
        %1359 = vrot.lane.b32.xlu0 %v1005, 96
        %v1360 = vpop.permute.xlu0 %1359
        %1361 = vrot.lane.b32.xlu0 %v1006, 96
        %v1362 = vpop.permute.xlu0 %1361
        %1363 = vrot.lane.b32.xlu0 %v1007, 96
        %v1364 = vpop.permute.xlu0 %1363
        %1365 = vrot.lane.b32.xlu0 %v1008, 96
        %v1366 = vpop.permute.xlu0 %1365
        %1367 = vrot.lane.b32.xlu0 %v1009, 96
        %v1368 = vpop.permute.xlu0 %1367
        %1369 = vrot.lane.b32.xlu0 %v1010, 96
        %v1370 = vpop.permute.xlu0 %1369
        %1371 = vrot.lane.b32.xlu0 %v1011, 96
        %v1372 = vpop.permute.xlu0 %1371
        %1373 = vrot.lane.b32.xlu0 %v1012, 96
        %v1374 = vpop.permute.xlu0 %1373
        %1375 = vrot.lane.b32.xlu0 %v1045, 96
        %v1376 = vpop.permute.xlu0 %1375
        %1377 = vrot.lane.b32.xlu0 %v1046, 96
        %v1378 = vpop.permute.xlu0 %1377
        %1379 = vrot.lane.b32.xlu0 %v1051, 96
        %v1380 = vpop.permute.xlu0 %1379
        %1381 = vrot.lane.b32.xlu0 %v1052, 96
        %v1382 = vpop.permute.xlu0 %1381
        %1401 = vrot.lane.b32.xlu0 %v1017, 112
        %v1402 = vpop.permute.xlu0 %1401
        %1403 = vrot.lane.b32.xlu0 %v1018, 112
        %v1404 = vpop.permute.xlu0 %1403
        %1405 = vrot.lane.b32.xlu0 %v1019, 112
        %v1406 = vpop.permute.xlu0 %1405
        %1407 = vrot.lane.b32.xlu0 %v1020, 112
        %v1408 = vpop.permute.xlu0 %1407
        %1409 = vrot.lane.b32.xlu0 %v1021, 112
        %v1410 = vpop.permute.xlu0 %1409
        %1411 = vrot.lane.b32.xlu0 %v1022, 112
        %v1412 = vpop.permute.xlu0 %1411
        %1413 = vrot.lane.b32.xlu0 %v1023, 112
        %v1414 = vpop.permute.xlu0 %1413
        %1415 = vrot.lane.b32.xlu0 %v1024, 112
        %v1416 = vpop.permute.xlu0 %1415
        %1417 = vrot.lane.b32.xlu0 %v1025, 112
        %v1418 = vpop.permute.xlu0 %1417
        %1419 = vrot.lane.b32.xlu0 %v1026, 112
        %v1420 = vpop.permute.xlu0 %1419
        %1421 = vrot.lane.b32.xlu0 %v1027, 112
        %v1422 = vpop.permute.xlu0 %1421
        %1423 = vrot.lane.b32.xlu0 %v1028, 112
        %v1424 = vpop.permute.xlu0 %1423
        %1425 = vrot.lane.b32.xlu0 %v1047, 112
        %v1426 = vpop.permute.xlu0 %1425
        %1427 = vrot.lane.b32.xlu0 %v1048, 112
        %v1428 = vpop.permute.xlu0 %1427
        %1429 = vrot.lane.b32.xlu0 %v1053, 112
        %v1430 = vpop.permute.xlu0 %1429
        %1431 = vrot.lane.b32.xlu0 %v1054, 112
        %v1432 = vpop.permute.xlu0 %1431
        %v1449 = vsel %vm332, %v997, %v1074
        %v1450 = vsel %vm332, %v998, %v1076
        %v1451 = vsel %vm332, %v999, %v1078
        %v1452 = vsel %vm332, %v1000, %v1080
        %v1453 = vsel %vm332, %v1001, %v1082
        %v1454 = vsel %vm332, %v1002, %v1084
        %v1455 = vsel %vm332, %v1003, %v1086
        %v1456 = vsel %vm332, %v1004, %v1088
        %v1457 = vsel %vm332, %v1005, %v1090
        %v1458 = vsel %vm332, %v1006, %v1092
        %v1459 = vsel %vm332, %v1007, %v1094
        %v1460 = vsel %vm332, %v1008, %v1096
        %v1461 = vsel %vm332, %v1009, %v1098
        %v1462 = vsel %vm332, %v1010, %v1100
        %v1463 = vsel %vm332, %v1011, %v1102
        %v1464 = vsel %vm332, %v1012, %v1104
        %vm1465 = vcmask 261120
        %v1466 = vsel %vm1465, %v1449, %v1138
        %v1467 = vsel %vm1465, %v1450, %v1140
        %v1468 = vsel %vm1465, %v1451, %v1142
        %v1469 = vsel %vm1465, %v1452, %v1144
        %v1470 = vsel %vm1465, %v1453, %v1146
        %v1471 = vsel %vm1465, %v1454, %v1148
        %v1472 = vsel %vm1465, %v1455, %v1150
        %v1473 = vsel %vm1465, %v1456, %v1152
        %v1474 = vsel %vm1465, %v1457, %v1154
        %v1475 = vsel %vm1465, %v1458, %v1156
        %v1476 = vsel %vm1465, %v1459, %v1158
        %v1477 = vsel %vm1465, %v1460, %v1160
        %v1478 = vsel %vm1465, %v1461, %v1162
        %v1479 = vsel %vm1465, %v1462, %v1164
        %v1480 = vsel %vm1465, %v1463, %v1166
        %v1481 = vsel %vm1465, %v1464, %v1168
        %vm1482 = vcmask 392192
        %v1483 = vsel %vm1482, %v1466, %v1202
        %v1484 = vsel %vm1482, %v1467, %v1204
        %v1485 = vsel %vm1482, %v1468, %v1206
        %v1486 = vsel %vm1482, %v1469, %v1208
        %v1487 = vsel %vm1482, %v1470, %v1210
        %v1488 = vsel %vm1482, %v1471, %v1212
        %v1489 = vsel %vm1482, %v1472, %v1214
        %v1490 = vsel %vm1482, %v1473, %v1216
        %v1491 = vsel %vm1482, %v1474, %v1218
        %v1492 = vsel %vm1482, %v1475, %v1220
        %v1493 = vsel %vm1482, %v1476, %v1222
        %v1494 = vsel %vm1482, %v1477, %v1224
        %v1495 = vsel %vm1482, %v1478, %v1226
        %v1496 = vsel %vm1482, %v1479, %v1228
        %v1497 = vsel %vm1482, %v1480, %v1230
        %v1498 = vsel %vm1482, %v1481, %v1232
        %vm1499 = vcmask 523264
        %v1500 = vsel %vm1499, %v1483, %v1252
        %v1501 = vsel %vm1499, %v1484, %v1254
        %v1502 = vsel %vm1499, %v1485, %v1256
        %v1503 = vsel %vm1499, %v1486, %v1258
        %v1504 = vsel %vm1499, %v1487, %v1260
        %v1505 = vsel %vm1499, %v1488, %v1262
        %v1506 = vsel %vm1499, %v1489, %v1264
        %v1507 = vsel %vm1499, %v1490, %v1266
        %v1508 = vsel %vm1499, %v1491, %v1268
        %v1509 = vsel %vm1499, %v1492, %v1270
        %v1510 = vsel %vm1499, %v1493, %v1272
        %v1511 = vsel %vm1499, %v1494, %v1274
        %v1512 = vsel %vm1499, %v1495, %v1276
        %v1513 = vsel %vm1499, %v1496, %v1278
        %v1514 = vsel %vm1499, %v1497, %v1280
        %v1515 = vsel %vm1499, %v1498, %v1282
        %vm1516 = vcmask 654336
        %v1517 = vsel %vm1516, %v1500, %v1302
        %v1518 = vsel %vm1516, %v1501, %v1304
        %v1519 = vsel %vm1516, %v1502, %v1306
        %v1520 = vsel %vm1516, %v1503, %v1308
        %v1521 = vsel %vm1516, %v1504, %v1310
        %v1522 = vsel %vm1516, %v1505, %v1312
        %v1523 = vsel %vm1516, %v1506, %v1314
        %v1524 = vsel %vm1516, %v1507, %v1316
        %v1525 = vsel %vm1516, %v1508, %v1318
        %v1526 = vsel %vm1516, %v1509, %v1320
        %v1527 = vsel %vm1516, %v1510, %v1322
        %v1528 = vsel %vm1516, %v1511, %v1324
        %v1529 = vsel %vm1516, %v1512, %v1326
        %v1530 = vsel %vm1516, %v1513, %v1328
        %v1531 = vsel %vm1516, %v1514, %v1330
        %v1532 = vsel %vm1516, %v1515, %v1332
        %vm1533 = vcmask 785408
        %v1534 = vsel %vm1533, %v1517, %v1352
        %v1535 = vsel %vm1533, %v1518, %v1354
        %v1536 = vsel %vm1533, %v1519, %v1356
        %v1537 = vsel %vm1533, %v1520, %v1358
        %v1538 = vsel %vm1533, %v1521, %v1360
        %v1539 = vsel %vm1533, %v1522, %v1362
        %v1540 = vsel %vm1533, %v1523, %v1364
        %v1541 = vsel %vm1533, %v1524, %v1366
        %v1542 = vsel %vm1533, %v1525, %v1368
        %v1543 = vsel %vm1533, %v1526, %v1370
        %v1544 = vsel %vm1533, %v1527, %v1372
        %v1545 = vsel %vm1533, %v1528, %v1374
        %v1546 = vsel %vm1533, %v1529, %v1376
        %v1547 = vsel %vm1533, %v1530, %v1378
        %v1548 = vsel %vm1533, %v1531, %v1380
        %v1549 = vsel %vm1533, %v1532, %v1382
        %vm1550 = vcmask 916480
        %v1551 = vsel %vm1550, %v1534, %v1402
        %v1552 = vsel %vm1550, %v1535, %v1404
        %v1553 = vsel %vm1550, %v1536, %v1406
        %v1554 = vsel %vm1550, %v1537, %v1408
        %v1555 = vsel %vm1550, %v1538, %v1410
        %v1556 = vsel %vm1550, %v1539, %v1412
        %v1557 = vsel %vm1550, %v1540, %v1414
        %v1558 = vsel %vm1550, %v1541, %v1416
        %v1559 = vsel %vm1550, %v1542, %v1418
        %v1560 = vsel %vm1550, %v1543, %v1420
        %v1561 = vsel %vm1550, %v1544, %v1422
        %v1562 = vsel %vm1550, %v1545, %v1424
        %v1563 = vsel %vm1550, %v1546, %v1426
        %v1564 = vsel %vm1550, %v1547, %v1428
        %v1565 = vsel %vm1550, %v1548, %v1430
        %v1566 = vsel %vm1550, %v1549, %v1432
        %v1567 = vpack.c.bf16 %v1552, %v1551
        %v1568 = vpack.c.bf16 %v1034, %v1033
        %v1569 = vpack.c.bf16 %v1554, %v1553
        %v1570 = vpack.c.bf16 %v1036, %v1035
        %v1571 = vpack.c.bf16 %v1556, %v1555
        %v1572 = vpack.c.bf16 %v1038, %v1037
        %v1573 = vpack.c.bf16 %v1558, %v1557
        %v1574 = vpack.c.bf16 %v1040, %v1039
        %v1575 = vpack.c.bf16 %v1560, %v1559
        %v1576 = vpack.c.bf16 %v1042, %v1041
        %v1577 = vpack.c.bf16 %v1562, %v1561
        %v1578 = vpack.c.bf16 %v1044, %v1043
        %v1579 = vpack.c.bf16 %v1564, %v1563
        %v1580 = vpack.c.bf16 %v1050, %v1049
        %v1581 = vpack.c.bf16 %v1566, %v1565
        %v1582 = vpack.c.bf16 %v1056, %v1055
        %v1583 = vld [vmem:[%s3] sm:$0xf]
        %v1584 = vld [vmem:[%s3 + $0x4] sm:$0xf]
        %v1585 = vld [vmem:[%s3 + $0x8] sm:$0xf]
        %v1586 = vld [vmem:[%s3 + $0xc] sm:$0xf]
        %v1587 = vld [vmem:[%s3 + $0x10] sm:$0xf]
        %v1588 = vld [vmem:[%s3 + $0x14] sm:$0xf]
        %v1589 = vld [vmem:[%s3 + $0x18] sm:$0xf]
        %v1590 = vld [vmem:[%s3 + $0x1c] sm:$0xf]
        %v1591 = vld [vmem:[%s3 + $0x20] sm:$0xf]
        %v1592 = vld [vmem:[%s3 + $0x24] sm:$0xf]
        %v1593 = vld [vmem:[%s3 + $0x28] sm:$0xf]
        %v1594 = vld [vmem:[%s3 + $0x2c] sm:$0xf]
        %v1595 = vld [vmem:[%s3 + $0x30] sm:$0xf]
        %v1596 = vld [vmem:[%s3 + $0x34] sm:$0xf]
        %v1597 = vld [vmem:[%s3 + $0x38] sm:$0xf]
        %v1598 = vld [vmem:[%s3 + $0x3c] sm:$0xf]
        %v1599 = vld [vmem:[%s3 + $0x40] sm:$0xf]
        %v1600 = vld [vmem:[%s3 + $0x44] sm:$0xf]
        %v1601 = vld [vmem:[%s4] sm:$0x1]
        %v1603 = vlaneseq
        %v1604 = vshrl.u32 %v1603, 7
        %v1605 = vsub.s32 0, %v1604
        %v1606 = vrot.slane %v1601, %v1605
        %v1626 = vunpack.c.l.b16 %v1583
        %v1627 = vunpack.c.l.b16 %v1584
        %v1628 = vunpack.c.l.b16 %v1585
        %v1629 = vunpack.c.l.b16 %v1586
        %v1630 = vunpack.c.l.b16 %v1587
        %v1631 = vunpack.c.l.b16 %v1588
        %v1632 = vunpack.c.l.b16 %v1589
        %v1633 = vunpack.c.l.b16 %v1590
        %v1634 = vunpack.c.l.b16 %v1591
        %v1635 = vunpack.c.l.b16 %v1592
        %v1636 = vunpack.c.l.b16 %v1593
        %v1637 = vunpack.c.l.b16 %v1594
        %v1638 = vunpack.c.l.b16 %v1595
        %v1639 = vunpack.c.l.b16 %v1596
        %v1640 = vunpack.c.l.b16 %v1597
        %v1641 = vunpack.c.l.b16 %v1598
        %v1642 = vunpack.c.l.b16 %v1599
        %v1643 = vunpack.c.l.b16 %v1600
        %v1644 = vpack.c.b16 %v1627, %v1626
        %v1645 = vpack.c.b16 %v1629, %v1628
        %v1646 = vpack.c.b16 %v1631, %v1630
        %v1647 = vpack.c.b16 %v1633, %v1632
        %v1648 = vpack.c.b16 %v1635, %v1634
        %v1649 = vpack.c.b16 %v1637, %v1636
        %v1650 = vpack.c.b16 %v1639, %v1638
        %v1651 = vpack.c.b16 %v1641, %v1640
        %v1652 = vpack.c.b16 %v1643, %v1642
        %v1663 = vsel %vm332, %v1568, 0
        %v1666 = vsel %vm332, %v1570, 0
        %v1669 = vsel %vm332, %v1572, 0
        %v1672 = vsel %vm332, %v1574, 0
        %v1675 = vsel %vm332, %v1576, 0
        %v1678 = vsel %vm332, %v1578, 0
        %v1681 = vsel %vm332, %v1580, 0
        %v1684 = vsel %vm332, %v1582, 0
        %1686 = vmatprep.subr.bf16.mxu0 0
        %1687 = vmatpush1.bf16.msra.mxu0 %v1644
        %1688 = vmatprep.subr.bf16.mxu0 0
        %1689 = vmatpush1.bf16.msra.mxu0 %v1645
        %1690 = vmatprep.subr.bf16.mxu0 0
        %1691 = vmatpush1.bf16.msra.mxu0 %v1646
        %1692 = vmatprep.subr.bf16.mxu0 0
        %1693 = vmatpush1.bf16.msra.mxu0 %v1647
        %1694 = vmatprep.subr.bf16.mxu0 0
        %1695 = vmatpush1.bf16.msra.mxu0 %v1648
        %1696 = vmatprep.subr.bf16.mxu0 0
        %1697 = vmatpush1.bf16.msra.mxu0 %v1649
        %1698 = vmatprep.subr.bf16.mxu0 0
        %1699 = vmatpush1.bf16.msra.mxu0 %v1650
        %1700 = vmatprep.subr.bf16.mxu0 0
        %1701 = vmatpush1.bf16.msra.mxu0 %v1651
        %1702 = vmatprep.subr.bf16.mxu0 0
        %1703 = vmatpush1.bf16.msra.mxu0 %v1652
        %1704 = vmatprep.subr.bf16.mxu0 0
        %1705 = vmatpush1.bf16.msra.mxu0 0
        %1706 = vmatprep.subr.bf16.mxu0 0
        %1707 = vmatpush1.bf16.msra.mxu0 0
        %1708 = vmatprep.subr.bf16.mxu0 0
        %1709 = vmatpush1.bf16.msra.mxu0 0
        %1710 = vmatprep.subr.bf16.mxu0 0
        %1711 = vmatpush1.bf16.msra.mxu0 0
        %1712 = vmatprep.subr.bf16.mxu0 0
        %1713 = vmatpush1.bf16.msra.mxu0 0
        %1714 = vmatprep.subr.bf16.mxu0 0
        %1715 = vmatpush1.bf16.msra.mxu0 0
        %1716 = vmatprep.subr.bf16.mxu0 0
        %1717 = vmatpush1.bf16.msra.mxu0 0
        %1718 = vmatprep.mubr.bf16.mxu0 %v1663
        %1719 = vmatmul.mubr.bf16.gmra.mrb[0].mxu0 %v1567
        %v1720 = vpop.f32.mrb[0].mxu0
        %v1721 = vadd.f32 %v1606, %v1720
        %v1722 = vpop.f32.mrb[0].mxu0
        %v1723 = vpop.f32.mrb[0].mxu0
        %v1724 = vadd.f32 %v1606, %v1723
        %v1725 = vpop.f32.mrb[0].mxu0
        %1726 = vmatprep.mubr.bf16.mxu0 %v1666
        %1727 = vmatmul.mubr.bf16.gmra.mrb[0].mxu0 %v1569
        %v1728 = vpop.f32.mrb[0].mxu0
        %v1729 = vadd.f32 %v1606, %v1728
        %v1730 = vpop.f32.mrb[0].mxu0
        %v1731 = vpop.f32.mrb[0].mxu0
        %v1732 = vadd.f32 %v1606, %v1731
        %v1733 = vpop.f32.mrb[0].mxu0
        %1734 = vmatprep.mubr.bf16.mxu0 %v1669
        %1735 = vmatmul.mubr.bf16.gmra.mrb[0].mxu0 %v1571
        %v1736 = vpop.f32.mrb[0].mxu0
        %v1737 = vadd.f32 %v1606, %v1736
        %v1738 = vpop.f32.mrb[0].mxu0
        %v1739 = vpop.f32.mrb[0].mxu0
        %v1740 = vadd.f32 %v1606, %v1739
        %v1741 = vpop.f32.mrb[0].mxu0
        %1742 = vmatprep.mubr.bf16.mxu0 %v1672
        %1743 = vmatmul.mubr.bf16.gmra.mrb[0].mxu0 %v1573
        %v1744 = vpop.f32.mrb[0].mxu0
        %v1745 = vadd.f32 %v1606, %v1744
        %v1746 = vpop.f32.mrb[0].mxu0
        %v1747 = vpop.f32.mrb[0].mxu0
        %v1748 = vadd.f32 %v1606, %v1747
        %v1749 = vpop.f32.mrb[0].mxu0
        %1750 = vmatprep.mubr.bf16.mxu0 %v1675
        %1751 = vmatmul.mubr.bf16.gmra.mrb[0].mxu0 %v1575
        %v1752 = vpop.f32.mrb[0].mxu0
        %v1753 = vadd.f32 %v1606, %v1752
        %v1754 = vpop.f32.mrb[0].mxu0
        %v1755 = vpop.f32.mrb[0].mxu0
        %v1756 = vadd.f32 %v1606, %v1755
        %v1757 = vpop.f32.mrb[0].mxu0
        %1758 = vmatprep.mubr.bf16.mxu0 %v1678
        %1759 = vmatmul.mubr.bf16.gmra.mrb[0].mxu0 %v1577
        %v1760 = vpop.f32.mrb[0].mxu0
        %v1761 = vadd.f32 %v1606, %v1760
        %v1762 = vpop.f32.mrb[0].mxu0
        %v1763 = vpop.f32.mrb[0].mxu0
        %v1764 = vadd.f32 %v1606, %v1763
        %v1765 = vpop.f32.mrb[0].mxu0
        %1766 = vmatprep.mubr.bf16.mxu0 %v1681
        %1767 = vmatmul.mubr.bf16.gmra.mrb[0].mxu0 %v1579
        %v1768 = vpop.f32.mrb[0].mxu0
        %v1769 = vadd.f32 %v1606, %v1768
        %v1770 = vpop.f32.mrb[0].mxu0
        %v1771 = vpop.f32.mrb[0].mxu0
        %v1772 = vadd.f32 %v1606, %v1771
        %v1773 = vpop.f32.mrb[0].mxu0
        %1774 = vmatprep.mubr.bf16.mxu0 %v1684
        %1775 = vmatmul.mubr.bf16.gmra.mrb[0].mxu0 %v1581
        %v1776 = vpop.f32.mrb[0].mxu0
        %v1777 = vadd.f32 %v1606, %v1776
        %v1778 = vpop.f32.mrb[0].mxu0
        %v1779 = vpop.f32.mrb[0].mxu0
        %v1780 = vadd.f32 %v1606, %v1779
        %v1781 = vpop.f32.mrb[0].mxu0
        %1782 = vdwg.mxu0
        %v1783 = vmul.f32 %v1721, 0.5
        %v1784 = vmul.f32 %v1724, 0.5
        %v1785 = vmul.f32 %v1729, 0.5
        %v1786 = vmul.f32 %v1732, 0.5
        %v1787 = vmul.f32 %v1737, 0.5
        %v1788 = vmul.f32 %v1740, 0.5
        %v1789 = vmul.f32 %v1745, 0.5
        %v1790 = vmul.f32 %v1748, 0.5
        %v1791 = vmul.f32 %v1753, 0.5
        %v1792 = vmul.f32 %v1756, 0.5
        %v1793 = vmul.f32 %v1761, 0.5
        %v1794 = vmul.f32 %v1764, 0.5
        %v1795 = vmul.f32 %v1769, 0.5
        %v1796 = vmul.f32 %v1772, 0.5
        %v1797 = vmul.f32 %v1777, 0.5
        %v1798 = vmul.f32 %v1780, 0.5
        %v1799 = vmul.f32 %v1721, 0.044715
        %v1800 = vmul.f32 %v1724, 0.044715
        %v1801 = vmul.f32 %v1729, 0.044715
        %v1802 = vmul.f32 %v1732, 0.044715
        %v1803 = vmul.f32 %v1737, 0.044715
        %v1804 = vmul.f32 %v1740, 0.044715
        %v1805 = vmul.f32 %v1745, 0.044715
        %v1806 = vmul.f32 %v1748, 0.044715
        %v1807 = vmul.f32 %v1753, 0.044715
        %v1808 = vmul.f32 %v1756, 0.044715
        %v1809 = vmul.f32 %v1761, 0.044715
        %v1810 = vmul.f32 %v1764, 0.044715
        %v1811 = vmul.f32 %v1769, 0.044715
        %v1812 = vmul.f32 %v1772, 0.044715
        %v1813 = vmul.f32 %v1777, 0.044715
        %v1814 = vmul.f32 %v1780, 0.044715
        %v1815 = vmul.f32 %v1799, %v1721
        %v1816 = vmul.f32 %v1800, %v1724
        %v1817 = vmul.f32 %v1801, %v1729
        %v1818 = vmul.f32 %v1802, %v1732
        %v1819 = vmul.f32 %v1803, %v1737
        %v1820 = vmul.f32 %v1804, %v1740
        %v1821 = vmul.f32 %v1805, %v1745
        %v1822 = vmul.f32 %v1806, %v1748
        %v1823 = vmul.f32 %v1807, %v1753
        %v1824 = vmul.f32 %v1808, %v1756
        %v1825 = vmul.f32 %v1809, %v1761
        %v1826 = vmul.f32 %v1810, %v1764
        %v1827 = vmul.f32 %v1811, %v1769
        %v1828 = vmul.f32 %v1812, %v1772
        %v1829 = vmul.f32 %v1813, %v1777
        %v1830 = vmul.f32 %v1814, %v1780
        %v1831 = vmul.f32 %v1815, %v1721
        %v1832 = vmul.f32 %v1816, %v1724
        %v1833 = vmul.f32 %v1817, %v1729
        %v1834 = vmul.f32 %v1818, %v1732
        %v1835 = vmul.f32 %v1819, %v1737
        %v1836 = vmul.f32 %v1820, %v1740
        %v1837 = vmul.f32 %v1821, %v1745
        %v1838 = vmul.f32 %v1822, %v1748
        %v1839 = vmul.f32 %v1823, %v1753
        %v1840 = vmul.f32 %v1824, %v1756
        %v1841 = vmul.f32 %v1825, %v1761
        %v1842 = vmul.f32 %v1826, %v1764
        %v1843 = vmul.f32 %v1827, %v1769
        %v1844 = vmul.f32 %v1828, %v1772
        %v1845 = vmul.f32 %v1829, %v1777
        %v1846 = vmul.f32 %v1830, %v1780
        %v1847 = vadd.f32 %v1721, %v1831
        %v1848 = vadd.f32 %v1724, %v1832
        %v1849 = vadd.f32 %v1729, %v1833
        %v1850 = vadd.f32 %v1732, %v1834
        %v1851 = vadd.f32 %v1737, %v1835
        %v1852 = vadd.f32 %v1740, %v1836
        %v1853 = vadd.f32 %v1745, %v1837
        %v1854 = vadd.f32 %v1748, %v1838
        %v1855 = vadd.f32 %v1753, %v1839
        %v1856 = vadd.f32 %v1756, %v1840
        %v1857 = vadd.f32 %v1761, %v1841
        %v1858 = vadd.f32 %v1764, %v1842
        %v1859 = vadd.f32 %v1769, %v1843
        %v1860 = vadd.f32 %v1772, %v1844
        %v1861 = vadd.f32 %v1777, %v1845
        %v1862 = vadd.f32 %v1780, %v1846
        %v1863 = vmul.f32 %v1847, 0.7978846
        %v1864 = vmul.f32 %v1848, 0.7978846
        %v1865 = vmul.f32 %v1849, 0.7978846
        %v1866 = vmul.f32 %v1850, 0.7978846
        %v1867 = vmul.f32 %v1851, 0.7978846
        %v1868 = vmul.f32 %v1852, 0.7978846
        %v1869 = vmul.f32 %v1853, 0.7978846
        %v1870 = vmul.f32 %v1854, 0.7978846
        %v1871 = vmul.f32 %v1855, 0.7978846
        %v1872 = vmul.f32 %v1856, 0.7978846
        %v1873 = vmul.f32 %v1857, 0.7978846
        %v1874 = vmul.f32 %v1858, 0.7978846
        %v1875 = vmul.f32 %v1859, 0.7978846
        %v1876 = vmul.f32 %v1860, 0.7978846
        %v1877 = vmul.f32 %v1861, 0.7978846
        %v1878 = vmul.f32 %v1862, 0.7978846
        %v1879 = vtanh.pop %v1863
        %v1880 = vtanh.pop %v1864
        %v1881 = vtanh.pop %v1865
        %v1882 = vtanh.pop %v1866
        %v1883 = vtanh.pop %v1867
        %v1884 = vtanh.pop %v1868
        %v1885 = vtanh.pop %v1869
        %v1886 = vtanh.pop %v1870
        %v1887 = vtanh.pop %v1871
        %v1888 = vtanh.pop %v1872
        %v1889 = vtanh.pop %v1873
        %v1890 = vtanh.pop %v1874
        %v1891 = vtanh.pop %v1875
        %v1892 = vtanh.pop %v1876
        %v1893 = vtanh.pop %v1877
        %v1894 = vtanh.pop %v1878
        %v1895 = vadd.f32 %v1879, 1.0
        %v1896 = vadd.f32 %v1880, 1.0
        %v1897 = vadd.f32 %v1881, 1.0
        %v1898 = vadd.f32 %v1882, 1.0
        %v1899 = vadd.f32 %v1883, 1.0
        %v1900 = vadd.f32 %v1884, 1.0
        %v1901 = vadd.f32 %v1885, 1.0
        %v1902 = vadd.f32 %v1886, 1.0
        %v1903 = vadd.f32 %v1887, 1.0
        %v1904 = vadd.f32 %v1888, 1.0
        %v1905 = vadd.f32 %v1889, 1.0
        %v1906 = vadd.f32 %v1890, 1.0
        %v1907 = vadd.f32 %v1891, 1.0
        %v1908 = vadd.f32 %v1892, 1.0
        %v1909 = vadd.f32 %v1893, 1.0
        %v1910 = vadd.f32 %v1894, 1.0
        %v1911 = vmul.f32 %v1783, %v1895
        %v1912 = vmul.f32 %v1784, %v1896
        %v1913 = vmul.f32 %v1785, %v1897
        %v1914 = vmul.f32 %v1786, %v1898
        %v1915 = vmul.f32 %v1787, %v1899
        %v1916 = vmul.f32 %v1788, %v1900
        %v1917 = vmul.f32 %v1789, %v1901
        %v1918 = vmul.f32 %v1790, %v1902
        %v1919 = vmul.f32 %v1791, %v1903
        %v1920 = vmul.f32 %v1792, %v1904
        %v1921 = vmul.f32 %v1793, %v1905
        %v1922 = vmul.f32 %v1794, %v1906
        %v1923 = vmul.f32 %v1795, %v1907
        %v1924 = vmul.f32 %v1796, %v1908
        %v1925 = vmul.f32 %v1797, %v1909
        %v1926 = vmul.f32 %v1798, %v1910
        %v1927 = vsel %vm949, %v1911, 0.0
        %v1928 = vsel %vm950, %v1912, 0.0
        %v1929 = vsel %vm951, %v1913, 0.0
        %v1930 = vsel %vm952, %v1914, 0.0
        %v1931 = vsel %vm953, %v1915, 0.0
        %v1932 = vsel %vm954, %v1916, 0.0
        %v1933 = vsel %vm955, %v1917, 0.0
        %v1934 = vsel %vm956, %v1918, 0.0
        %v1935 = vsel %vm957, %v1919, 0.0
        %v1936 = vsel %vm958, %v1920, 0.0
        %v1937 = vsel %vm959, %v1921, 0.0
        %v1938 = vsel %vm960, %v1922, 0.0
        %v1939 = vsel %vm961, %v1923, 0.0
        %v1940 = vsel %vm962, %v1924, 0.0
        %v1941 = vsel %vm963, %v1925, 0.0
        %v1942 = vsel %vm964, %v1926, 0.0
        %1943 = vst.msk [vmem:[#allocation2 + $0x11] sm:$0xff] %vm332, %v1927
        %1944 = vst.msk [vmem:[#allocation2 + $0x19] sm:$0xff] %vm332, %v1928
        %1945 = vst.msk [vmem:[#allocation2 + $0x21] sm:$0xff] %vm332, %v1929
        %1946 = vst.msk [vmem:[#allocation2 + $0x29] sm:$0xff] %vm332, %v1930
        %1947 = vst.msk [vmem:[#allocation2 + $0x31] sm:$0xff] %vm332, %v1931
        %1948 = vst.msk [vmem:[#allocation2 + $0x39] sm:$0xff] %vm332, %v1932
        %1949 = vst.msk [vmem:[#allocation2 + $0x41] sm:$0xff] %vm332, %v1933
        %1950 = vst.msk [vmem:[#allocation2 + $0x49] sm:$0xff] %vm332, %v1934
        %1951 = vst.msk [vmem:[#allocation2 + $0x51] sm:$0xff] %vm332, %v1935
        %1952 = vst.msk [vmem:[#allocation2 + $0x59] sm:$0xff] %vm332, %v1936
        %1953 = vst.msk [vmem:[#allocation2 + $0x61] sm:$0xff] %vm332, %v1937
        %1954 = vst.msk [vmem:[#allocation2 + $0x69] sm:$0xff] %vm332, %v1938
        %1955 = vst.msk [vmem:[#allocation2 + $0x71] sm:$0xff] %vm332, %v1939
        %1956 = vst.msk [vmem:[#allocation2 + $0x79] sm:$0xff] %vm332, %v1940
        %1957 = vst.msk [vmem:[#allocation2 + $0x81] sm:$0xff] %vm332, %v1941
        %1958 = vst.msk [vmem:[#allocation2 + $0x89] sm:$0xff] %vm332, %v1942
        %v1959 = vld [vmem:[#allocation2] sm:$0xff]
        %v1960 = vld [vmem:[#allocation2 + $0x8] sm:$0xff]
        %v1961 = vld [vmem:[#allocation2 + $0x10] sm:$0xff]
        %v1962 = vld [vmem:[#allocation2 + $0x18] sm:$0xff]
        %v1963 = vld [vmem:[#allocation2 + $0x20] sm:$0xff]
        %v1964 = vld [vmem:[#allocation2 + $0x28] sm:$0xff]
        %v1965 = vld [vmem:[#allocation2 + $0x30] sm:$0xff]
        %v1966 = vld [vmem:[#allocation2 + $0x38] sm:$0xff]
        %v1967 = vld [vmem:[#allocation2 + $0x40] sm:$0xff]
        %v1968 = vld [vmem:[#allocation2 + $0x48] sm:$0xff]
        %v1969 = vld [vmem:[#allocation2 + $0x50] sm:$0xff]
        %v1970 = vld [vmem:[#allocation2 + $0x58] sm:$0xff]
        %v1971 = vld [vmem:[#allocation2 + $0x60] sm:$0xff]
        %v1972 = vld [vmem:[#allocation2 + $0x68] sm:$0xff]
        %v1973 = vld [vmem:[#allocation2 + $0x70] sm:$0xff]
        %v1974 = vld [vmem:[#allocation2 + $0x78] sm:$0xff]
        %v1975 = vld [vmem:[#allocation2 + $0x1] sm:$0xff]
        %v1976 = vld [vmem:[#allocation2 + $0x9] sm:$0xff]
        %v1977 = vld [vmem:[#allocation2 + $0x11] sm:$0xff]
        %v1978 = vld [vmem:[#allocation2 + $0x19] sm:$0xff]
        %v1979 = vld [vmem:[#allocation2 + $0x21] sm:$0xff]
        %v1980 = vld [vmem:[#allocation2 + $0x29] sm:$0xff]
        %v1981 = vld [vmem:[#allocation2 + $0x31] sm:$0xff]
        %v1982 = vld [vmem:[#allocation2 + $0x39] sm:$0xff]
        %v1983 = vld [vmem:[#allocation2 + $0x41] sm:$0xff]
        %v1984 = vld [vmem:[#allocation2 + $0x49] sm:$0xff]
        %v1985 = vld [vmem:[#allocation2 + $0x51] sm:$0xff]
        %v1986 = vld [vmem:[#allocation2 + $0x59] sm:$0xff]
        %v1987 = vld [vmem:[#allocation2 + $0x61] sm:$0xff]
        %v1988 = vld [vmem:[#allocation2 + $0x69] sm:$0xff]
        %v1989 = vld [vmem:[#allocation2 + $0x71] sm:$0xff]
        %v1990 = vld [vmem:[#allocation2 + $0x79] sm:$0xff]
        %v1991 = vld [vmem:[#allocation2 + $0x2] sm:$0xff]
        %v1992 = vld [vmem:[#allocation2 + $0xa] sm:$0xff]
        %v1993 = vld [vmem:[#allocation2 + $0x12] sm:$0xff]
        %v1994 = vld [vmem:[#allocation2 + $0x1a] sm:$0xff]
        %v1995 = vld [vmem:[#allocation2 + $0x22] sm:$0xff]
        %v1996 = vld [vmem:[#allocation2 + $0x2a] sm:$0xff]
        %v1997 = vld [vmem:[#allocation2 + $0x32] sm:$0xff]
        %v1998 = vld [vmem:[#allocation2 + $0x3a] sm:$0xff]
        %v1999 = vld [vmem:[#allocation2 + $0x42] sm:$0xff]
        %v2000 = vld [vmem:[#allocation2 + $0x4a] sm:$0xff]
        %v2001 = vld [vmem:[#allocation2 + $0x52] sm:$0xff]
        %v2002 = vld [vmem:[#allocation2 + $0x5a] sm:$0xff]
        %v2003 = vld [vmem:[#allocation2 + $0x62] sm:$0xff]
        %v2004 = vld [vmem:[#allocation2 + $0x6a] sm:$0xff]
        %v2005 = vld [vmem:[#allocation2 + $0x72] sm:$0xff]
        %v2006 = vld [vmem:[#allocation2 + $0x7a] sm:$0xff]
        %v2007 = vld [vmem:[#allocation2 + $0x80] sm:$0xff]
        %v2008 = vld [vmem:[#allocation2 + $0x88] sm:$0xff]
        %v2009 = vld [vmem:[#allocation2 + $0x81] sm:$0xff]
        %v2010 = vld [vmem:[#allocation2 + $0x89] sm:$0xff]
        %v2011 = vld [vmem:[#allocation2 + $0x82] sm:$0xff]
        %v2012 = vld [vmem:[#allocation2 + $0x8a] sm:$0xff]
        %v2013 = vld [vmem:[#allocation2 + $0x90] sm:$0xff]
        %v2014 = vld [vmem:[#allocation2 + $0x98] sm:$0xff]
        %v2015 = vld [vmem:[#allocation2 + $0x91] sm:$0xff]
        %v2016 = vld [vmem:[#allocation2 + $0x99] sm:$0xff]
        %v2017 = vld [vmem:[#allocation2 + $0x92] sm:$0xff]
        %v2018 = vld [vmem:[#allocation2 + $0x9a] sm:$0xff]
        %2035 = vrot.lane.b32.xlu0 %v1975, 16
        %v2036 = vpop.permute.xlu0 %2035
        %2037 = vrot.lane.b32.xlu0 %v1976, 16
        %v2038 = vpop.permute.xlu0 %2037
        %2039 = vrot.lane.b32.xlu0 %v1977, 16
        %v2040 = vpop.permute.xlu0 %2039
        %2041 = vrot.lane.b32.xlu0 %v1978, 16
        %v2042 = vpop.permute.xlu0 %2041
        %2043 = vrot.lane.b32.xlu0 %v1979, 16
        %v2044 = vpop.permute.xlu0 %2043
        %2045 = vrot.lane.b32.xlu0 %v1980, 16
        %v2046 = vpop.permute.xlu0 %2045
        %2047 = vrot.lane.b32.xlu0 %v1981, 16
        %v2048 = vpop.permute.xlu0 %2047
        %2049 = vrot.lane.b32.xlu0 %v1982, 16
        %v2050 = vpop.permute.xlu0 %2049
        %2051 = vrot.lane.b32.xlu0 %v1983, 16
        %v2052 = vpop.permute.xlu0 %2051
        %2053 = vrot.lane.b32.xlu0 %v1984, 16
        %v2054 = vpop.permute.xlu0 %2053
        %2055 = vrot.lane.b32.xlu0 %v1985, 16
        %v2056 = vpop.permute.xlu0 %2055
        %2057 = vrot.lane.b32.xlu0 %v1986, 16
        %v2058 = vpop.permute.xlu0 %2057
        %2059 = vrot.lane.b32.xlu0 %v1987, 16
        %v2060 = vpop.permute.xlu0 %2059
        %2061 = vrot.lane.b32.xlu0 %v1988, 16
        %v2062 = vpop.permute.xlu0 %2061
        %2063 = vrot.lane.b32.xlu0 %v1989, 16
        %v2064 = vpop.permute.xlu0 %2063
        %2065 = vrot.lane.b32.xlu0 %v1990, 16
        %v2066 = vpop.permute.xlu0 %2065
        %2099 = vrot.lane.b32.xlu0 %v1991, 32
        %v2100 = vpop.permute.xlu0 %2099
        %2101 = vrot.lane.b32.xlu0 %v1992, 32
        %v2102 = vpop.permute.xlu0 %2101
        %2103 = vrot.lane.b32.xlu0 %v1993, 32
        %v2104 = vpop.permute.xlu0 %2103
        %2105 = vrot.lane.b32.xlu0 %v1994, 32
        %v2106 = vpop.permute.xlu0 %2105
        %2107 = vrot.lane.b32.xlu0 %v1995, 32
        %v2108 = vpop.permute.xlu0 %2107
        %2109 = vrot.lane.b32.xlu0 %v1996, 32
        %v2110 = vpop.permute.xlu0 %2109
        %2111 = vrot.lane.b32.xlu0 %v1997, 32
        %v2112 = vpop.permute.xlu0 %2111
        %2113 = vrot.lane.b32.xlu0 %v1998, 32
        %v2114 = vpop.permute.xlu0 %2113
        %2115 = vrot.lane.b32.xlu0 %v1999, 32
        %v2116 = vpop.permute.xlu0 %2115
        %2117 = vrot.lane.b32.xlu0 %v2000, 32
        %v2118 = vpop.permute.xlu0 %2117
        %2119 = vrot.lane.b32.xlu0 %v2001, 32
        %v2120 = vpop.permute.xlu0 %2119
        %2121 = vrot.lane.b32.xlu0 %v2002, 32
        %v2122 = vpop.permute.xlu0 %2121
        %2123 = vrot.lane.b32.xlu0 %v2003, 32
        %v2124 = vpop.permute.xlu0 %2123
        %2125 = vrot.lane.b32.xlu0 %v2004, 32
        %v2126 = vpop.permute.xlu0 %2125
        %2127 = vrot.lane.b32.xlu0 %v2005, 32
        %v2128 = vpop.permute.xlu0 %2127
        %2129 = vrot.lane.b32.xlu0 %v2006, 32
        %v2130 = vpop.permute.xlu0 %2129
        %2163 = vrot.lane.b32.xlu0 %v1961, 48
        %v2164 = vpop.permute.xlu0 %2163
        %2165 = vrot.lane.b32.xlu0 %v1962, 48
        %v2166 = vpop.permute.xlu0 %2165
        %2167 = vrot.lane.b32.xlu0 %v1963, 48
        %v2168 = vpop.permute.xlu0 %2167
        %2169 = vrot.lane.b32.xlu0 %v1964, 48
        %v2170 = vpop.permute.xlu0 %2169
        %2171 = vrot.lane.b32.xlu0 %v1965, 48
        %v2172 = vpop.permute.xlu0 %2171
        %2173 = vrot.lane.b32.xlu0 %v1966, 48
        %v2174 = vpop.permute.xlu0 %2173
        %2175 = vrot.lane.b32.xlu0 %v1967, 48
        %v2176 = vpop.permute.xlu0 %2175
        %2177 = vrot.lane.b32.xlu0 %v1968, 48
        %v2178 = vpop.permute.xlu0 %2177
        %2179 = vrot.lane.b32.xlu0 %v1969, 48
        %v2180 = vpop.permute.xlu0 %2179
        %2181 = vrot.lane.b32.xlu0 %v1970, 48
        %v2182 = vpop.permute.xlu0 %2181
        %2183 = vrot.lane.b32.xlu0 %v1971, 48
        %v2184 = vpop.permute.xlu0 %2183
        %2185 = vrot.lane.b32.xlu0 %v1972, 48
        %v2186 = vpop.permute.xlu0 %2185
        %2187 = vrot.lane.b32.xlu0 %v1973, 48
        %v2188 = vpop.permute.xlu0 %2187
        %2189 = vrot.lane.b32.xlu0 %v1974, 48
        %v2190 = vpop.permute.xlu0 %2189
        %2191 = vrot.lane.b32.xlu0 %v2007, 48
        %v2192 = vpop.permute.xlu0 %2191
        %2193 = vrot.lane.b32.xlu0 %v2008, 48
        %v2194 = vpop.permute.xlu0 %2193
        %2213 = vrot.lane.b32.xlu0 %v1977, 64
        %v2214 = vpop.permute.xlu0 %2213
        %2215 = vrot.lane.b32.xlu0 %v1978, 64
        %v2216 = vpop.permute.xlu0 %2215
        %2217 = vrot.lane.b32.xlu0 %v1979, 64
        %v2218 = vpop.permute.xlu0 %2217
        %2219 = vrot.lane.b32.xlu0 %v1980, 64
        %v2220 = vpop.permute.xlu0 %2219
        %2221 = vrot.lane.b32.xlu0 %v1981, 64
        %v2222 = vpop.permute.xlu0 %2221
        %2223 = vrot.lane.b32.xlu0 %v1982, 64
        %v2224 = vpop.permute.xlu0 %2223
        %2225 = vrot.lane.b32.xlu0 %v1983, 64
        %v2226 = vpop.permute.xlu0 %2225
        %2227 = vrot.lane.b32.xlu0 %v1984, 64
        %v2228 = vpop.permute.xlu0 %2227
        %2229 = vrot.lane.b32.xlu0 %v1985, 64
        %v2230 = vpop.permute.xlu0 %2229
        %2231 = vrot.lane.b32.xlu0 %v1986, 64
        %v2232 = vpop.permute.xlu0 %2231
        %2233 = vrot.lane.b32.xlu0 %v1987, 64
        %v2234 = vpop.permute.xlu0 %2233
        %2235 = vrot.lane.b32.xlu0 %v1988, 64
        %v2236 = vpop.permute.xlu0 %2235
        %2237 = vrot.lane.b32.xlu0 %v1989, 64
        %v2238 = vpop.permute.xlu0 %2237
        %2239 = vrot.lane.b32.xlu0 %v1990, 64
        %v2240 = vpop.permute.xlu0 %2239
        %2241 = vrot.lane.b32.xlu0 %v2009, 64
        %v2242 = vpop.permute.xlu0 %2241
        %2243 = vrot.lane.b32.xlu0 %v2010, 64
        %v2244 = vpop.permute.xlu0 %2243
        %2263 = vrot.lane.b32.xlu0 %v1993, 80
        %v2264 = vpop.permute.xlu0 %2263
        %2265 = vrot.lane.b32.xlu0 %v1994, 80
        %v2266 = vpop.permute.xlu0 %2265
        %2267 = vrot.lane.b32.xlu0 %v1995, 80
        %v2268 = vpop.permute.xlu0 %2267
        %2269 = vrot.lane.b32.xlu0 %v1996, 80
        %v2270 = vpop.permute.xlu0 %2269
        %2271 = vrot.lane.b32.xlu0 %v1997, 80
        %v2272 = vpop.permute.xlu0 %2271
        %2273 = vrot.lane.b32.xlu0 %v1998, 80
        %v2274 = vpop.permute.xlu0 %2273
        %2275 = vrot.lane.b32.xlu0 %v1999, 80
        %v2276 = vpop.permute.xlu0 %2275
        %2277 = vrot.lane.b32.xlu0 %v2000, 80
        %v2278 = vpop.permute.xlu0 %2277
        %2279 = vrot.lane.b32.xlu0 %v2001, 80
        %v2280 = vpop.permute.xlu0 %2279
        %2281 = vrot.lane.b32.xlu0 %v2002, 80
        %v2282 = vpop.permute.xlu0 %2281
        %2283 = vrot.lane.b32.xlu0 %v2003, 80
        %v2284 = vpop.permute.xlu0 %2283
        %2285 = vrot.lane.b32.xlu0 %v2004, 80
        %v2286 = vpop.permute.xlu0 %2285
        %2287 = vrot.lane.b32.xlu0 %v2005, 80
        %v2288 = vpop.permute.xlu0 %2287
        %2289 = vrot.lane.b32.xlu0 %v2006, 80
        %v2290 = vpop.permute.xlu0 %2289
        %2291 = vrot.lane.b32.xlu0 %v2011, 80
        %v2292 = vpop.permute.xlu0 %2291
        %2293 = vrot.lane.b32.xlu0 %v2012, 80
        %v2294 = vpop.permute.xlu0 %2293
        %2313 = vrot.lane.b32.xlu0 %v1963, 96
        %v2314 = vpop.permute.xlu0 %2313
        %2315 = vrot.lane.b32.xlu0 %v1964, 96
        %v2316 = vpop.permute.xlu0 %2315
        %2317 = vrot.lane.b32.xlu0 %v1965, 96
        %v2318 = vpop.permute.xlu0 %2317
        %2319 = vrot.lane.b32.xlu0 %v1966, 96
        %v2320 = vpop.permute.xlu0 %2319
        %2321 = vrot.lane.b32.xlu0 %v1967, 96
        %v2322 = vpop.permute.xlu0 %2321
        %2323 = vrot.lane.b32.xlu0 %v1968, 96
        %v2324 = vpop.permute.xlu0 %2323
        %2325 = vrot.lane.b32.xlu0 %v1969, 96
        %v2326 = vpop.permute.xlu0 %2325
        %2327 = vrot.lane.b32.xlu0 %v1970, 96
        %v2328 = vpop.permute.xlu0 %2327
        %2329 = vrot.lane.b32.xlu0 %v1971, 96
        %v2330 = vpop.permute.xlu0 %2329
        %2331 = vrot.lane.b32.xlu0 %v1972, 96
        %v2332 = vpop.permute.xlu0 %2331
        %2333 = vrot.lane.b32.xlu0 %v1973, 96
        %v2334 = vpop.permute.xlu0 %2333
        %2335 = vrot.lane.b32.xlu0 %v1974, 96
        %v2336 = vpop.permute.xlu0 %2335
        %2337 = vrot.lane.b32.xlu0 %v2007, 96
        %v2338 = vpop.permute.xlu0 %2337
        %2339 = vrot.lane.b32.xlu0 %v2008, 96
        %v2340 = vpop.permute.xlu0 %2339
        %2341 = vrot.lane.b32.xlu0 %v2013, 96
        %v2342 = vpop.permute.xlu0 %2341
        %2343 = vrot.lane.b32.xlu0 %v2014, 96
        %v2344 = vpop.permute.xlu0 %2343
        %2363 = vrot.lane.b32.xlu0 %v1979, 112
        %v2364 = vpop.permute.xlu0 %2363
        %2365 = vrot.lane.b32.xlu0 %v1980, 112
        %v2366 = vpop.permute.xlu0 %2365
        %2367 = vrot.lane.b32.xlu0 %v1981, 112
        %v2368 = vpop.permute.xlu0 %2367
        %2369 = vrot.lane.b32.xlu0 %v1982, 112
        %v2370 = vpop.permute.xlu0 %2369
        %2371 = vrot.lane.b32.xlu0 %v1983, 112
        %v2372 = vpop.permute.xlu0 %2371
        %2373 = vrot.lane.b32.xlu0 %v1984, 112
        %v2374 = vpop.permute.xlu0 %2373
        %2375 = vrot.lane.b32.xlu0 %v1985, 112
        %v2376 = vpop.permute.xlu0 %2375
        %2377 = vrot.lane.b32.xlu0 %v1986, 112
        %v2378 = vpop.permute.xlu0 %2377
        %2379 = vrot.lane.b32.xlu0 %v1987, 112
        %v2380 = vpop.permute.xlu0 %2379
        %2381 = vrot.lane.b32.xlu0 %v1988, 112
        %v2382 = vpop.permute.xlu0 %2381
        %2383 = vrot.lane.b32.xlu0 %v1989, 112
        %v2384 = vpop.permute.xlu0 %2383
        %2385 = vrot.lane.b32.xlu0 %v1990, 112
        %v2386 = vpop.permute.xlu0 %2385
        %2387 = vrot.lane.b32.xlu0 %v2009, 112
        %v2388 = vpop.permute.xlu0 %2387
        %2389 = vrot.lane.b32.xlu0 %v2010, 112
        %v2390 = vpop.permute.xlu0 %2389
        %2391 = vrot.lane.b32.xlu0 %v2015, 112
        %v2392 = vpop.permute.xlu0 %2391
        %2393 = vrot.lane.b32.xlu0 %v2016, 112
        %v2394 = vpop.permute.xlu0 %2393
        %v2411 = vsel %vm332, %v1959, %v2036
        %v2412 = vsel %vm332, %v1960, %v2038
        %v2413 = vsel %vm332, %v1961, %v2040
        %v2414 = vsel %vm332, %v1962, %v2042
        %v2415 = vsel %vm332, %v1963, %v2044
        %v2416 = vsel %vm332, %v1964, %v2046
        %v2417 = vsel %vm332, %v1965, %v2048
        %v2418 = vsel %vm332, %v1966, %v2050
        %v2419 = vsel %vm332, %v1967, %v2052
        %v2420 = vsel %vm332, %v1968, %v2054
        %v2421 = vsel %vm332, %v1969, %v2056
        %v2422 = vsel %vm332, %v1970, %v2058
        %v2423 = vsel %vm332, %v1971, %v2060
        %v2424 = vsel %vm332, %v1972, %v2062
        %v2425 = vsel %vm332, %v1973, %v2064
        %v2426 = vsel %vm332, %v1974, %v2066
        %v2427 = vsel %vm1465, %v2411, %v2100
        %v2428 = vsel %vm1465, %v2412, %v2102
        %v2429 = vsel %vm1465, %v2413, %v2104
        %v2430 = vsel %vm1465, %v2414, %v2106
        %v2431 = vsel %vm1465, %v2415, %v2108
        %v2432 = vsel %vm1465, %v2416, %v2110
        %v2433 = vsel %vm1465, %v2417, %v2112
        %v2434 = vsel %vm1465, %v2418, %v2114
        %v2435 = vsel %vm1465, %v2419, %v2116
        %v2436 = vsel %vm1465, %v2420, %v2118
        %v2437 = vsel %vm1465, %v2421, %v2120
        %v2438 = vsel %vm1465, %v2422, %v2122
        %v2439 = vsel %vm1465, %v2423, %v2124
        %v2440 = vsel %vm1465, %v2424, %v2126
        %v2441 = vsel %vm1465, %v2425, %v2128
        %v2442 = vsel %vm1465, %v2426, %v2130
        %v2443 = vsel %vm1482, %v2427, %v2164
        %v2444 = vsel %vm1482, %v2428, %v2166
        %v2445 = vsel %vm1482, %v2429, %v2168
        %v2446 = vsel %vm1482, %v2430, %v2170
        %v2447 = vsel %vm1482, %v2431, %v2172
        %v2448 = vsel %vm1482, %v2432, %v2174
        %v2449 = vsel %vm1482, %v2433, %v2176
        %v2450 = vsel %vm1482, %v2434, %v2178
        %v2451 = vsel %vm1482, %v2435, %v2180
        %v2452 = vsel %vm1482, %v2436, %v2182
        %v2453 = vsel %vm1482, %v2437, %v2184
        %v2454 = vsel %vm1482, %v2438, %v2186
        %v2455 = vsel %vm1482, %v2439, %v2188
        %v2456 = vsel %vm1482, %v2440, %v2190
        %v2457 = vsel %vm1482, %v2441, %v2192
        %v2458 = vsel %vm1482, %v2442, %v2194
        %v2459 = vsel %vm1499, %v2443, %v2214
        %v2460 = vsel %vm1499, %v2444, %v2216
        %v2461 = vsel %vm1499, %v2445, %v2218
        %v2462 = vsel %vm1499, %v2446, %v2220
        %v2463 = vsel %vm1499, %v2447, %v2222
        %v2464 = vsel %vm1499, %v2448, %v2224
        %v2465 = vsel %vm1499, %v2449, %v2226
        %v2466 = vsel %vm1499, %v2450, %v2228
        %v2467 = vsel %vm1499, %v2451, %v2230
        %v2468 = vsel %vm1499, %v2452, %v2232
        %v2469 = vsel %vm1499, %v2453, %v2234
        %v2470 = vsel %vm1499, %v2454, %v2236
        %v2471 = vsel %vm1499, %v2455, %v2238
        %v2472 = vsel %vm1499, %v2456, %v2240
        %v2473 = vsel %vm1499, %v2457, %v2242
        %v2474 = vsel %vm1499, %v2458, %v2244
        %v2475 = vsel %vm1516, %v2459, %v2264
        %v2476 = vsel %vm1516, %v2460, %v2266
        %v2477 = vsel %vm1516, %v2461, %v2268
        %v2478 = vsel %vm1516, %v2462, %v2270
        %v2479 = vsel %vm1516, %v2463, %v2272
        %v2480 = vsel %vm1516, %v2464, %v2274
        %v2481 = vsel %vm1516, %v2465, %v2276
        %v2482 = vsel %vm1516, %v2466, %v2278
        %v2483 = vsel %vm1516, %v2467, %v2280
        %v2484 = vsel %vm1516, %v2468, %v2282
        %v2485 = vsel %vm1516, %v2469, %v2284
        %v2486 = vsel %vm1516, %v2470, %v2286
        %v2487 = vsel %vm1516, %v2471, %v2288
        %v2488 = vsel %vm1516, %v2472, %v2290
        %v2489 = vsel %vm1516, %v2473, %v2292
        %v2490 = vsel %vm1516, %v2474, %v2294
        %v2491 = vsel %vm1533, %v2475, %v2314
        %v2492 = vsel %vm1533, %v2476, %v2316
        %v2493 = vsel %vm1533, %v2477, %v2318
        %v2494 = vsel %vm1533, %v2478, %v2320
        %v2495 = vsel %vm1533, %v2479, %v2322
        %v2496 = vsel %vm1533, %v2480, %v2324
        %v2497 = vsel %vm1533, %v2481, %v2326
        %v2498 = vsel %vm1533, %v2482, %v2328
        %v2499 = vsel %vm1533, %v2483, %v2330
        %v2500 = vsel %vm1533, %v2484, %v2332
        %v2501 = vsel %vm1533, %v2485, %v2334
        %v2502 = vsel %vm1533, %v2486, %v2336
        %v2503 = vsel %vm1533, %v2487, %v2338
        %v2504 = vsel %vm1533, %v2488, %v2340
        %v2505 = vsel %vm1533, %v2489, %v2342
        %v2506 = vsel %vm1533, %v2490, %v2344
        %v2507 = vsel %vm1550, %v2491, %v2364
        %v2508 = vsel %vm1550, %v2492, %v2366
        %v2509 = vsel %vm1550, %v2493, %v2368
        %v2510 = vsel %vm1550, %v2494, %v2370
        %v2511 = vsel %vm1550, %v2495, %v2372
        %v2512 = vsel %vm1550, %v2496, %v2374
        %v2513 = vsel %vm1550, %v2497, %v2376
        %v2514 = vsel %vm1550, %v2498, %v2378
        %v2515 = vsel %vm1550, %v2499, %v2380
        %v2516 = vsel %vm1550, %v2500, %v2382
        %v2517 = vsel %vm1550, %v2501, %v2384
        %v2518 = vsel %vm1550, %v2502, %v2386
        %v2519 = vsel %vm1550, %v2503, %v2388
        %v2520 = vsel %vm1550, %v2504, %v2390
        %v2521 = vsel %vm1550, %v2505, %v2392
        %v2522 = vsel %vm1550, %v2506, %v2394
        %v2523 = vpack.c.bf16 %v2508, %v2507
        %v2524 = vpack.c.bf16 %v1996, %v1995
        %v2525 = vpack.c.bf16 %v2510, %v2509
        %v2526 = vpack.c.bf16 %v1998, %v1997
        %v2527 = vpack.c.bf16 %v2512, %v2511
        %v2528 = vpack.c.bf16 %v2000, %v1999
        %v2529 = vpack.c.bf16 %v2514, %v2513
        %v2530 = vpack.c.bf16 %v2002, %v2001
        %v2531 = vpack.c.bf16 %v2516, %v2515
        %v2532 = vpack.c.bf16 %v2004, %v2003
        %v2533 = vpack.c.bf16 %v2518, %v2517
        %v2534 = vpack.c.bf16 %v2006, %v2005
        %v2535 = vpack.c.bf16 %v2520, %v2519
        %v2536 = vpack.c.bf16 %v2012, %v2011
        %v2537 = vpack.c.bf16 %v2522, %v2521
        %v2538 = vpack.c.bf16 %v2018, %v2017
        %v2539 = vld [vmem:[%s5] sm:$0xf]
        %v2540 = vld [vmem:[%s5 + $0x4] sm:$0xf]
        %v2541 = vld [vmem:[%s5 + $0x8] sm:$0xf]
        %v2542 = vld [vmem:[%s5 + $0xc] sm:$0xf]
        %v2543 = vld [vmem:[%s5 + $0x10] sm:$0xf]
        %v2544 = vld [vmem:[%s5 + $0x14] sm:$0xf]
        %v2545 = vld [vmem:[%s5 + $0x18] sm:$0xf]
        %v2546 = vld [vmem:[%s5 + $0x1c] sm:$0xf]
        %v2547 = vld [vmem:[%s5 + $0x20] sm:$0xf]
        %v2548 = vld [vmem:[%s5 + $0x24] sm:$0xf]
        %v2549 = vld [vmem:[%s5 + $0x28] sm:$0xf]
        %v2550 = vld [vmem:[%s5 + $0x2c] sm:$0xf]
        %v2551 = vld [vmem:[%s5 + $0x30] sm:$0xf]
        %v2552 = vld [vmem:[%s5 + $0x34] sm:$0xf]
        %v2553 = vld [vmem:[%s5 + $0x38] sm:$0xf]
        %v2554 = vld [vmem:[%s5 + $0x3c] sm:$0xf]
        %v2555 = vld [vmem:[%s5 + $0x40] sm:$0xf]
        %v2556 = vld [vmem:[%s5 + $0x44] sm:$0xf]
        %v2557 = vld [vmem:[%s6] sm:$0x1]
        %v2559 = vlaneseq
        %v2560 = vshrl.u32 %v2559, 7
        %v2561 = vsub.s32 0, %v2560
        %v2562 = vrot.slane %v2557, %v2561
        %v2582 = vunpack.c.l.b16 %v2539
        %v2583 = vunpack.c.l.b16 %v2540
        %v2584 = vunpack.c.l.b16 %v2541
        %v2585 = vunpack.c.l.b16 %v2542
        %v2586 = vunpack.c.l.b16 %v2543
        %v2587 = vunpack.c.l.b16 %v2544
        %v2588 = vunpack.c.l.b16 %v2545
        %v2589 = vunpack.c.l.b16 %v2546
        %v2590 = vunpack.c.l.b16 %v2547
        %v2591 = vunpack.c.l.b16 %v2548
        %v2592 = vunpack.c.l.b16 %v2549
        %v2593 = vunpack.c.l.b16 %v2550
        %v2594 = vunpack.c.l.b16 %v2551
        %v2595 = vunpack.c.l.b16 %v2552
        %v2596 = vunpack.c.l.b16 %v2553
        %v2597 = vunpack.c.l.b16 %v2554
        %v2598 = vunpack.c.l.b16 %v2555
        %v2599 = vunpack.c.l.b16 %v2556
        %v2600 = vpack.c.b16 %v2583, %v2582
        %v2601 = vpack.c.b16 %v2585, %v2584
        %v2602 = vpack.c.b16 %v2587, %v2586
        %v2603 = vpack.c.b16 %v2589, %v2588
        %v2604 = vpack.c.b16 %v2591, %v2590
        %v2605 = vpack.c.b16 %v2593, %v2592
        %v2606 = vpack.c.b16 %v2595, %v2594
        %v2607 = vpack.c.b16 %v2597, %v2596
        %v2608 = vpack.c.b16 %v2599, %v2598
        %v2619 = vsel %vm332, %v2524, 0
        %v2622 = vsel %vm332, %v2526, 0
        %v2625 = vsel %vm332, %v2528, 0
        %v2628 = vsel %vm332, %v2530, 0
        %v2631 = vsel %vm332, %v2532, 0
        %v2634 = vsel %vm332, %v2534, 0
        %v2637 = vsel %vm332, %v2536, 0
        %v2640 = vsel %vm332, %v2538, 0
        %2642 = vmatprep.subr.bf16.mxu0 0
        %2643 = vmatpush1.bf16.msra.mxu0 %v2600
        %2644 = vmatprep.subr.bf16.mxu0 0
        %2645 = vmatpush1.bf16.msra.mxu0 %v2601
        %2646 = vmatprep.subr.bf16.mxu0 0
        %2647 = vmatpush1.bf16.msra.mxu0 %v2602
        %2648 = vmatprep.subr.bf16.mxu0 0
        %2649 = vmatpush1.bf16.msra.mxu0 %v2603
        %2650 = vmatprep.subr.bf16.mxu0 0
        %2651 = vmatpush1.bf16.msra.mxu0 %v2604
        %2652 = vmatprep.subr.bf16.mxu0 0
        %2653 = vmatpush1.bf16.msra.mxu0 %v2605
        %2654 = vmatprep.subr.bf16.mxu0 0
        %2655 = vmatpush1.bf16.msra.mxu0 %v2606
        %2656 = vmatprep.subr.bf16.mxu0 0
        %2657 = vmatpush1.bf16.msra.mxu0 %v2607
        %2658 = vmatprep.subr.bf16.mxu0 0
        %2659 = vmatpush1.bf16.msra.mxu0 %v2608
        %2660 = vmatprep.subr.bf16.mxu0 0
        %2661 = vmatpush1.bf16.msra.mxu0 0
        %2662 = vmatprep.subr.bf16.mxu0 0
        %2663 = vmatpush1.bf16.msra.mxu0 0
        %2664 = vmatprep.subr.bf16.mxu0 0
        %2665 = vmatpush1.bf16.msra.mxu0 0
        %2666 = vmatprep.subr.bf16.mxu0 0
        %2667 = vmatpush1.bf16.msra.mxu0 0
        %2668 = vmatprep.subr.bf16.mxu0 0
        %2669 = vmatpush1.bf16.msra.mxu0 0
        %2670 = vmatprep.subr.bf16.mxu0 0
        %2671 = vmatpush1.bf16.msra.mxu0 0
        %2672 = vmatprep.subr.bf16.mxu0 0
        %2673 = vmatpush1.bf16.msra.mxu0 0
        %2674 = vmatprep.mubr.bf16.mxu0 %v2619
        %2675 = vmatmul.mubr.bf16.gmra.mrb[0].mxu0 %v2523
        %v2676 = vpop.f32.mrb[0].mxu0
        %v2677 = vadd.f32 %v2562, %v2676
        %v2678 = vpop.f32.mrb[0].mxu0
        %v2679 = vpop.f32.mrb[0].mxu0
        %v2680 = vadd.f32 %v2562, %v2679
        %v2681 = vpop.f32.mrb[0].mxu0
        %2682 = vmatprep.mubr.bf16.mxu0 %v2622
        %2683 = vmatmul.mubr.bf16.gmra.mrb[0].mxu0 %v2525
        %v2684 = vpop.f32.mrb[0].mxu0
        %v2685 = vadd.f32 %v2562, %v2684
        %v2686 = vpop.f32.mrb[0].mxu0
        %v2687 = vpop.f32.mrb[0].mxu0
        %v2688 = vadd.f32 %v2562, %v2687
        %v2689 = vpop.f32.mrb[0].mxu0
        %2690 = vmatprep.mubr.bf16.mxu0 %v2625
        %2691 = vmatmul.mubr.bf16.gmra.mrb[0].mxu0 %v2527
        %v2692 = vpop.f32.mrb[0].mxu0
        %v2693 = vadd.f32 %v2562, %v2692
        %v2694 = vpop.f32.mrb[0].mxu0
        %v2695 = vpop.f32.mrb[0].mxu0
        %v2696 = vadd.f32 %v2562, %v2695
        %v2697 = vpop.f32.mrb[0].mxu0
        %2698 = vmatprep.mubr.bf16.mxu0 %v2628
        %2699 = vmatmul.mubr.bf16.gmra.mrb[0].mxu0 %v2529
        %v2700 = vpop.f32.mrb[0].mxu0
        %v2701 = vadd.f32 %v2562, %v2700
        %v2702 = vpop.f32.mrb[0].mxu0
        %v2703 = vpop.f32.mrb[0].mxu0
        %v2704 = vadd.f32 %v2562, %v2703
        %v2705 = vpop.f32.mrb[0].mxu0
        %2706 = vmatprep.mubr.bf16.mxu0 %v2631
        %2707 = vmatmul.mubr.bf16.gmra.mrb[0].mxu0 %v2531
        %v2708 = vpop.f32.mrb[0].mxu0
        %v2709 = vadd.f32 %v2562, %v2708
        %v2710 = vpop.f32.mrb[0].mxu0
        %v2711 = vpop.f32.mrb[0].mxu0
        %v2712 = vadd.f32 %v2562, %v2711
        %v2713 = vpop.f32.mrb[0].mxu0
        %2714 = vmatprep.mubr.bf16.mxu0 %v2634
        %2715 = vmatmul.mubr.bf16.gmra.mrb[0].mxu0 %v2533
        %v2716 = vpop.f32.mrb[0].mxu0
        %v2717 = vadd.f32 %v2562, %v2716
        %v2718 = vpop.f32.mrb[0].mxu0
        %v2719 = vpop.f32.mrb[0].mxu0
        %v2720 = vadd.f32 %v2562, %v2719
        %v2721 = vpop.f32.mrb[0].mxu0
        %2722 = vmatprep.mubr.bf16.mxu0 %v2637
        %2723 = vmatmul.mubr.bf16.gmra.mrb[0].mxu0 %v2535
        %v2724 = vpop.f32.mrb[0].mxu0
        %v2725 = vadd.f32 %v2562, %v2724
        %v2726 = vpop.f32.mrb[0].mxu0
        %v2727 = vpop.f32.mrb[0].mxu0
        %v2728 = vadd.f32 %v2562, %v2727
        %v2729 = vpop.f32.mrb[0].mxu0
        %2730 = vmatprep.mubr.bf16.mxu0 %v2640
        %2731 = vmatmul.mubr.bf16.gmra.mrb[0].mxu0 %v2537
        %v2732 = vpop.f32.mrb[0].mxu0
        %v2733 = vadd.f32 %v2562, %v2732
        %v2734 = vpop.f32.mrb[0].mxu0
        %v2735 = vpop.f32.mrb[0].mxu0
        %v2736 = vadd.f32 %v2562, %v2735
        %v2737 = vpop.f32.mrb[0].mxu0
        %2738 = vdwg.mxu0
        %v2739 = vmul.f32 %v2677, 0.5
        %v2740 = vmul.f32 %v2680, 0.5
        %v2741 = vmul.f32 %v2685, 0.5
        %v2742 = vmul.f32 %v2688, 0.5
        %v2743 = vmul.f32 %v2693, 0.5
        %v2744 = vmul.f32 %v2696, 0.5
        %v2745 = vmul.f32 %v2701, 0.5
        %v2746 = vmul.f32 %v2704, 0.5
        %v2747 = vmul.f32 %v2709, 0.5
        %v2748 = vmul.f32 %v2712, 0.5
        %v2749 = vmul.f32 %v2717, 0.5
        %v2750 = vmul.f32 %v2720, 0.5
        %v2751 = vmul.f32 %v2725, 0.5
        %v2752 = vmul.f32 %v2728, 0.5
        %v2753 = vmul.f32 %v2733, 0.5
        %v2754 = vmul.f32 %v2736, 0.5
        %v2755 = vmul.f32 %v2677, 0.044715
        %v2756 = vmul.f32 %v2680, 0.044715
        %v2757 = vmul.f32 %v2685, 0.044715
        %v2758 = vmul.f32 %v2688, 0.044715
        %v2759 = vmul.f32 %v2693, 0.044715
        %v2760 = vmul.f32 %v2696, 0.044715
        %v2761 = vmul.f32 %v2701, 0.044715
        %v2762 = vmul.f32 %v2704, 0.044715
        %v2763 = vmul.f32 %v2709, 0.044715
        %v2764 = vmul.f32 %v2712, 0.044715
        %v2765 = vmul.f32 %v2717, 0.044715
        %v2766 = vmul.f32 %v2720, 0.044715
        %v2767 = vmul.f32 %v2725, 0.044715
        %v2768 = vmul.f32 %v2728, 0.044715
        %v2769 = vmul.f32 %v2733, 0.044715
        %v2770 = vmul.f32 %v2736, 0.044715
        %v2771 = vmul.f32 %v2755, %v2677
        %v2772 = vmul.f32 %v2756, %v2680
        %v2773 = vmul.f32 %v2757, %v2685
        %v2774 = vmul.f32 %v2758, %v2688
        %v2775 = vmul.f32 %v2759, %v2693
        %v2776 = vmul.f32 %v2760, %v2696
        %v2777 = vmul.f32 %v2761, %v2701
        %v2778 = vmul.f32 %v2762, %v2704
        %v2779 = vmul.f32 %v2763, %v2709
        %v2780 = vmul.f32 %v2764, %v2712
        %v2781 = vmul.f32 %v2765, %v2717
        %v2782 = vmul.f32 %v2766, %v2720
        %v2783 = vmul.f32 %v2767, %v2725
        %v2784 = vmul.f32 %v2768, %v2728
        %v2785 = vmul.f32 %v2769, %v2733
        %v2786 = vmul.f32 %v2770, %v2736
        %v2787 = vmul.f32 %v2771, %v2677
        %v2788 = vmul.f32 %v2772, %v2680
        %v2789 = vmul.f32 %v2773, %v2685
        %v2790 = vmul.f32 %v2774, %v2688
        %v2791 = vmul.f32 %v2775, %v2693
        %v2792 = vmul.f32 %v2776, %v2696
        %v2793 = vmul.f32 %v2777, %v2701
        %v2794 = vmul.f32 %v2778, %v2704
        %v2795 = vmul.f32 %v2779, %v2709
        %v2796 = vmul.f32 %v2780, %v2712
        %v2797 = vmul.f32 %v2781, %v2717
        %v2798 = vmul.f32 %v2782, %v2720
        %v2799 = vmul.f32 %v2783, %v2725
        %v2800 = vmul.f32 %v2784, %v2728
        %v2801 = vmul.f32 %v2785, %v2733
        %v2802 = vmul.f32 %v2786, %v2736
        %v2803 = vadd.f32 %v2677, %v2787
        %v2804 = vadd.f32 %v2680, %v2788
        %v2805 = vadd.f32 %v2685, %v2789
        %v2806 = vadd.f32 %v2688, %v2790
        %v2807 = vadd.f32 %v2693, %v2791
        %v2808 = vadd.f32 %v2696, %v2792
        %v2809 = vadd.f32 %v2701, %v2793
        %v2810 = vadd.f32 %v2704, %v2794
        %v2811 = vadd.f32 %v2709, %v2795
        %v2812 = vadd.f32 %v2712, %v2796
        %v2813 = vadd.f32 %v2717, %v2797
        %v2814 = vadd.f32 %v2720, %v2798
        %v2815 = vadd.f32 %v2725, %v2799
        %v2816 = vadd.f32 %v2728, %v2800
        %v2817 = vadd.f32 %v2733, %v2801
        %v2818 = vadd.f32 %v2736, %v2802
        %v2819 = vmul.f32 %v2803, 0.7978846
        %v2820 = vmul.f32 %v2804, 0.7978846
        %v2821 = vmul.f32 %v2805, 0.7978846
        %v2822 = vmul.f32 %v2806, 0.7978846
        %v2823 = vmul.f32 %v2807, 0.7978846
        %v2824 = vmul.f32 %v2808, 0.7978846
        %v2825 = vmul.f32 %v2809, 0.7978846
        %v2826 = vmul.f32 %v2810, 0.7978846
        %v2827 = vmul.f32 %v2811, 0.7978846
        %v2828 = vmul.f32 %v2812, 0.7978846
        %v2829 = vmul.f32 %v2813, 0.7978846
        %v2830 = vmul.f32 %v2814, 0.7978846
        %v2831 = vmul.f32 %v2815, 0.7978846
        %v2832 = vmul.f32 %v2816, 0.7978846
        %v2833 = vmul.f32 %v2817, 0.7978846
        %v2834 = vmul.f32 %v2818, 0.7978846
        %v2835 = vtanh.pop %v2819
        %v2836 = vtanh.pop %v2820
        %v2837 = vtanh.pop %v2821
        %v2838 = vtanh.pop %v2822
        %v2839 = vtanh.pop %v2823
        %v2840 = vtanh.pop %v2824
        %v2841 = vtanh.pop %v2825
        %v2842 = vtanh.pop %v2826
        %v2843 = vtanh.pop %v2827
        %v2844 = vtanh.pop %v2828
        %v2845 = vtanh.pop %v2829
        %v2846 = vtanh.pop %v2830
        %v2847 = vtanh.pop %v2831
        %v2848 = vtanh.pop %v2832
        %v2849 = vtanh.pop %v2833
        %v2850 = vtanh.pop %v2834
        %v2851 = vadd.f32 %v2835, 1.0
        %v2852 = vadd.f32 %v2836, 1.0
        %v2853 = vadd.f32 %v2837, 1.0
        %v2854 = vadd.f32 %v2838, 1.0
        %v2855 = vadd.f32 %v2839, 1.0
        %v2856 = vadd.f32 %v2840, 1.0
        %v2857 = vadd.f32 %v2841, 1.0
        %v2858 = vadd.f32 %v2842, 1.0
        %v2859 = vadd.f32 %v2843, 1.0
        %v2860 = vadd.f32 %v2844, 1.0
        %v2861 = vadd.f32 %v2845, 1.0
        %v2862 = vadd.f32 %v2846, 1.0
        %v2863 = vadd.f32 %v2847, 1.0
        %v2864 = vadd.f32 %v2848, 1.0
        %v2865 = vadd.f32 %v2849, 1.0
        %v2866 = vadd.f32 %v2850, 1.0
        %v2867 = vmul.f32 %v2739, %v2851
        %v2868 = vmul.f32 %v2740, %v2852
        %v2869 = vmul.f32 %v2741, %v2853
        %v2870 = vmul.f32 %v2742, %v2854
        %v2871 = vmul.f32 %v2743, %v2855
        %v2872 = vmul.f32 %v2744, %v2856
        %v2873 = vmul.f32 %v2745, %v2857
        %v2874 = vmul.f32 %v2746, %v2858
        %v2875 = vmul.f32 %v2747, %v2859
        %v2876 = vmul.f32 %v2748, %v2860
        %v2877 = vmul.f32 %v2749, %v2861
        %v2878 = vmul.f32 %v2750, %v2862
        %v2879 = vmul.f32 %v2751, %v2863
        %v2880 = vmul.f32 %v2752, %v2864
        %v2881 = vmul.f32 %v2753, %v2865
        %v2882 = vmul.f32 %v2754, %v2866
        %v2883 = vsel %vm949, %v2867, 0.0
        %v2884 = vsel %vm950, %v2868, 0.0
        %v2885 = vsel %vm951, %v2869, 0.0
        %v2886 = vsel %vm952, %v2870, 0.0
        %v2887 = vsel %vm953, %v2871, 0.0
        %v2888 = vsel %vm954, %v2872, 0.0
        %v2889 = vsel %vm955, %v2873, 0.0
        %v2890 = vsel %vm956, %v2874, 0.0
        %v2891 = vsel %vm957, %v2875, 0.0
        %v2892 = vsel %vm958, %v2876, 0.0
        %v2893 = vsel %vm959, %v2877, 0.0
        %v2894 = vsel %vm960, %v2878, 0.0
        %v2895 = vsel %vm961, %v2879, 0.0
        %v2896 = vsel %vm962, %v2880, 0.0
        %v2897 = vsel %vm963, %v2881, 0.0
        %v2898 = vsel %vm964, %v2882, 0.0
        %2899 = vst.msk [vmem:[#allocation2 + $0x11] sm:$0xff] %vm332, %v2883
        %2900 = vst.msk [vmem:[#allocation2 + $0x19] sm:$0xff] %vm332, %v2884
        %2901 = vst.msk [vmem:[#allocation2 + $0x21] sm:$0xff] %vm332, %v2885
        %2902 = vst.msk [vmem:[#allocation2 + $0x29] sm:$0xff] %vm332, %v2886
        %2903 = vst.msk [vmem:[#allocation2 + $0x31] sm:$0xff] %vm332, %v2887
        %2904 = vst.msk [vmem:[#allocation2 + $0x39] sm:$0xff] %vm332, %v2888
        %2905 = vst.msk [vmem:[#allocation2 + $0x41] sm:$0xff] %vm332, %v2889
        %2906 = vst.msk [vmem:[#allocation2 + $0x49] sm:$0xff] %vm332, %v2890
        %2907 = vst.msk [vmem:[#allocation2 + $0x51] sm:$0xff] %vm332, %v2891
        %2908 = vst.msk [vmem:[#allocation2 + $0x59] sm:$0xff] %vm332, %v2892
        %2909 = vst.msk [vmem:[#allocation2 + $0x61] sm:$0xff] %vm332, %v2893
        %2910 = vst.msk [vmem:[#allocation2 + $0x69] sm:$0xff] %vm332, %v2894
        %2911 = vst.msk [vmem:[#allocation2 + $0x71] sm:$0xff] %vm332, %v2895
        %2912 = vst.msk [vmem:[#allocation2 + $0x79] sm:$0xff] %vm332, %v2896
        %2913 = vst.msk [vmem:[#allocation2 + $0x81] sm:$0xff] %vm332, %v2897
        %2914 = vst.msk [vmem:[#allocation2 + $0x89] sm:$0xff] %vm332, %v2898
        %s2915 = scalar_lea.vmem [#allocation2], 17
        %v2916 = vld [vmem:[%s2915] ss:$2 sm:$0xf]
        %s2917 = scalar_lea.vmem [#allocation2], 18
        %v2918 = vld [vmem:[%s2917] ss:$2 sm:$0xf]
        %s2919 = scalar_lea.vmem [#allocation2], 33
        %v2920 = vld [vmem:[%s2919] ss:$2 sm:$0xf]
        %s2921 = scalar_lea.vmem [#allocation2], 34
        %v2922 = vld [vmem:[%s2921] ss:$2 sm:$0xf]
        %2924 = vrot.lane.b32.xlu0 %v2918, 16
        %v2925 = vpop.permute.xlu0 %2924
        %2928 = vrot.lane.b32.xlu0 %v2920, 32
        %v2929 = vpop.permute.xlu0 %2928
        %2932 = vrot.lane.b32.xlu0 %v2922, 48
        %v2933 = vpop.permute.xlu0 %2932
        %v2935 = vsel %vm332, %v2916, %v2925
        %v2936 = vsel %vm1465, %v2935, %v2929
        %v2937 = vsel %vm1482, %v2936, %v2933
        %s2938 = scalar_lea.vmem [#allocation2], 49
        %v2939 = vld [vmem:[%s2938] ss:$2 sm:$0xf]
        %s2940 = scalar_lea.vmem [#allocation2], 50
        %v2941 = vld [vmem:[%s2940] ss:$2 sm:$0xf]
        %s2942 = scalar_lea.vmem [#allocation2], 65
        %v2943 = vld [vmem:[%s2942] ss:$2 sm:$0xf]
        %s2944 = scalar_lea.vmem [#allocation2], 66
        %v2945 = vld [vmem:[%s2944] ss:$2 sm:$0xf]
        %2947 = vrot.lane.b32.xlu0 %v2941, 16
        %v2948 = vpop.permute.xlu0 %2947
        %2951 = vrot.lane.b32.xlu0 %v2943, 32
        %v2952 = vpop.permute.xlu0 %2951
        %2955 = vrot.lane.b32.xlu0 %v2945, 48
        %v2956 = vpop.permute.xlu0 %2955
        %v2958 = vsel %vm332, %v2939, %v2948
        %v2959 = vsel %vm1465, %v2958, %v2952
        %v2960 = vsel %vm1482, %v2959, %v2956
        %s2961 = scalar_lea.vmem [#allocation2], 81
        %v2962 = vld [vmem:[%s2961] ss:$2 sm:$0xf]
        %s2963 = scalar_lea.vmem [#allocation2], 82
        %v2964 = vld [vmem:[%s2963] ss:$2 sm:$0xf]
        %s2965 = scalar_lea.vmem [#allocation2], 97
        %v2966 = vld [vmem:[%s2965] ss:$2 sm:$0xf]
        %s2967 = scalar_lea.vmem [#allocation2], 98
        %v2968 = vld [vmem:[%s2967] ss:$2 sm:$0xf]
        %2970 = vrot.lane.b32.xlu0 %v2964, 16
        %v2971 = vpop.permute.xlu0 %2970
        %2974 = vrot.lane.b32.xlu0 %v2966, 32
        %v2975 = vpop.permute.xlu0 %2974
        %2978 = vrot.lane.b32.xlu0 %v2968, 48
        %v2979 = vpop.permute.xlu0 %2978
        %v2981 = vsel %vm332, %v2962, %v2971
        %v2982 = vsel %vm1465, %v2981, %v2975
        %v2983 = vsel %vm1482, %v2982, %v2979
        %s2984 = scalar_lea.vmem [#allocation2], 113
        %v2985 = vld [vmem:[%s2984] ss:$2 sm:$0xf]
        %s2986 = scalar_lea.vmem [#allocation2], 114
        %v2987 = vld [vmem:[%s2986] ss:$2 sm:$0xf]
        %s2988 = scalar_lea.vmem [#allocation2], 129
        %v2989 = vld [vmem:[%s2988] ss:$2 sm:$0xf]
        %s2990 = scalar_lea.vmem [#allocation2], 130
        %v2991 = vld [vmem:[%s2990] ss:$2 sm:$0xf]
        %2993 = vrot.lane.b32.xlu0 %v2987, 16
        %v2994 = vpop.permute.xlu0 %2993
        %2997 = vrot.lane.b32.xlu0 %v2989, 32
        %v2998 = vpop.permute.xlu0 %2997
        %3001 = vrot.lane.b32.xlu0 %v2991, 48
        %v3002 = vpop.permute.xlu0 %3001
        %v3004 = vsel %vm332, %v2985, %v2994
        %v3005 = vsel %vm1465, %v3004, %v2998
        %v3006 = vsel %vm1482, %v3005, %v3002
        %v3008 = vrot.slane %v2960, 4
        %v3011 = vrot.slane %v3006, 4
        %vm3013 = vcmask 1043456
        %v3014 = vsel %vm3013, %v2937, %v3008
        %v3015 = vsel %vm3013, %v2983, %v3011
        %v3016 = vpack.c.bf16 %v3015, %v3014
        %v3017 = vld [vmem:[%s7] sm:$0xf]
        %v3018 = vld [vmem:[%s7 + $0x4] sm:$0xf]
        %v3019 = vld [vmem:[%s7 + $0x8] sm:$0xf]
        %v3020 = vld [vmem:[%s7 + $0xc] sm:$0xf]
        %v3021 = vld [vmem:[%s7 + $0x10] sm:$0xf]
        %v3022 = vld [vmem:[%s7 + $0x14] sm:$0xf]
        %v3023 = vld [vmem:[%s7 + $0x18] sm:$0xf]
        %v3024 = vld [vmem:[%s7 + $0x1c] sm:$0xf]
        %v3025 = vld [vmem:[%s8] sm:$0x1]
        %v3027 = vlaneseq
        %v3028 = vshrl.u32 %v3027, 7
        %v3029 = vsub.s32 0, %v3028
        %v3030 = vrot.slane %v3025, %v3029
        %v3040 = vunpack.c.l.b16 %v3017
        %v3041 = vunpack.c.l.b16 %v3018
        %v3042 = vunpack.c.l.b16 %v3019
        %v3043 = vunpack.c.l.b16 %v3020
        %v3044 = vunpack.c.l.b16 %v3021
        %v3045 = vunpack.c.l.b16 %v3022
        %v3046 = vunpack.c.l.b16 %v3023
        %v3047 = vunpack.c.l.b16 %v3024
        %v3048 = vpack.c.b16 %v3041, %v3040
        %v3049 = vpack.c.b16 %v3043, %v3042
        %v3050 = vpack.c.b16 %v3045, %v3044
        %v3051 = vpack.c.b16 %v3047, %v3046
        %v3057 = vsel %vm1499, %v3016, 0
        %3059 = vmatprep.subr.bf16.mxu0 0
        %3060 = vmatpush1.bf16.msra.mxu0 %v3048
        %3061 = vmatprep.subr.bf16.mxu0 0
        %3062 = vmatpush1.bf16.msra.mxu0 %v3049
        %3063 = vmatprep.subr.bf16.mxu0 0
        %3064 = vmatpush1.bf16.msra.mxu0 %v3050
        %3065 = vmatprep.subr.bf16.mxu0 0
        %3066 = vmatpush1.bf16.msra.mxu0 %v3051
        %3067 = vmatprep.subr.bf16.mxu0 0
        %3068 = vmatpush1.bf16.msra.mxu0 0
        %3069 = vmatprep.subr.bf16.mxu0 0
        %3070 = vmatpush1.bf16.msra.mxu0 0
        %3071 = vmatprep.subr.bf16.mxu0 0
        %3072 = vmatpush1.bf16.msra.mxu0 0
        %3073 = vmatprep.subr.bf16.mxu0 0
        %3074 = vmatpush1.bf16.msra.mxu0 0
        %3075 = vmatprep.subr.bf16.mxu0 0
        %3076 = vmatpush1.bf16.msra.mxu0 0
        %3077 = vmatprep.subr.bf16.mxu0 0
        %3078 = vmatpush1.bf16.msra.mxu0 0
        %3079 = vmatprep.subr.bf16.mxu0 0
        %3080 = vmatpush1.bf16.msra.mxu0 0
        %3081 = vmatprep.subr.bf16.mxu0 0
        %3082 = vmatpush1.bf16.msra.mxu0 0
        %3083 = vmatprep.subr.bf16.mxu0 0
        %3084 = vmatpush1.bf16.msra.mxu0 0
        %3085 = vmatprep.subr.bf16.mxu0 0
        %3086 = vmatpush1.bf16.msra.mxu0 0
        %3087 = vmatprep.subr.bf16.mxu0 0
        %3088 = vmatpush1.bf16.msra.mxu0 0
        %3089 = vmatprep.subr.bf16.mxu0 0
        %3090 = vmatpush1.bf16.msra.mxu0 0
        %3091 = vmatprep.mubr.bf16.mxu0 0
        %3092 = vmatmul.mubr.bf16.gmra.mrb[0].mxu0 %v3057
        %v3093 = vpop.f32.mrb[0].mxu0
        %v3094 = vadd.f32 %v3030, %v3093
        %v3095 = vpop.f32.mrb[0].mxu0
        %v3096 = vpop.f32.mrb[0].mxu0
        %v3097 = vadd.f32 %v3030, %v3096
        %v3098 = vpop.f32.mrb[0].mxu0
        %3099 = vdwg.mxu0
        %3100 = vst.msk [vmem:[%s325] sm:$0xff] %vm1465, %v3094
        %3101 = vst.msk [vmem:[%s325 + $0x8] sm:$0xff] %vm1465, %v3097
        %s3102 = sand.u32 %s225, 1
        %s3103 = scalar_lea.sflag [#allocation4], %s3102
        %s3104 = sand.u32 %s225, 1
        %s3105 = smul.addr %s3104, 16
        %s3106 = scalar_lea.vmem [#allocation3], %s3105
        // Predicated region
        $region57: #{conv_embed_forward.1} parent=55 // pred_check
          %p3107 = pneg %p235
        $region58: #{conv_embed_forward.1} parent=55 // pred_check_branch
          %3109 = sbr.rel (%p3107) target = $region60
        $region59: #{conv_embed_forward.1} parent=55 // pred_region
          %s3111 = ssub.s32 256, 256
          %3112 = vsyncadd %s3103, %s3111
          %s3113 = smul.addr %s23, 2
          %s3114 = smul.addr %s3113, 128
          %s3115 = scalar_lea.hbm %s9, %s3114
          %s3116 = sshll.u32 %s3106, 4
          %s3117 = int_to_ptr.vmem [resolvable:$true] %s3116
          %3122 = dma.vmem_to_hbm [thread:$0]  %s3117, 256, %s3115, %s3103, 128, 128, 8
        $region60: #{conv_embed_forward.1} parent=55 // pred_fallthru
          _
      $region56: #{conv_embed_forward.1} parent=5 // pred_fallthru
        _
      %p3123 = scmp.le.s32.totalorder 2, %s18
      // Predicated region
      $region61: #{conv_embed_forward.1} parent=5 // pred_check
        %p3124 = pneg %p3123
      $region62: #{conv_embed_forward.1} parent=5 // pred_check_branch
        %3126 = sbr.rel (%p3124) target = $region64
      $region63: #{conv_embed_forward.1} parent=5 // pred_region
        %s3127 = ssub.s32 %s18, 2
        // Predicated region
        $region65: #{conv_embed_forward.1} parent=63 // pred_check
          %p3128 = pneg %p241
        $region66: #{conv_embed_forward.1} parent=63 // pred_check_branch
          %3130 = sbr.rel (%p3128) target = $region68
        $region67: #{conv_embed_forward.1} parent=63 // pred_region
          %s3131 = sand.u32 %s226, 1
          %s3132 = scalar_lea.sflag [#allocation4], %s3131
          %s3133 = sand.u32 %s226, 1
          %s3134 = smul.addr %s3133, 16
          %s3135 = scalar_lea.vmem [#allocation3], %s3134
          %3136 = dma.done %s3132, 256
        $region68: #{conv_embed_forward.1} parent=63 // pred_fallthru
          _
      $region64: #{conv_embed_forward.1} parent=5 // pred_fallthru
        _
    $region6: #{conv_embed_forward.1} parent=1 // loop_footer
      %s22 = sadd.s32 1, %s18
    $region7: #{conv_embed_forward.1} parent=1 // loop_footer_branch
      %17 = sbr.rel target = $region3
    $region8: #{conv_embed_forward.1} parent=1 // loop_exit
      _
    %3137 = vsyncpa [#allocation4], 1
    %s3138 = scalar_lea.sflag [#allocation4], 1
    %3139 = vsyncpa %s3138, 1

</llo_original>
